<compile_context>
chip_gen: v6e
topology: v6e:2x2x1
jax: 0.10.0
libtpu: 0.0.40
codegen_flags: <defaults>
</compile_context>

<pallas_src>
import jax
import jax.numpy as jnp
from jax import lax
from jax.experimental import pallas as pl
from jax.experimental.pallas import tpu as pltpu

GEM_EPS = 1e-6          # GeM clamp eps (matches gem() default)
NORM_EPS = 1e-12        # F.normalize default eps


def _round_up(x, m):
    return ((x + m - 1) // m) * m


def _int_pow(x, n):
    """x**n for a small positive integer n via exponentiation-by-squaring (VPU)."""
    result = None
    base = x
    while True:
        if n & 1:
            result = base if result is None else result * base
        n >>= 1
        if n == 0:
            break
        base = base * base
    return result


def _make_gem_norm_kernel(static_p, pow_dtype):
    """Build the fused GeM-pool + L2-normalize kernel body.

    static_p : Python float if the GeM exponent is known at trace time, else None.
    pow_dtype: dtype for the per-element log/exp (bf16 on bf16 features doubles
               EUP throughput on v6e/v7x); mean / pow(1/p) / normalize are f32.
    """
    use_int_pow = (static_p is not None and float(static_p) == int(static_p)
                   and 1 <= int(static_p) <= 16)

    def kernel(p_ref, x_ref, o_ref):
        # p_ref : (1,)        SMEM scalar (ignored when static_p is known)
        # x_ref : (Bt, C, HW) feature-map slab (NCHW flattened spatially)
        # o_ref : (Bt, C)     L2-normalized GeM descriptors
        x = x_ref[...]

        if use_int_pow:
            # Default gem_p=3 fast path: clamp + multiply chain on the VPU, no
            # per-element transcendentals -> HBM-bound on every generation.
            xc = jnp.maximum(x.astype(jnp.float32), GEM_EPS)
            xp = _int_pow(xc, int(static_p))
        else:
            # General (traced or non-integer p) path: x^p = exp(p * log(x)).
            xc = jnp.maximum(x.astype(pow_dtype), jnp.asarray(GEM_EPS, dtype=pow_dtype))
            if static_p is not None:
                pv = jnp.asarray(static_p, dtype=pow_dtype)
            else:
                pv = p_ref[0].astype(pow_dtype)
            xp = jnp.exp(pv * jnp.log(xc)).astype(jnp.float32)

        # GeM: spatial mean over the full extent (XLU cross-lane reduce, f32).
        pooled = jnp.mean(xp, axis=-1)                       # (Bt, C)

        # pooled^(1/p) -- only Bt*C elements, transcendental cost negligible.
        if static_p is not None:
            sp = float(static_p)
            if sp == 1.0:
                g = pooled
            elif sp == 2.0:
                g = jnp.sqrt(pooled)
            else:
                g = jnp.exp(jnp.log(pooled) * (1.0 / sp))
        else:
            g = jnp.exp(jnp.log(pooled) / p_ref[0])

        # F.normalize(dim=1): x / max(||x||_2, eps), as rsqrt-and-multiply
        # (one EUP rsqrt instead of a per-channel divide).
        ssq = jnp.sum(g * g, axis=-1, keepdims=True)         # (Bt, 1)
        inv_norm = lax.rsqrt(jnp.maximum(ssq, NORM_EPS * NORM_EPS))
        o_ref[...] = (g * inv_norm).astype(o_ref.dtype)

    return kernel


def _vmem_limit_bytes(min_needed):
    """Per-generation scoped-VMEM limit: ~3/4 of physical VMEM, raised (up to
    ~90% of physical) if even a single block set needs more."""
    cap = None
    try:
        info = pltpu.get_tpu_info()
        cap = int(getattr(info, "vmem_capacity_bytes", 0)) or None
    except Exception:
        cap = None
    if cap is None:
        cap = 64 * 1024 * 1024           # conservative default (v7x per-TC VMEM)
    limit = max((cap // 4) * 3, int(min_needed))
    return int(min(limit, (cap // 10) * 9))


def gem_normalize(features_nchw: jax.Array, p) -> jax.Array:
    """features_nchw: [B, C, H, W] backbone output (f32 or bf16).
    p: GeM exponent -- a Python float/int enables the static fast path; a traced
       scalar / 1-element array (the learned Parameter) uses the exp/log path.

    Returns [B, C, 1, 1] float32, matching F.normalize(GeM(features)) in torch.
    """
    B, C, H, W = features_nchw.shape
    HW = H * W
    # NCHW -> [B, C, HW]: a free view of the contiguous buffer (no transpose, no
    # extra HBM traffic). bf16 features halve HBM reads; kernel accumulates f32.
    x = features_nchw.reshape(B, C, HW)

    static_p = None
    if isinstance(p, (int, float)):
        static_p = float(p)
        p_arr = jnp.full((1,), static_p, dtype=jnp.float32)
    else:
        p_arr = jnp.reshape(p, (1,)).astype(jnp.float32)

    use_int_pow = (static_p is not None and static_p == int(static_p)
                   and 1 <= int(static_p) <= 16)
    pow_dtype = (jnp.bfloat16
                 if (not use_int_pow and x.dtype == jnp.bfloat16)
                 else jnp.float32)

    itemsize = x.dtype.itemsize
    # Padding-aware VMEM accounting: the (Bt, C, HW) input block pads HW up to a
    # multiple of 128 lanes and C up to 8 sublanes; the (Bt, C) output pads C up
    # to 128 lanes. Both are double-buffered by the BlockSpec pipeline.
    in_row = _round_up(C, 8) * _round_up(HW, 128) * itemsize
    out_row = _round_up(C, 128) * 4
    headroom = 4 * 1024 * 1024
    min_needed = 2 * (in_row + 8 * out_row) + headroom       # at least Bt=1
    vmem_limit = _vmem_limit_bytes(min_needed)

    usable = max(vmem_limit - headroom, 2 * (in_row + 8 * out_row))
    bt = (usable - 2 * 8 * out_row) // (2 * (in_row + out_row))
    bt = int(max(1, min(bt, B)))
    if B > 8:
        # Keep >= ~4 grid steps so input DMA overlaps compute and the "parallel"
        # batch axis can be split across v7x's two TensorCores.
        bt = min(bt, max(8, _round_up(pl.cdiv(B, 4), 8)))
    if bt >= 8:
        bt = (bt // 8) * 8        # full-sublane (unmasked) output stores
    bt = max(1, min(bt, B))

    grid = (pl.cdiv(B, bt),)
    # NOTE: when B % bt != 0 the trailing block's padded rows hold undefined
    # data. Every reduction in the kernel is per-row and OOB output rows are
    # dropped on store, so this is harmless -- but do NOT add cross-row
    # reductions without masking those rows first.

    n_elem = B * C * HW
    cost = pl.CostEstimate(
        flops=6 * n_elem + 6 * B * C,
        transcendentals=(2 * B * C) if use_int_pow else (2 * n_elem + 2 * B * C),
        bytes_accessed=n_elem * itemsize + B * C * 4 + 4,
    )

    kernel = _make_gem_norm_kernel(static_p, pow_dtype)

    out = pl.pallas_call(
        kernel,
        out_shape=jax.ShapeDtypeStruct((B, C), jnp.float32),
        grid=grid,
        in_specs=[
            # p lives in SMEM as a scalar; no padded / double-buffered VMEM tile.
            pl.BlockSpec(memory_space=pltpu.MemorySpace.SMEM),
            pl.BlockSpec((bt, C, HW), lambda b: (b, 0, 0)),
        ],
        out_specs=pl.BlockSpec((bt, C), lambda b: (b, 0)),
        compiler_params=pltpu.CompilerParams(
            dimension_semantics=("parallel",),
            vmem_limit_bytes=int(vmem_limit),
        ),
        cost_estimate=cost,
    )(p_arr, x)

    return out.reshape(B, C, 1, 1)


def _reference(features_nchw, p):
    """Pure-JAX reference mirroring the PyTorch forward (GeM + F.normalize)."""
    xc = jnp.maximum(features_nchw.astype(jnp.float32), GEM_EPS)
    pooled = jnp.mean(xc ** p, axis=(-2, -1), keepdims=True) ** (1.0 / p)  # [B,C,1,1]
    norm = jnp.sqrt(jnp.sum(pooled * pooled, axis=1, keepdims=True))
    return pooled / jnp.maximum(norm, NORM_EPS)


if __name__ == "__main__":
    key = jax.random.PRNGKey(0)

    # Small backbone-output-like feature map: batch=2, channels=256, spatial=8x8.
    B, C, H, W = 2, 256, 8, 8
    # Post-ReLU-like (non-negative) activations, as a ResNet backbone would emit.
    feats = jax.nn.relu(jax.random.normal(key, (B, C, H, W), dtype=jnp.float32))

    # 1) Static fast path: default gem_p=3 known at trace time (VPU cube, no EUP).
    out_static = gem_normalize(feats, 3.0)

    # 2) Traced path: p as a learned Parameter(torch.ones(1) * 3) -> traced scalar.
    p_param = jnp.ones((1,), dtype=jnp.float32) * 3.0
    out_traced = gem_normalize(feats, p_param[0])

    out_static, out_traced = jax.block_until_ready((out_static, out_traced))

    ref = _reference(feats, 3.0)
    assert out_static.shape == (B, C, 1, 1), out_static.shape
    assert out_traced.shape == (B, C, 1, 1), out_traced.shape
    assert jnp.allclose(out_static, ref, atol=1e-4, rtol=1e-4), float(
        jnp.max(jnp.abs(out_static - ref)))
    assert jnp.allclose(out_traced, ref, atol=1e-4, rtol=1e-4), float(
        jnp.max(jnp.abs(out_traced - ref)))

    print("KERNEL_OK")
</pallas_src>

<mosaic_0001>
module attributes {stable_mosaic.version = 11 : i64} {
  func.func @kernel(%arg0: i32, %arg1: memref<1xf32, #tpu.memory_space<smem>>, %arg2: memref<2x256x64xf32, #tpu.memory_space<vmem>>, %arg3: memref<2x256xf32, #tpu.memory_space<vmem>>) attributes {dimension_semantics = [#tpu.dimension_semantics<parallel>], iteration_bounds = array<i64: 1>, scalar_prefetch = 0 : i64, scratch_operands = 0 : i64, tpu.core_type = #tpu.core_type<tc>, window_params = [{transform_indices = @transform_0, window_bounds = array<i64: 1>}, {transform_indices = @transform_1, window_bounds = array<i64: 2, 256, 64>}, {transform_indices = @transform_2, window_bounds = array<i64: 2, 256>}]} {
    %c0 = arith.constant 0 : index
    %c0_0 = arith.constant 0 : index
    %c0_1 = arith.constant 0 : index
    %0 = vector.load %arg2[%c0, %c0_0, %c0_1] : memref<2x256x64xf32, #tpu.memory_space<vmem>>, vector<2x256x64xf32>
    %cst = arith.constant 9.99999997E-7 : f32
    %1 = vector.broadcast %cst : f32 to vector<2x256x64xf32>
    %2 = arith.maximumf %0, %1 : vector<2x256x64xf32>
    %3 = arith.mulf %2, %2 : vector<2x256x64xf32>
    %4 = arith.mulf %2, %3 : vector<2x256x64xf32>
    %cst_2 = arith.constant dense<0.000000e+00> : vector<2x256xf32>
    %5 = vector.multi_reduction <add>, %4, %cst_2 [2] : vector<2x256x64xf32> to vector<2x256xf32>
    %cst_3 = arith.constant 6.400000e+01 : f32
    %6 = vector.broadcast %cst_3 : f32 to vector<2x256xf32>
    %7 = arith.divf %5, %6 : vector<2x256xf32>
    %8 = math.log %7 : vector<2x256xf32>
    %cst_4 = arith.constant 0.333333343 : f32
    %9 = vector.broadcast %cst_4 : f32 to vector<2x256xf32>
    %10 = arith.mulf %8, %9 : vector<2x256xf32>
    %11 = math.exp %10 : vector<2x256xf32>
    %12 = arith.mulf %11, %11 : vector<2x256xf32>
    %cst_5 = arith.constant dense<0.000000e+00> : vector<2xf32>
    %13 = vector.multi_reduction <add>, %12, %cst_5 [1] : vector<2x256xf32> to vector<2xf32>
    %14 = vector.shape_cast %13 : vector<2xf32> to vector<2x1xf32>
    %cst_6 = arith.constant 1.000000e-24 : f32
    %15 = vector.broadcast %cst_6 : f32 to vector<2x1xf32>
    %16 = arith.maximumf %14, %15 : vector<2x1xf32>
    %17 = math.rsqrt %16 : vector<2x1xf32>
    %18 = vector.broadcast %17 : vector<2x1xf32> to vector<2x256xf32>
    %19 = arith.mulf %11, %18 : vector<2x256xf32>
    %c0_7 = arith.constant 0 : index
    %c0_8 = arith.constant 0 : index
    %20 = vector.load %arg3[%c0_7, %c0_8] : memref<2x256xf32, #tpu.memory_space<vmem>>, vector<2x256xf32>
    tpu.vector_store %arg3[%c0_7, %c0_8], %19 {strides = array<i32>} : memref<2x256xf32, #tpu.memory_space<vmem>>, vector<2x256xf32>,
    return
  }
  func.func @transform_0(%arg0: i32) -> i32 {
    %c0_i32 = arith.constant 0 : i32
    %c0_i32_0 = arith.constant 0 : i32
    return %c0_i32 : i32
  }
  func.func @transform_1(%arg0: i32) -> (i32, i32, i32) {
    %c0_i32 = arith.constant 0 : i32
    %c0_i32_0 = arith.constant 0 : i32
    %c0_i32_1 = arith.constant 0 : i32
    return %arg0, %c0_i32, %c0_i32_0 : i32, i32, i32
  }
  func.func @transform_2(%arg0: i32) -> (i32, i32) {
    %c0_i32 = arith.constant 0 : i32
    %c0_i32_0 = arith.constant 0 : i32
    return %arg0, %c0_i32 : i32, i32
  }
}

</mosaic_0001>

<llo_original>
// kernel: tpu_custom_call.1
$region0: #{tpu_custom_call.1}
  #allocation0 [shape = 'u32[]', space=smem, size = 0x4, offset = 0x4, fixed_abs, tag = 'smem constant byte address 0x4 - core index']
  #allocation1 [shape = 'u32[144,128]{1,0:T(1,128)}', space=vmem, size = 0x12000, scoped, tag = 'internal scratch']
  #allocation2 [shape = 'f32[1]{0:T(128)S(6)}', space=smem, size = 0x200, scoped, tag = 'scoped memory for tpu_custom_call.1']
  %s0 = inlined_call_operand.<no memory space> [shape: f32[1], index: 0, kind: input, shape index: {}]
  %s1 = inlined_call_operand.vmem [shape: f32[2,256,64], index: 1, kind: input, shape index: {}]
  %s2 = inlined_call_operand.hbm [shape: f32[2,256], index: 2, kind: output, shape index: {}]
  %s3 = sld [smem:[#allocation0]]
  $region18: #{tpu_custom_call.1} parent=0
    _
  %s5 = ssub.s32 1, %s3
  %s6 = scalar_select 0, %s5, %s3
  %7 = sst [smem:[#allocation2]] %s0
  $region1: #{tpu_custom_call.1} parent=0
    #allocation3 [shape = 'u8[2048]{0}', space=vmem, size = 0x800, scoped, tag = 'output window, operand 0, single buffered']
    #allocation4 [shape = 's32[1]{0}', space=sflag, size = 0x4, scoped, tag = 'scoped memory for tpu_custom_call.1']
    %8 = vsyncpa [#allocation4], 0
    // Predicated region
    $region2: #{tpu_custom_call.1} parent=1 // pred_check
      _
    $region3: #{tpu_custom_call.1} parent=1 // pred_check_branch
      %10 = sbr.rel (0) target = $region5
    $region4: #{tpu_custom_call.1} parent=1 // pred_region
      _
    $region5: #{tpu_custom_call.1} parent=1 // pred_fallthru
      _
    // Predicated region
    $region6: #{tpu_custom_call.1} parent=1 // pred_check
      _
    $region7: #{tpu_custom_call.1} parent=1 // pred_check_branch
      %12 = sbr.rel (0) target = $region9
    $region8: #{tpu_custom_call.1} parent=1 // pred_region
      _
    $region9: #{tpu_custom_call.1} parent=1 // pred_fallthru
      _
    %v13 = vld [vmem:[%s1] sm:$0xff]
    %v14 = vld [vmem:[%s1 + $0x8] sm:$0xff]
    %v15 = vld [vmem:[%s1 + $0x10] sm:$0xff]
    %v16 = vld [vmem:[%s1 + $0x18] sm:$0xff]
    %v17 = vld [vmem:[%s1 + $0x20] sm:$0xff]
    %v18 = vld [vmem:[%s1 + $0x28] sm:$0xff]
    %v19 = vld [vmem:[%s1 + $0x30] sm:$0xff]
    %v20 = vld [vmem:[%s1 + $0x38] sm:$0xff]
    %v21 = vld [vmem:[%s1 + $0x40] sm:$0xff]
    %v22 = vld [vmem:[%s1 + $0x48] sm:$0xff]
    %v23 = vld [vmem:[%s1 + $0x50] sm:$0xff]
    %v24 = vld [vmem:[%s1 + $0x58] sm:$0xff]
    %v25 = vld [vmem:[%s1 + $0x60] sm:$0xff]
    %v26 = vld [vmem:[%s1 + $0x68] sm:$0xff]
    %v27 = vld [vmem:[%s1 + $0x70] sm:$0xff]
    %v28 = vld [vmem:[%s1 + $0x78] sm:$0xff]
    %v29 = vld [vmem:[%s1 + $0x80] sm:$0xff]
    %v30 = vld [vmem:[%s1 + $0x88] sm:$0xff]
    %v31 = vld [vmem:[%s1 + $0x90] sm:$0xff]
    %v32 = vld [vmem:[%s1 + $0x98] sm:$0xff]
    %v33 = vld [vmem:[%s1 + $0xa0] sm:$0xff]
    %v34 = vld [vmem:[%s1 + $0xa8] sm:$0xff]
    %v35 = vld [vmem:[%s1 + $0xb0] sm:$0xff]
    %v36 = vld [vmem:[%s1 + $0xb8] sm:$0xff]
    %v37 = vld [vmem:[%s1 + $0xc0] sm:$0xff]
    %v38 = vld [vmem:[%s1 + $0xc8] sm:$0xff]
    %v39 = vld [vmem:[%s1 + $0xd0] sm:$0xff]
    %v40 = vld [vmem:[%s1 + $0xd8] sm:$0xff]
    %v41 = vld [vmem:[%s1 + $0xe0] sm:$0xff]
    %v42 = vld [vmem:[%s1 + $0xe8] sm:$0xff]
    %v43 = vld [vmem:[%s1 + $0xf0] sm:$0xff]
    %v44 = vld [vmem:[%s1 + $0xf8] sm:$0xff]
    %v45 = vld [vmem:[%s1 + $0x100] sm:$0xff]
    %v46 = vld [vmem:[%s1 + $0x108] sm:$0xff]
    %v47 = vld [vmem:[%s1 + $0x110] sm:$0xff]
    %v48 = vld [vmem:[%s1 + $0x118] sm:$0xff]
    %v49 = vld [vmem:[%s1 + $0x120] sm:$0xff]
    %v50 = vld [vmem:[%s1 + $0x128] sm:$0xff]
    %v51 = vld [vmem:[%s1 + $0x130] sm:$0xff]
    %v52 = vld [vmem:[%s1 + $0x138] sm:$0xff]
    %v53 = vld [vmem:[%s1 + $0x140] sm:$0xff]
    %v54 = vld [vmem:[%s1 + $0x148] sm:$0xff]
    %v55 = vld [vmem:[%s1 + $0x150] sm:$0xff]
    %v56 = vld [vmem:[%s1 + $0x158] sm:$0xff]
    %v57 = vld [vmem:[%s1 + $0x160] sm:$0xff]
    %v58 = vld [vmem:[%s1 + $0x168] sm:$0xff]
    %v59 = vld [vmem:[%s1 + $0x170] sm:$0xff]
    %v60 = vld [vmem:[%s1 + $0x178] sm:$0xff]
    %v61 = vld [vmem:[%s1 + $0x180] sm:$0xff]
    %v62 = vld [vmem:[%s1 + $0x188] sm:$0xff]
    %v63 = vld [vmem:[%s1 + $0x190] sm:$0xff]
    %v64 = vld [vmem:[%s1 + $0x198] sm:$0xff]
    %v65 = vld [vmem:[%s1 + $0x1a0] sm:$0xff]
    %v66 = vld [vmem:[%s1 + $0x1a8] sm:$0xff]
    %v67 = vld [vmem:[%s1 + $0x1b0] sm:$0xff]
    %v68 = vld [vmem:[%s1 + $0x1b8] sm:$0xff]
    %v69 = vld [vmem:[%s1 + $0x1c0] sm:$0xff]
    %v70 = vld [vmem:[%s1 + $0x1c8] sm:$0xff]
    %v71 = vld [vmem:[%s1 + $0x1d0] sm:$0xff]
    %v72 = vld [vmem:[%s1 + $0x1d8] sm:$0xff]
    %v73 = vld [vmem:[%s1 + $0x1e0] sm:$0xff]
    %v74 = vld [vmem:[%s1 + $0x1e8] sm:$0xff]
    %v75 = vld [vmem:[%s1 + $0x1f0] sm:$0xff]
    %v76 = vld [vmem:[%s1 + $0x1f8] sm:$0xff]
    %v77 = vmax.f32 %v13, 1e-06
    %v78 = vmax.f32 %v14, 1e-06
    %v79 = vmax.f32 %v15, 1e-06
    %v80 = vmax.f32 %v16, 1e-06
    %v81 = vmax.f32 %v17, 1e-06
    %v82 = vmax.f32 %v18, 1e-06
    %v83 = vmax.f32 %v19, 1e-06
    %v84 = vmax.f32 %v20, 1e-06
    %v85 = vmax.f32 %v21, 1e-06
    %v86 = vmax.f32 %v22, 1e-06
    %v87 = vmax.f32 %v23, 1e-06
    %v88 = vmax.f32 %v24, 1e-06
    %v89 = vmax.f32 %v25, 1e-06
    %v90 = vmax.f32 %v26, 1e-06
    %v91 = vmax.f32 %v27, 1e-06
    %v92 = vmax.f32 %v28, 1e-06
    %v93 = vmax.f32 %v29, 1e-06
    %v94 = vmax.f32 %v30, 1e-06
    %v95 = vmax.f32 %v31, 1e-06
    %v96 = vmax.f32 %v32, 1e-06
    %v97 = vmax.f32 %v33, 1e-06
    %v98 = vmax.f32 %v34, 1e-06
    %v99 = vmax.f32 %v35, 1e-06
    %v100 = vmax.f32 %v36, 1e-06
    %v101 = vmax.f32 %v37, 1e-06
    %v102 = vmax.f32 %v38, 1e-06
    %v103 = vmax.f32 %v39, 1e-06
    %v104 = vmax.f32 %v40, 1e-06
    %v105 = vmax.f32 %v41, 1e-06
    %v106 = vmax.f32 %v42, 1e-06
    %v107 = vmax.f32 %v43, 1e-06
    %v108 = vmax.f32 %v44, 1e-06
    %v109 = vmax.f32 %v45, 1e-06
    %v110 = vmax.f32 %v46, 1e-06
    %v111 = vmax.f32 %v47, 1e-06
    %v112 = vmax.f32 %v48, 1e-06
    %v113 = vmax.f32 %v49, 1e-06
    %v114 = vmax.f32 %v50, 1e-06
    %v115 = vmax.f32 %v51, 1e-06
    %v116 = vmax.f32 %v52, 1e-06
    %v117 = vmax.f32 %v53, 1e-06
    %v118 = vmax.f32 %v54, 1e-06
    %v119 = vmax.f32 %v55, 1e-06
    %v120 = vmax.f32 %v56, 1e-06
    %v121 = vmax.f32 %v57, 1e-06
    %v122 = vmax.f32 %v58, 1e-06
    %v123 = vmax.f32 %v59, 1e-06
    %v124 = vmax.f32 %v60, 1e-06
    %v125 = vmax.f32 %v61, 1e-06
    %v126 = vmax.f32 %v62, 1e-06
    %v127 = vmax.f32 %v63, 1e-06
    %v128 = vmax.f32 %v64, 1e-06
    %v129 = vmax.f32 %v65, 1e-06
    %v130 = vmax.f32 %v66, 1e-06
    %v131 = vmax.f32 %v67, 1e-06
    %v132 = vmax.f32 %v68, 1e-06
    %v133 = vmax.f32 %v69, 1e-06
    %v134 = vmax.f32 %v70, 1e-06
    %v135 = vmax.f32 %v71, 1e-06
    %v136 = vmax.f32 %v72, 1e-06
    %v137 = vmax.f32 %v73, 1e-06
    %v138 = vmax.f32 %v74, 1e-06
    %v139 = vmax.f32 %v75, 1e-06
    %v140 = vmax.f32 %v76, 1e-06
    %v141 = vmul.f32 %v77, %v77
    %v142 = vmul.f32 %v78, %v78
    %v143 = vmul.f32 %v79, %v79
    %v144 = vmul.f32 %v80, %v80
    %v145 = vmul.f32 %v81, %v81
    %v146 = vmul.f32 %v82, %v82
    %v147 = vmul.f32 %v83, %v83
    %v148 = vmul.f32 %v84, %v84
    %v149 = vmul.f32 %v85, %v85
    %v150 = vmul.f32 %v86, %v86
    %v151 = vmul.f32 %v87, %v87
    %v152 = vmul.f32 %v88, %v88
    %v153 = vmul.f32 %v89, %v89
    %v154 = vmul.f32 %v90, %v90
    %v155 = vmul.f32 %v91, %v91
    %v156 = vmul.f32 %v92, %v92
    %v157 = vmul.f32 %v93, %v93
    %v158 = vmul.f32 %v94, %v94
    %v159 = vmul.f32 %v95, %v95
    %v160 = vmul.f32 %v96, %v96
    %v161 = vmul.f32 %v97, %v97
    %v162 = vmul.f32 %v98, %v98
    %v163 = vmul.f32 %v99, %v99
    %v164 = vmul.f32 %v100, %v100
    %v165 = vmul.f32 %v101, %v101
    %v166 = vmul.f32 %v102, %v102
    %v167 = vmul.f32 %v103, %v103
    %v168 = vmul.f32 %v104, %v104
    %v169 = vmul.f32 %v105, %v105
    %v170 = vmul.f32 %v106, %v106
    %v171 = vmul.f32 %v107, %v107
    %v172 = vmul.f32 %v108, %v108
    %v173 = vmul.f32 %v109, %v109
    %v174 = vmul.f32 %v110, %v110
    %v175 = vmul.f32 %v111, %v111
    %v176 = vmul.f32 %v112, %v112
    %v177 = vmul.f32 %v113, %v113
    %v178 = vmul.f32 %v114, %v114
    %v179 = vmul.f32 %v115, %v115
    %v180 = vmul.f32 %v116, %v116
    %v181 = vmul.f32 %v117, %v117
    %v182 = vmul.f32 %v118, %v118
    %v183 = vmul.f32 %v119, %v119
    %v184 = vmul.f32 %v120, %v120
    %v185 = vmul.f32 %v121, %v121
    %v186 = vmul.f32 %v122, %v122
    %v187 = vmul.f32 %v123, %v123
    %v188 = vmul.f32 %v124, %v124
    %v189 = vmul.f32 %v125, %v125
    %v190 = vmul.f32 %v126, %v126
    %v191 = vmul.f32 %v127, %v127
    %v192 = vmul.f32 %v128, %v128
    %v193 = vmul.f32 %v129, %v129
    %v194 = vmul.f32 %v130, %v130
    %v195 = vmul.f32 %v131, %v131
    %v196 = vmul.f32 %v132, %v132
    %v197 = vmul.f32 %v133, %v133
    %v198 = vmul.f32 %v134, %v134
    %v199 = vmul.f32 %v135, %v135
    %v200 = vmul.f32 %v136, %v136
    %v201 = vmul.f32 %v137, %v137
    %v202 = vmul.f32 %v138, %v138
    %v203 = vmul.f32 %v139, %v139
    %v204 = vmul.f32 %v140, %v140
    %v205 = vmul.f32 %v77, %v141
    %v206 = vmul.f32 %v78, %v142
    %v207 = vmul.f32 %v79, %v143
    %v208 = vmul.f32 %v80, %v144
    %v209 = vmul.f32 %v81, %v145
    %v210 = vmul.f32 %v82, %v146
    %v211 = vmul.f32 %v83, %v147
    %v212 = vmul.f32 %v84, %v148
    %v213 = vmul.f32 %v85, %v149
    %v214 = vmul.f32 %v86, %v150
    %v215 = vmul.f32 %v87, %v151
    %v216 = vmul.f32 %v88, %v152
    %v217 = vmul.f32 %v89, %v153
    %v218 = vmul.f32 %v90, %v154
    %v219 = vmul.f32 %v91, %v155
    %v220 = vmul.f32 %v92, %v156
    %v221 = vmul.f32 %v93, %v157
    %v222 = vmul.f32 %v94, %v158
    %v223 = vmul.f32 %v95, %v159
    %v224 = vmul.f32 %v96, %v160
    %v225 = vmul.f32 %v97, %v161
    %v226 = vmul.f32 %v98, %v162
    %v227 = vmul.f32 %v99, %v163
    %v228 = vmul.f32 %v100, %v164
    %v229 = vmul.f32 %v101, %v165
    %v230 = vmul.f32 %v102, %v166
    %v231 = vmul.f32 %v103, %v167
    %v232 = vmul.f32 %v104, %v168
    %v233 = vmul.f32 %v105, %v169
    %v234 = vmul.f32 %v106, %v170
    %v235 = vmul.f32 %v107, %v171
    %v236 = vmul.f32 %v108, %v172
    %v237 = vmul.f32 %v109, %v173
    %v238 = vmul.f32 %v110, %v174
    %v239 = vmul.f32 %v111, %v175
    %v240 = vmul.f32 %v112, %v176
    %v241 = vmul.f32 %v113, %v177
    %v242 = vmul.f32 %v114, %v178
    %v243 = vmul.f32 %v115, %v179
    %v244 = vmul.f32 %v116, %v180
    %v245 = vmul.f32 %v117, %v181
    %v246 = vmul.f32 %v118, %v182
    %v247 = vmul.f32 %v119, %v183
    %v248 = vmul.f32 %v120, %v184
    %v249 = vmul.f32 %v121, %v185
    %v250 = vmul.f32 %v122, %v186
    %v251 = vmul.f32 %v123, %v187
    %v252 = vmul.f32 %v124, %v188
    %v253 = vmul.f32 %v125, %v189
    %v254 = vmul.f32 %v126, %v190
    %v255 = vmul.f32 %v127, %v191
    %v256 = vmul.f32 %v128, %v192
    %v257 = vmul.f32 %v129, %v193
    %v258 = vmul.f32 %v130, %v194
    %v259 = vmul.f32 %v131, %v195
    %v260 = vmul.f32 %v132, %v196
    %v261 = vmul.f32 %v133, %v197
    %v262 = vmul.f32 %v134, %v198
    %v263 = vmul.f32 %v135, %v199
    %v264 = vmul.f32 %v136, %v200
    %v265 = vmul.f32 %v137, %v201
    %v266 = vmul.f32 %v138, %v202
    %v267 = vmul.f32 %v139, %v203
    %v268 = vmul.f32 %v140, %v204
    %vm269 = vcmask 523264
    %v270 = vsel %vm269, %v205, 0.0
    %271 = vadd.xlane.f32.xlu0 %v270
    %v272 = vpop.xlane.xlu0 %271
    %v273 = vsel %vm269, %v206, 0.0
    %274 = vadd.xlane.f32.xlu0 %v273
    %v275 = vpop.xlane.xlu0 %274
    %v276 = vsel %vm269, %v207, 0.0
    %277 = vadd.xlane.f32.xlu0 %v276
    %v278 = vpop.xlane.xlu0 %277
    %v279 = vsel %vm269, %v208, 0.0
    %280 = vadd.xlane.f32.xlu0 %v279
    %v281 = vpop.xlane.xlu0 %280
    %v282 = vsel %vm269, %v209, 0.0
    %283 = vadd.xlane.f32.xlu0 %v282
    %v284 = vpop.xlane.xlu0 %283
    %v285 = vsel %vm269, %v210, 0.0
    %286 = vadd.xlane.f32.xlu0 %v285
    %v287 = vpop.xlane.xlu0 %286
    %v288 = vsel %vm269, %v211, 0.0
    %289 = vadd.xlane.f32.xlu0 %v288
    %v290 = vpop.xlane.xlu0 %289
    %v291 = vsel %vm269, %v212, 0.0
    %292 = vadd.xlane.f32.xlu0 %v291
    %v293 = vpop.xlane.xlu0 %292
    %v294 = vsel %vm269, %v213, 0.0
    %295 = vadd.xlane.f32.xlu0 %v294
    %v296 = vpop.xlane.xlu0 %295
    %v297 = vsel %vm269, %v214, 0.0
    %298 = vadd.xlane.f32.xlu0 %v297
    %v299 = vpop.xlane.xlu0 %298
    %v300 = vsel %vm269, %v215, 0.0
    %301 = vadd.xlane.f32.xlu0 %v300
    %v302 = vpop.xlane.xlu0 %301
    %v303 = vsel %vm269, %v216, 0.0
    %304 = vadd.xlane.f32.xlu0 %v303
    %v305 = vpop.xlane.xlu0 %304
    %v306 = vsel %vm269, %v217, 0.0
    %307 = vadd.xlane.f32.xlu0 %v306
    %v308 = vpop.xlane.xlu0 %307
    %v309 = vsel %vm269, %v218, 0.0
    %310 = vadd.xlane.f32.xlu0 %v309
    %v311 = vpop.xlane.xlu0 %310
    %v312 = vsel %vm269, %v219, 0.0
    %313 = vadd.xlane.f32.xlu0 %v312
    %v314 = vpop.xlane.xlu0 %313
    %v315 = vsel %vm269, %v220, 0.0
    %316 = vadd.xlane.f32.xlu0 %v315
    %v317 = vpop.xlane.xlu0 %316
    %v318 = vsel %vm269, %v221, 0.0
    %319 = vadd.xlane.f32.xlu0 %v318
    %v320 = vpop.xlane.xlu0 %319
    %v321 = vsel %vm269, %v222, 0.0
    %322 = vadd.xlane.f32.xlu0 %v321
    %v323 = vpop.xlane.xlu0 %322
    %v324 = vsel %vm269, %v223, 0.0
    %325 = vadd.xlane.f32.xlu0 %v324
    %v326 = vpop.xlane.xlu0 %325
    %v327 = vsel %vm269, %v224, 0.0
    %328 = vadd.xlane.f32.xlu0 %v327
    %v329 = vpop.xlane.xlu0 %328
    %v330 = vsel %vm269, %v225, 0.0
    %331 = vadd.xlane.f32.xlu0 %v330
    %v332 = vpop.xlane.xlu0 %331
    %v333 = vsel %vm269, %v226, 0.0
    %334 = vadd.xlane.f32.xlu0 %v333
    %v335 = vpop.xlane.xlu0 %334
    %v336 = vsel %vm269, %v227, 0.0
    %337 = vadd.xlane.f32.xlu0 %v336
    %v338 = vpop.xlane.xlu0 %337
    %v339 = vsel %vm269, %v228, 0.0
    %340 = vadd.xlane.f32.xlu0 %v339
    %v341 = vpop.xlane.xlu0 %340
    %v342 = vsel %vm269, %v229, 0.0
    %343 = vadd.xlane.f32.xlu0 %v342
    %v344 = vpop.xlane.xlu0 %343
    %v345 = vsel %vm269, %v230, 0.0
    %346 = vadd.xlane.f32.xlu0 %v345
    %v347 = vpop.xlane.xlu0 %346
    %v348 = vsel %vm269, %v231, 0.0
    %349 = vadd.xlane.f32.xlu0 %v348
    %v350 = vpop.xlane.xlu0 %349
    %v351 = vsel %vm269, %v232, 0.0
    %352 = vadd.xlane.f32.xlu0 %v351
    %v353 = vpop.xlane.xlu0 %352
    %v354 = vsel %vm269, %v233, 0.0
    %355 = vadd.xlane.f32.xlu0 %v354
    %v356 = vpop.xlane.xlu0 %355
    %v357 = vsel %vm269, %v234, 0.0
    %358 = vadd.xlane.f32.xlu0 %v357
    %v359 = vpop.xlane.xlu0 %358
    %v360 = vsel %vm269, %v235, 0.0
    %361 = vadd.xlane.f32.xlu0 %v360
    %v362 = vpop.xlane.xlu0 %361
    %v363 = vsel %vm269, %v236, 0.0
    %364 = vadd.xlane.f32.xlu0 %v363
    %v365 = vpop.xlane.xlu0 %364
    %v366 = vsel %vm269, %v237, 0.0
    %367 = vadd.xlane.f32.xlu0 %v366
    %v368 = vpop.xlane.xlu0 %367
    %v369 = vsel %vm269, %v238, 0.0
    %370 = vadd.xlane.f32.xlu0 %v369
    %v371 = vpop.xlane.xlu0 %370
    %v372 = vsel %vm269, %v239, 0.0
    %373 = vadd.xlane.f32.xlu0 %v372
    %v374 = vpop.xlane.xlu0 %373
    %v375 = vsel %vm269, %v240, 0.0
    %376 = vadd.xlane.f32.xlu0 %v375
    %v377 = vpop.xlane.xlu0 %376
    %v378 = vsel %vm269, %v241, 0.0
    %379 = vadd.xlane.f32.xlu0 %v378
    %v380 = vpop.xlane.xlu0 %379
    %v381 = vsel %vm269, %v242, 0.0
    %382 = vadd.xlane.f32.xlu0 %v381
    %v383 = vpop.xlane.xlu0 %382
    %v384 = vsel %vm269, %v243, 0.0
    %385 = vadd.xlane.f32.xlu0 %v384
    %v386 = vpop.xlane.xlu0 %385
    %v387 = vsel %vm269, %v244, 0.0
    %388 = vadd.xlane.f32.xlu0 %v387
    %v389 = vpop.xlane.xlu0 %388
    %v390 = vsel %vm269, %v245, 0.0
    %391 = vadd.xlane.f32.xlu0 %v390
    %v392 = vpop.xlane.xlu0 %391
    %v393 = vsel %vm269, %v246, 0.0
    %394 = vadd.xlane.f32.xlu0 %v393
    %v395 = vpop.xlane.xlu0 %394
    %v396 = vsel %vm269, %v247, 0.0
    %397 = vadd.xlane.f32.xlu0 %v396
    %v398 = vpop.xlane.xlu0 %397
    %v399 = vsel %vm269, %v248, 0.0
    %400 = vadd.xlane.f32.xlu0 %v399
    %v401 = vpop.xlane.xlu0 %400
    %v402 = vsel %vm269, %v249, 0.0
    %403 = vadd.xlane.f32.xlu0 %v402
    %v404 = vpop.xlane.xlu0 %403
    %v405 = vsel %vm269, %v250, 0.0
    %406 = vadd.xlane.f32.xlu0 %v405
    %v407 = vpop.xlane.xlu0 %406
    %v408 = vsel %vm269, %v251, 0.0
    %409 = vadd.xlane.f32.xlu0 %v408
    %v410 = vpop.xlane.xlu0 %409
    %v411 = vsel %vm269, %v252, 0.0
    %412 = vadd.xlane.f32.xlu0 %v411
    %v413 = vpop.xlane.xlu0 %412
    %v414 = vsel %vm269, %v253, 0.0
    %415 = vadd.xlane.f32.xlu0 %v414
    %v416 = vpop.xlane.xlu0 %415
    %v417 = vsel %vm269, %v254, 0.0
    %418 = vadd.xlane.f32.xlu0 %v417
    %v419 = vpop.xlane.xlu0 %418
    %v420 = vsel %vm269, %v255, 0.0
    %421 = vadd.xlane.f32.xlu0 %v420
    %v422 = vpop.xlane.xlu0 %421
    %v423 = vsel %vm269, %v256, 0.0
    %424 = vadd.xlane.f32.xlu0 %v423
    %v425 = vpop.xlane.xlu0 %424
    %v426 = vsel %vm269, %v257, 0.0
    %427 = vadd.xlane.f32.xlu0 %v426
    %v428 = vpop.xlane.xlu0 %427
    %v429 = vsel %vm269, %v258, 0.0
    %430 = vadd.xlane.f32.xlu0 %v429
    %v431 = vpop.xlane.xlu0 %430
    %v432 = vsel %vm269, %v259, 0.0
    %433 = vadd.xlane.f32.xlu0 %v432
    %v434 = vpop.xlane.xlu0 %433
    %v435 = vsel %vm269, %v260, 0.0
    %436 = vadd.xlane.f32.xlu0 %v435
    %v437 = vpop.xlane.xlu0 %436
    %v438 = vsel %vm269, %v261, 0.0
    %439 = vadd.xlane.f32.xlu0 %v438
    %v440 = vpop.xlane.xlu0 %439
    %v441 = vsel %vm269, %v262, 0.0
    %442 = vadd.xlane.f32.xlu0 %v441
    %v443 = vpop.xlane.xlu0 %442
    %v444 = vsel %vm269, %v263, 0.0
    %445 = vadd.xlane.f32.xlu0 %v444
    %v446 = vpop.xlane.xlu0 %445
    %v447 = vsel %vm269, %v264, 0.0
    %448 = vadd.xlane.f32.xlu0 %v447
    %v449 = vpop.xlane.xlu0 %448
    %v450 = vsel %vm269, %v265, 0.0
    %451 = vadd.xlane.f32.xlu0 %v450
    %v452 = vpop.xlane.xlu0 %451
    %v453 = vsel %vm269, %v266, 0.0
    %454 = vadd.xlane.f32.xlu0 %v453
    %v455 = vpop.xlane.xlu0 %454
    %v456 = vsel %vm269, %v267, 0.0
    %457 = vadd.xlane.f32.xlu0 %v456
    %v458 = vpop.xlane.xlu0 %457
    %v459 = vsel %vm269, %v268, 0.0
    %460 = vadd.xlane.f32.xlu0 %v459
    %v461 = vpop.xlane.xlu0 %460
    %v462 = vrcp.pop 64.0
    %v463 = vmul.f32 %v272, %v462
    %v464 = vmul.f32 %v275, %v462
    %v465 = vmul.f32 %v278, %v462
    %v466 = vmul.f32 %v281, %v462
    %v467 = vmul.f32 %v284, %v462
    %v468 = vmul.f32 %v287, %v462
    %v469 = vmul.f32 %v290, %v462
    %v470 = vmul.f32 %v293, %v462
    %v471 = vmul.f32 %v296, %v462
    %v472 = vmul.f32 %v299, %v462
    %v473 = vmul.f32 %v302, %v462
    %v474 = vmul.f32 %v305, %v462
    %v475 = vmul.f32 %v308, %v462
    %v476 = vmul.f32 %v311, %v462
    %v477 = vmul.f32 %v314, %v462
    %v478 = vmul.f32 %v317, %v462
    %v479 = vmul.f32 %v320, %v462
    %v480 = vmul.f32 %v323, %v462
    %v481 = vmul.f32 %v326, %v462
    %v482 = vmul.f32 %v329, %v462
    %v483 = vmul.f32 %v332, %v462
    %v484 = vmul.f32 %v335, %v462
    %v485 = vmul.f32 %v338, %v462
    %v486 = vmul.f32 %v341, %v462
    %v487 = vmul.f32 %v344, %v462
    %v488 = vmul.f32 %v347, %v462
    %v489 = vmul.f32 %v350, %v462
    %v490 = vmul.f32 %v353, %v462
    %v491 = vmul.f32 %v356, %v462
    %v492 = vmul.f32 %v359, %v462
    %v493 = vmul.f32 %v362, %v462
    %v494 = vmul.f32 %v365, %v462
    %v495 = vmul.f32 %v368, %v462
    %v496 = vmul.f32 %v371, %v462
    %v497 = vmul.f32 %v374, %v462
    %v498 = vmul.f32 %v377, %v462
    %v499 = vmul.f32 %v380, %v462
    %v500 = vmul.f32 %v383, %v462
    %v501 = vmul.f32 %v386, %v462
    %v502 = vmul.f32 %v389, %v462
    %v503 = vmul.f32 %v392, %v462
    %v504 = vmul.f32 %v395, %v462
    %v505 = vmul.f32 %v398, %v462
    %v506 = vmul.f32 %v401, %v462
    %v507 = vmul.f32 %v404, %v462
    %v508 = vmul.f32 %v407, %v462
    %v509 = vmul.f32 %v410, %v462
    %v510 = vmul.f32 %v413, %v462
    %v511 = vmul.f32 %v416, %v462
    %v512 = vmul.f32 %v419, %v462
    %v513 = vmul.f32 %v422, %v462
    %v514 = vmul.f32 %v425, %v462
    %v515 = vmul.f32 %v428, %v462
    %v516 = vmul.f32 %v431, %v462
    %v517 = vmul.f32 %v434, %v462
    %v518 = vmul.f32 %v437, %v462
    %v519 = vmul.f32 %v440, %v462
    %v520 = vmul.f32 %v443, %v462
    %v521 = vmul.f32 %v446, %v462
    %v522 = vmul.f32 %v449, %v462
    %v523 = vmul.f32 %v452, %v462
    %v524 = vmul.f32 %v455, %v462
    %v525 = vmul.f32 %v458, %v462
    %v526 = vmul.f32 %v461, %v462
    %v527 = vlog2.pop %v463
    %v528 = vmul.f32 %v527, 0.6931472
    %v529 = vlog2.pop %v464
    %v530 = vmul.f32 %v529, 0.6931472
    %v531 = vlog2.pop %v465
    %v532 = vmul.f32 %v531, 0.6931472
    %v533 = vlog2.pop %v466
    %v534 = vmul.f32 %v533, 0.6931472
    %v535 = vlog2.pop %v467
    %v536 = vmul.f32 %v535, 0.6931472
    %v537 = vlog2.pop %v468
    %v538 = vmul.f32 %v537, 0.6931472
    %v539 = vlog2.pop %v469
    %v540 = vmul.f32 %v539, 0.6931472
    %v541 = vlog2.pop %v470
    %v542 = vmul.f32 %v541, 0.6931472
    %v543 = vlog2.pop %v471
    %v544 = vmul.f32 %v543, 0.6931472
    %v545 = vlog2.pop %v472
    %v546 = vmul.f32 %v545, 0.6931472
    %v547 = vlog2.pop %v473
    %v548 = vmul.f32 %v547, 0.6931472
    %v549 = vlog2.pop %v474
    %v550 = vmul.f32 %v549, 0.6931472
    %v551 = vlog2.pop %v475
    %v552 = vmul.f32 %v551, 0.6931472
    %v553 = vlog2.pop %v476
    %v554 = vmul.f32 %v553, 0.6931472
    %v555 = vlog2.pop %v477
    %v556 = vmul.f32 %v555, 0.6931472
    %v557 = vlog2.pop %v478
    %v558 = vmul.f32 %v557, 0.6931472
    %v559 = vlog2.pop %v479
    %v560 = vmul.f32 %v559, 0.6931472
    %v561 = vlog2.pop %v480
    %v562 = vmul.f32 %v561, 0.6931472
    %v563 = vlog2.pop %v481
    %v564 = vmul.f32 %v563, 0.6931472
    %v565 = vlog2.pop %v482
    %v566 = vmul.f32 %v565, 0.6931472
    %v567 = vlog2.pop %v483
    %v568 = vmul.f32 %v567, 0.6931472
    %v569 = vlog2.pop %v484
    %v570 = vmul.f32 %v569, 0.6931472
    %v571 = vlog2.pop %v485
    %v572 = vmul.f32 %v571, 0.6931472
    %v573 = vlog2.pop %v486
    %v574 = vmul.f32 %v573, 0.6931472
    %v575 = vlog2.pop %v487
    %v576 = vmul.f32 %v575, 0.6931472
    %v577 = vlog2.pop %v488
    %v578 = vmul.f32 %v577, 0.6931472
    %v579 = vlog2.pop %v489
    %v580 = vmul.f32 %v579, 0.6931472
    %v581 = vlog2.pop %v490
    %v582 = vmul.f32 %v581, 0.6931472
    %v583 = vlog2.pop %v491
    %v584 = vmul.f32 %v583, 0.6931472
    %v585 = vlog2.pop %v492
    %v586 = vmul.f32 %v585, 0.6931472
    %v587 = vlog2.pop %v493
    %v588 = vmul.f32 %v587, 0.6931472
    %v589 = vlog2.pop %v494
    %v590 = vmul.f32 %v589, 0.6931472
    %v591 = vlog2.pop %v495
    %v592 = vmul.f32 %v591, 0.6931472
    %v593 = vlog2.pop %v496
    %v594 = vmul.f32 %v593, 0.6931472
    %v595 = vlog2.pop %v497
    %v596 = vmul.f32 %v595, 0.6931472
    %v597 = vlog2.pop %v498
    %v598 = vmul.f32 %v597, 0.6931472
    %v599 = vlog2.pop %v499
    %v600 = vmul.f32 %v599, 0.6931472
    %v601 = vlog2.pop %v500
    %v602 = vmul.f32 %v601, 0.6931472
    %v603 = vlog2.pop %v501
    %v604 = vmul.f32 %v603, 0.6931472
    %v605 = vlog2.pop %v502
    %v606 = vmul.f32 %v605, 0.6931472
    %v607 = vlog2.pop %v503
    %v608 = vmul.f32 %v607, 0.6931472
    %v609 = vlog2.pop %v504
    %v610 = vmul.f32 %v609, 0.6931472
    %v611 = vlog2.pop %v505
    %v612 = vmul.f32 %v611, 0.6931472
    %v613 = vlog2.pop %v506
    %v614 = vmul.f32 %v613, 0.6931472
    %v615 = vlog2.pop %v507
    %v616 = vmul.f32 %v615, 0.6931472
    %v617 = vlog2.pop %v508
    %v618 = vmul.f32 %v617, 0.6931472
    %v619 = vlog2.pop %v509
    %v620 = vmul.f32 %v619, 0.6931472
    %v621 = vlog2.pop %v510
    %v622 = vmul.f32 %v621, 0.6931472
    %v623 = vlog2.pop %v511
    %v624 = vmul.f32 %v623, 0.6931472
    %v625 = vlog2.pop %v512
    %v626 = vmul.f32 %v625, 0.6931472
    %v627 = vlog2.pop %v513
    %v628 = vmul.f32 %v627, 0.6931472
    %v629 = vlog2.pop %v514
    %v630 = vmul.f32 %v629, 0.6931472
    %v631 = vlog2.pop %v515
    %v632 = vmul.f32 %v631, 0.6931472
    %v633 = vlog2.pop %v516
    %v634 = vmul.f32 %v633, 0.6931472
    %v635 = vlog2.pop %v517
    %v636 = vmul.f32 %v635, 0.6931472
    %v637 = vlog2.pop %v518
    %v638 = vmul.f32 %v637, 0.6931472
    %v639 = vlog2.pop %v519
    %v640 = vmul.f32 %v639, 0.6931472
    %v641 = vlog2.pop %v520
    %v642 = vmul.f32 %v641, 0.6931472
    %v643 = vlog2.pop %v521
    %v644 = vmul.f32 %v643, 0.6931472
    %v645 = vlog2.pop %v522
    %v646 = vmul.f32 %v645, 0.6931472
    %v647 = vlog2.pop %v523
    %v648 = vmul.f32 %v647, 0.6931472
    %v649 = vlog2.pop %v524
    %v650 = vmul.f32 %v649, 0.6931472
    %v651 = vlog2.pop %v525
    %v652 = vmul.f32 %v651, 0.6931472
    %v653 = vlog2.pop %v526
    %v654 = vmul.f32 %v653, 0.6931472
    %v655 = vmul.f32 %v528, 0.33333334
    %v656 = vmul.f32 %v530, 0.33333334
    %v657 = vmul.f32 %v532, 0.33333334
    %v658 = vmul.f32 %v534, 0.33333334
    %v659 = vmul.f32 %v536, 0.33333334
    %v660 = vmul.f32 %v538, 0.33333334
    %v661 = vmul.f32 %v540, 0.33333334
    %v662 = vmul.f32 %v542, 0.33333334
    %v663 = vmul.f32 %v544, 0.33333334
    %v664 = vmul.f32 %v546, 0.33333334
    %v665 = vmul.f32 %v548, 0.33333334
    %v666 = vmul.f32 %v550, 0.33333334
    %v667 = vmul.f32 %v552, 0.33333334
    %v668 = vmul.f32 %v554, 0.33333334
    %v669 = vmul.f32 %v556, 0.33333334
    %v670 = vmul.f32 %v558, 0.33333334
    %v671 = vmul.f32 %v560, 0.33333334
    %v672 = vmul.f32 %v562, 0.33333334
    %v673 = vmul.f32 %v564, 0.33333334
    %v674 = vmul.f32 %v566, 0.33333334
    %v675 = vmul.f32 %v568, 0.33333334
    %v676 = vmul.f32 %v570, 0.33333334
    %v677 = vmul.f32 %v572, 0.33333334
    %v678 = vmul.f32 %v574, 0.33333334
    %v679 = vmul.f32 %v576, 0.33333334
    %v680 = vmul.f32 %v578, 0.33333334
    %v681 = vmul.f32 %v580, 0.33333334
    %v682 = vmul.f32 %v582, 0.33333334
    %v683 = vmul.f32 %v584, 0.33333334
    %v684 = vmul.f32 %v586, 0.33333334
    %v685 = vmul.f32 %v588, 0.33333334
    %v686 = vmul.f32 %v590, 0.33333334
    %v687 = vmul.f32 %v592, 0.33333334
    %v688 = vmul.f32 %v594, 0.33333334
    %v689 = vmul.f32 %v596, 0.33333334
    %v690 = vmul.f32 %v598, 0.33333334
    %v691 = vmul.f32 %v600, 0.33333334
    %v692 = vmul.f32 %v602, 0.33333334
    %v693 = vmul.f32 %v604, 0.33333334
    %v694 = vmul.f32 %v606, 0.33333334
    %v695 = vmul.f32 %v608, 0.33333334
    %v696 = vmul.f32 %v610, 0.33333334
    %v697 = vmul.f32 %v612, 0.33333334
    %v698 = vmul.f32 %v614, 0.33333334
    %v699 = vmul.f32 %v616, 0.33333334
    %v700 = vmul.f32 %v618, 0.33333334
    %v701 = vmul.f32 %v620, 0.33333334
    %v702 = vmul.f32 %v622, 0.33333334
    %v703 = vmul.f32 %v624, 0.33333334
    %v704 = vmul.f32 %v626, 0.33333334
    %v705 = vmul.f32 %v628, 0.33333334
    %v706 = vmul.f32 %v630, 0.33333334
    %v707 = vmul.f32 %v632, 0.33333334
    %v708 = vmul.f32 %v634, 0.33333334
    %v709 = vmul.f32 %v636, 0.33333334
    %v710 = vmul.f32 %v638, 0.33333334
    %v711 = vmul.f32 %v640, 0.33333334
    %v712 = vmul.f32 %v642, 0.33333334
    %v713 = vmul.f32 %v644, 0.33333334
    %v714 = vmul.f32 %v646, 0.33333334
    %v715 = vmul.f32 %v648, 0.33333334
    %v716 = vmul.f32 %v650, 0.33333334
    %v717 = vmul.f32 %v652, 0.33333334
    %v718 = vmul.f32 %v654, 0.33333334
    %v719 = vmul.f32 %v655, 1.442695
    %v720 = vpow.pop %v719
    %v721 = vmul.f32 %v656, 1.442695
    %v722 = vpow.pop %v721
    %v723 = vmul.f32 %v657, 1.442695
    %v724 = vpow.pop %v723
    %v725 = vmul.f32 %v658, 1.442695
    %v726 = vpow.pop %v725
    %v727 = vmul.f32 %v659, 1.442695
    %v728 = vpow.pop %v727
    %v729 = vmul.f32 %v660, 1.442695
    %v730 = vpow.pop %v729
    %v731 = vmul.f32 %v661, 1.442695
    %v732 = vpow.pop %v731
    %v733 = vmul.f32 %v662, 1.442695
    %v734 = vpow.pop %v733
    %v735 = vmul.f32 %v663, 1.442695
    %v736 = vpow.pop %v735
    %v737 = vmul.f32 %v664, 1.442695
    %v738 = vpow.pop %v737
    %v739 = vmul.f32 %v665, 1.442695
    %v740 = vpow.pop %v739
    %v741 = vmul.f32 %v666, 1.442695
    %v742 = vpow.pop %v741
    %v743 = vmul.f32 %v667, 1.442695
    %v744 = vpow.pop %v743
    %v745 = vmul.f32 %v668, 1.442695
    %v746 = vpow.pop %v745
    %v747 = vmul.f32 %v669, 1.442695
    %v748 = vpow.pop %v747
    %v749 = vmul.f32 %v670, 1.442695
    %v750 = vpow.pop %v749
    %v751 = vmul.f32 %v671, 1.442695
    %v752 = vpow.pop %v751
    %v753 = vmul.f32 %v672, 1.442695
    %v754 = vpow.pop %v753
    %v755 = vmul.f32 %v673, 1.442695
    %v756 = vpow.pop %v755
    %v757 = vmul.f32 %v674, 1.442695
    %v758 = vpow.pop %v757
    %v759 = vmul.f32 %v675, 1.442695
    %v760 = vpow.pop %v759
    %v761 = vmul.f32 %v676, 1.442695
    %v762 = vpow.pop %v761
    %v763 = vmul.f32 %v677, 1.442695
    %v764 = vpow.pop %v763
    %v765 = vmul.f32 %v678, 1.442695
    %v766 = vpow.pop %v765
    %v767 = vmul.f32 %v679, 1.442695
    %v768 = vpow.pop %v767
    %v769 = vmul.f32 %v680, 1.442695
    %v770 = vpow.pop %v769
    %v771 = vmul.f32 %v681, 1.442695
    %v772 = vpow.pop %v771
    %v773 = vmul.f32 %v682, 1.442695
    %v774 = vpow.pop %v773
    %v775 = vmul.f32 %v683, 1.442695
    %v776 = vpow.pop %v775
    %v777 = vmul.f32 %v684, 1.442695
    %v778 = vpow.pop %v777
    %v779 = vmul.f32 %v685, 1.442695
    %v780 = vpow.pop %v779
    %v781 = vmul.f32 %v686, 1.442695
    %v782 = vpow.pop %v781
    %v783 = vmul.f32 %v687, 1.442695
    %v784 = vpow.pop %v783
    %v785 = vmul.f32 %v688, 1.442695
    %v786 = vpow.pop %v785
    %v787 = vmul.f32 %v689, 1.442695
    %v788 = vpow.pop %v787
    %v789 = vmul.f32 %v690, 1.442695
    %v790 = vpow.pop %v789
    %v791 = vmul.f32 %v691, 1.442695
    %v792 = vpow.pop %v791
    %v793 = vmul.f32 %v692, 1.442695
    %v794 = vpow.pop %v793
    %v795 = vmul.f32 %v693, 1.442695
    %v796 = vpow.pop %v795
    %v797 = vmul.f32 %v694, 1.442695
    %v798 = vpow.pop %v797
    %v799 = vmul.f32 %v695, 1.442695
    %v800 = vpow.pop %v799
    %v801 = vmul.f32 %v696, 1.442695
    %v802 = vpow.pop %v801
    %v803 = vmul.f32 %v697, 1.442695
    %v804 = vpow.pop %v803
    %v805 = vmul.f32 %v698, 1.442695
    %v806 = vpow.pop %v805
    %v807 = vmul.f32 %v699, 1.442695
    %v808 = vpow.pop %v807
    %v809 = vmul.f32 %v700, 1.442695
    %v810 = vpow.pop %v809
    %v811 = vmul.f32 %v701, 1.442695
    %v812 = vpow.pop %v811
    %v813 = vmul.f32 %v702, 1.442695
    %v814 = vpow.pop %v813
    %v815 = vmul.f32 %v703, 1.442695
    %v816 = vpow.pop %v815
    %v817 = vmul.f32 %v704, 1.442695
    %v818 = vpow.pop %v817
    %v819 = vmul.f32 %v705, 1.442695
    %v820 = vpow.pop %v819
    %v821 = vmul.f32 %v706, 1.442695
    %v822 = vpow.pop %v821
    %v823 = vmul.f32 %v707, 1.442695
    %v824 = vpow.pop %v823
    %v825 = vmul.f32 %v708, 1.442695
    %v826 = vpow.pop %v825
    %v827 = vmul.f32 %v709, 1.442695
    %v828 = vpow.pop %v827
    %v829 = vmul.f32 %v710, 1.442695
    %v830 = vpow.pop %v829
    %v831 = vmul.f32 %v711, 1.442695
    %v832 = vpow.pop %v831
    %v833 = vmul.f32 %v712, 1.442695
    %v834 = vpow.pop %v833
    %v835 = vmul.f32 %v713, 1.442695
    %v836 = vpow.pop %v835
    %v837 = vmul.f32 %v714, 1.442695
    %v838 = vpow.pop %v837
    %v839 = vmul.f32 %v715, 1.442695
    %v840 = vpow.pop %v839
    %v841 = vmul.f32 %v716, 1.442695
    %v842 = vpow.pop %v841
    %v843 = vmul.f32 %v717, 1.442695
    %v844 = vpow.pop %v843
    %v845 = vmul.f32 %v718, 1.442695
    %v846 = vpow.pop %v845
    %v847 = vmul.f32 %v720, %v720
    %v848 = vmul.f32 %v722, %v722
    %v849 = vmul.f32 %v724, %v724
    %v850 = vmul.f32 %v726, %v726
    %v851 = vmul.f32 %v728, %v728
    %v852 = vmul.f32 %v730, %v730
    %v853 = vmul.f32 %v732, %v732
    %v854 = vmul.f32 %v734, %v734
    %v855 = vmul.f32 %v736, %v736
    %v856 = vmul.f32 %v738, %v738
    %v857 = vmul.f32 %v740, %v740
    %v858 = vmul.f32 %v742, %v742
    %v859 = vmul.f32 %v744, %v744
    %v860 = vmul.f32 %v746, %v746
    %v861 = vmul.f32 %v748, %v748
    %v862 = vmul.f32 %v750, %v750
    %v863 = vmul.f32 %v752, %v752
    %v864 = vmul.f32 %v754, %v754
    %v865 = vmul.f32 %v756, %v756
    %v866 = vmul.f32 %v758, %v758
    %v867 = vmul.f32 %v760, %v760
    %v868 = vmul.f32 %v762, %v762
    %v869 = vmul.f32 %v764, %v764
    %v870 = vmul.f32 %v766, %v766
    %v871 = vmul.f32 %v768, %v768
    %v872 = vmul.f32 %v770, %v770
    %v873 = vmul.f32 %v772, %v772
    %v874 = vmul.f32 %v774, %v774
    %v875 = vmul.f32 %v776, %v776
    %v876 = vmul.f32 %v778, %v778
    %v877 = vmul.f32 %v780, %v780
    %v878 = vmul.f32 %v782, %v782
    %v879 = vmul.f32 %v784, %v784
    %v880 = vmul.f32 %v786, %v786
    %v881 = vmul.f32 %v788, %v788
    %v882 = vmul.f32 %v790, %v790
    %v883 = vmul.f32 %v792, %v792
    %v884 = vmul.f32 %v794, %v794
    %v885 = vmul.f32 %v796, %v796
    %v886 = vmul.f32 %v798, %v798
    %v887 = vmul.f32 %v800, %v800
    %v888 = vmul.f32 %v802, %v802
    %v889 = vmul.f32 %v804, %v804
    %v890 = vmul.f32 %v806, %v806
    %v891 = vmul.f32 %v808, %v808
    %v892 = vmul.f32 %v810, %v810
    %v893 = vmul.f32 %v812, %v812
    %v894 = vmul.f32 %v814, %v814
    %v895 = vmul.f32 %v816, %v816
    %v896 = vmul.f32 %v818, %v818
    %v897 = vmul.f32 %v820, %v820
    %v898 = vmul.f32 %v822, %v822
    %v899 = vmul.f32 %v824, %v824
    %v900 = vmul.f32 %v826, %v826
    %v901 = vmul.f32 %v828, %v828
    %v902 = vmul.f32 %v830, %v830
    %v903 = vmul.f32 %v832, %v832
    %v904 = vmul.f32 %v834, %v834
    %v905 = vmul.f32 %v836, %v836
    %v906 = vmul.f32 %v838, %v838
    %v907 = vmul.f32 %v840, %v840
    %v908 = vmul.f32 %v842, %v842
    %v909 = vmul.f32 %v844, %v844
    %v910 = vmul.f32 %v846, %v846
    %v975 = vlaneseq
    %v976 = vand.u32 %v975, 127
    %v977 = vlaneseq
    %v978 = vshrl.u32 %v977, 7
    %v979 = vsub.s32 %v976, %v978
    %v980 = vrot.slane %v847, %v979
    %v981 = vadd.s32 %v976, 4294967288
    %v982 = vlaneseq
    %v983 = vshrl.u32 %v982, 7
    %v984 = vsub.s32 %v981, %v983
    %v985 = vrot.slane %v848, %v984
    %vm986 = vcmask 130112
    %v987 = vsel %vm986, %v985, %v980
    %v988 = vadd.s32 %v976, 4294967280
    %v989 = vlaneseq
    %v990 = vshrl.u32 %v989, 7
    %v991 = vsub.s32 %v988, %v990
    %v992 = vrot.slane %v849, %v991
    %vm993 = vcmask 195712
    %v994 = vsel %vm993, %v992, %v987
    %v995 = vadd.s32 %v976, 4294967272
    %v996 = vlaneseq
    %v997 = vshrl.u32 %v996, 7
    %v998 = vsub.s32 %v995, %v997
    %v999 = vrot.slane %v850, %v998
    %vm1000 = vcmask 261312
    %v1001 = vsel %vm1000, %v999, %v994
    %v1002 = vadd.s32 %v976, 4294967264
    %v1003 = vlaneseq
    %v1004 = vshrl.u32 %v1003, 7
    %v1005 = vsub.s32 %v1002, %v1004
    %v1006 = vrot.slane %v851, %v1005
    %vm1007 = vcmask 326912
    %v1008 = vsel %vm1007, %v1006, %v1001
    %v1009 = vadd.s32 %v976, 4294967256
    %v1010 = vlaneseq
    %v1011 = vshrl.u32 %v1010, 7
    %v1012 = vsub.s32 %v1009, %v1011
    %v1013 = vrot.slane %v852, %v1012
    %vm1014 = vcmask 392512
    %v1015 = vsel %vm1014, %v1013, %v1008
    %v1016 = vadd.s32 %v976, 4294967248
    %v1017 = vlaneseq
    %v1018 = vshrl.u32 %v1017, 7
    %v1019 = vsub.s32 %v1016, %v1018
    %v1020 = vrot.slane %v853, %v1019
    %vm1021 = vcmask 458112
    %v1022 = vsel %vm1021, %v1020, %v1015
    %v1023 = vadd.s32 %v976, 4294967240
    %v1024 = vlaneseq
    %v1025 = vshrl.u32 %v1024, 7
    %v1026 = vsub.s32 %v1023, %v1025
    %v1027 = vrot.slane %v854, %v1026
    %vm1028 = vcmask 523712
    %v1029 = vsel %vm1028, %v1027, %v1022
    %v1030 = vadd.s32 %v976, 4294967232
    %v1031 = vlaneseq
    %v1032 = vshrl.u32 %v1031, 7
    %v1033 = vsub.s32 %v1030, %v1032
    %v1034 = vrot.slane %v855, %v1033
    %vm1035 = vcmask 589312
    %v1036 = vsel %vm1035, %v1034, %v1029
    %v1037 = vadd.s32 %v976, 4294967224
    %v1038 = vlaneseq
    %v1039 = vshrl.u32 %v1038, 7
    %v1040 = vsub.s32 %v1037, %v1039
    %v1041 = vrot.slane %v856, %v1040
    %vm1042 = vcmask 654912
    %v1043 = vsel %vm1042, %v1041, %v1036
    %v1044 = vadd.s32 %v976, 4294967216
    %v1045 = vlaneseq
    %v1046 = vshrl.u32 %v1045, 7
    %v1047 = vsub.s32 %v1044, %v1046
    %v1048 = vrot.slane %v857, %v1047
    %vm1049 = vcmask 720512
    %v1050 = vsel %vm1049, %v1048, %v1043
    %v1051 = vadd.s32 %v976, 4294967208
    %v1052 = vlaneseq
    %v1053 = vshrl.u32 %v1052, 7
    %v1054 = vsub.s32 %v1051, %v1053
    %v1055 = vrot.slane %v858, %v1054
    %vm1056 = vcmask 786112
    %v1057 = vsel %vm1056, %v1055, %v1050
    %v1058 = vadd.s32 %v976, 4294967200
    %v1059 = vlaneseq
    %v1060 = vshrl.u32 %v1059, 7
    %v1061 = vsub.s32 %v1058, %v1060
    %v1062 = vrot.slane %v859, %v1061
    %vm1063 = vcmask 851712
    %v1064 = vsel %vm1063, %v1062, %v1057
    %v1065 = vadd.s32 %v976, 4294967192
    %v1066 = vlaneseq
    %v1067 = vshrl.u32 %v1066, 7
    %v1068 = vsub.s32 %v1065, %v1067
    %v1069 = vrot.slane %v860, %v1068
    %vm1070 = vcmask 917312
    %v1071 = vsel %vm1070, %v1069, %v1064
    %v1072 = vadd.s32 %v976, 4294967184
    %v1073 = vlaneseq
    %v1074 = vshrl.u32 %v1073, 7
    %v1075 = vsub.s32 %v1072, %v1074
    %v1076 = vrot.slane %v861, %v1075
    %vm1077 = vcmask 982912
    %v1078 = vsel %vm1077, %v1076, %v1071
    %v1079 = vadd.s32 %v976, 4294967176
    %v1080 = vlaneseq
    %v1081 = vshrl.u32 %v1080, 7
    %v1082 = vsub.s32 %v1079, %v1081
    %v1083 = vrot.slane %v862, %v1082
    %vm1084 = vcmask 1048512
    %v1085 = vsel %vm1084, %v1083, %v1078
    %v1086 = vlaneseq
    %v1087 = vshrl.u32 %v1086, 7
    %v1088 = vsub.s32 %v976, %v1087
    %v1089 = vrot.slane %v863, %v1088
    %v1090 = vlaneseq
    %v1091 = vshrl.u32 %v1090, 7
    %v1092 = vsub.s32 %v981, %v1091
    %v1093 = vrot.slane %v864, %v1092
    %v1094 = vsel %vm986, %v1093, %v1089
    %v1095 = vlaneseq
    %v1096 = vshrl.u32 %v1095, 7
    %v1097 = vsub.s32 %v988, %v1096
    %v1098 = vrot.slane %v865, %v1097
    %v1099 = vsel %vm993, %v1098, %v1094
    %v1100 = vlaneseq
    %v1101 = vshrl.u32 %v1100, 7
    %v1102 = vsub.s32 %v995, %v1101
    %v1103 = vrot.slane %v866, %v1102
    %v1104 = vsel %vm1000, %v1103, %v1099
    %v1105 = vlaneseq
    %v1106 = vshrl.u32 %v1105, 7
    %v1107 = vsub.s32 %v1002, %v1106
    %v1108 = vrot.slane %v867, %v1107
    %v1109 = vsel %vm1007, %v1108, %v1104
    %v1110 = vlaneseq
    %v1111 = vshrl.u32 %v1110, 7
    %v1112 = vsub.s32 %v1009, %v1111
    %v1113 = vrot.slane %v868, %v1112
    %v1114 = vsel %vm1014, %v1113, %v1109
    %v1115 = vlaneseq
    %v1116 = vshrl.u32 %v1115, 7
    %v1117 = vsub.s32 %v1016, %v1116
    %v1118 = vrot.slane %v869, %v1117
    %v1119 = vsel %vm1021, %v1118, %v1114
    %v1120 = vlaneseq
    %v1121 = vshrl.u32 %v1120, 7
    %v1122 = vsub.s32 %v1023, %v1121
    %v1123 = vrot.slane %v870, %v1122
    %v1124 = vsel %vm1028, %v1123, %v1119
    %v1125 = vlaneseq
    %v1126 = vshrl.u32 %v1125, 7
    %v1127 = vsub.s32 %v1030, %v1126
    %v1128 = vrot.slane %v871, %v1127
    %v1129 = vsel %vm1035, %v1128, %v1124
    %v1130 = vlaneseq
    %v1131 = vshrl.u32 %v1130, 7
    %v1132 = vsub.s32 %v1037, %v1131
    %v1133 = vrot.slane %v872, %v1132
    %v1134 = vsel %vm1042, %v1133, %v1129
    %v1135 = vlaneseq
    %v1136 = vshrl.u32 %v1135, 7
    %v1137 = vsub.s32 %v1044, %v1136
    %v1138 = vrot.slane %v873, %v1137
    %v1139 = vsel %vm1049, %v1138, %v1134
    %v1140 = vlaneseq
    %v1141 = vshrl.u32 %v1140, 7
    %v1142 = vsub.s32 %v1051, %v1141
    %v1143 = vrot.slane %v874, %v1142
    %v1144 = vsel %vm1056, %v1143, %v1139
    %v1145 = vlaneseq
    %v1146 = vshrl.u32 %v1145, 7
    %v1147 = vsub.s32 %v1058, %v1146
    %v1148 = vrot.slane %v875, %v1147
    %v1149 = vsel %vm1063, %v1148, %v1144
    %v1150 = vlaneseq
    %v1151 = vshrl.u32 %v1150, 7
    %v1152 = vsub.s32 %v1065, %v1151
    %v1153 = vrot.slane %v876, %v1152
    %v1154 = vsel %vm1070, %v1153, %v1149
    %v1155 = vlaneseq
    %v1156 = vshrl.u32 %v1155, 7
    %v1157 = vsub.s32 %v1072, %v1156
    %v1158 = vrot.slane %v877, %v1157
    %v1159 = vsel %vm1077, %v1158, %v1154
    %v1160 = vlaneseq
    %v1161 = vshrl.u32 %v1160, 7
    %v1162 = vsub.s32 %v1079, %v1161
    %v1163 = vrot.slane %v878, %v1162
    %v1164 = vsel %vm1084, %v1163, %v1159
    %v1165 = vlaneseq
    %v1166 = vshrl.u32 %v1165, 7
    %v1167 = vsub.s32 %v976, %v1166
    %v1168 = vrot.slane %v879, %v1167
    %v1169 = vlaneseq
    %v1170 = vshrl.u32 %v1169, 7
    %v1171 = vsub.s32 %v981, %v1170
    %v1172 = vrot.slane %v880, %v1171
    %v1173 = vsel %vm986, %v1172, %v1168
    %v1174 = vlaneseq
    %v1175 = vshrl.u32 %v1174, 7
    %v1176 = vsub.s32 %v988, %v1175
    %v1177 = vrot.slane %v881, %v1176
    %v1178 = vsel %vm993, %v1177, %v1173
    %v1179 = vlaneseq
    %v1180 = vshrl.u32 %v1179, 7
    %v1181 = vsub.s32 %v995, %v1180
    %v1182 = vrot.slane %v882, %v1181
    %v1183 = vsel %vm1000, %v1182, %v1178
    %v1184 = vlaneseq
    %v1185 = vshrl.u32 %v1184, 7
    %v1186 = vsub.s32 %v1002, %v1185
    %v1187 = vrot.slane %v883, %v1186
    %v1188 = vsel %vm1007, %v1187, %v1183
    %v1189 = vlaneseq
    %v1190 = vshrl.u32 %v1189, 7
    %v1191 = vsub.s32 %v1009, %v1190
    %v1192 = vrot.slane %v884, %v1191
    %v1193 = vsel %vm1014, %v1192, %v1188
    %v1194 = vlaneseq
    %v1195 = vshrl.u32 %v1194, 7
    %v1196 = vsub.s32 %v1016, %v1195
    %v1197 = vrot.slane %v885, %v1196
    %v1198 = vsel %vm1021, %v1197, %v1193
    %v1199 = vlaneseq
    %v1200 = vshrl.u32 %v1199, 7
    %v1201 = vsub.s32 %v1023, %v1200
    %v1202 = vrot.slane %v886, %v1201
    %v1203 = vsel %vm1028, %v1202, %v1198
    %v1204 = vlaneseq
    %v1205 = vshrl.u32 %v1204, 7
    %v1206 = vsub.s32 %v1030, %v1205
    %v1207 = vrot.slane %v887, %v1206
    %v1208 = vsel %vm1035, %v1207, %v1203
    %v1209 = vlaneseq
    %v1210 = vshrl.u32 %v1209, 7
    %v1211 = vsub.s32 %v1037, %v1210
    %v1212 = vrot.slane %v888, %v1211
    %v1213 = vsel %vm1042, %v1212, %v1208
    %v1214 = vlaneseq
    %v1215 = vshrl.u32 %v1214, 7
    %v1216 = vsub.s32 %v1044, %v1215
    %v1217 = vrot.slane %v889, %v1216
    %v1218 = vsel %vm1049, %v1217, %v1213
    %v1219 = vlaneseq
    %v1220 = vshrl.u32 %v1219, 7
    %v1221 = vsub.s32 %v1051, %v1220
    %v1222 = vrot.slane %v890, %v1221
    %v1223 = vsel %vm1056, %v1222, %v1218
    %v1224 = vlaneseq
    %v1225 = vshrl.u32 %v1224, 7
    %v1226 = vsub.s32 %v1058, %v1225
    %v1227 = vrot.slane %v891, %v1226
    %v1228 = vsel %vm1063, %v1227, %v1223
    %v1229 = vlaneseq
    %v1230 = vshrl.u32 %v1229, 7
    %v1231 = vsub.s32 %v1065, %v1230
    %v1232 = vrot.slane %v892, %v1231
    %v1233 = vsel %vm1070, %v1232, %v1228
    %v1234 = vlaneseq
    %v1235 = vshrl.u32 %v1234, 7
    %v1236 = vsub.s32 %v1072, %v1235
    %v1237 = vrot.slane %v893, %v1236
    %v1238 = vsel %vm1077, %v1237, %v1233
    %v1239 = vlaneseq
    %v1240 = vshrl.u32 %v1239, 7
    %v1241 = vsub.s32 %v1079, %v1240
    %v1242 = vrot.slane %v894, %v1241
    %v1243 = vsel %vm1084, %v1242, %v1238
    %v1244 = vlaneseq
    %v1245 = vshrl.u32 %v1244, 7
    %v1246 = vsub.s32 %v976, %v1245
    %v1247 = vrot.slane %v895, %v1246
    %v1248 = vlaneseq
    %v1249 = vshrl.u32 %v1248, 7
    %v1250 = vsub.s32 %v981, %v1249
    %v1251 = vrot.slane %v896, %v1250
    %v1252 = vsel %vm986, %v1251, %v1247
    %v1253 = vlaneseq
    %v1254 = vshrl.u32 %v1253, 7
    %v1255 = vsub.s32 %v988, %v1254
    %v1256 = vrot.slane %v897, %v1255
    %v1257 = vsel %vm993, %v1256, %v1252
    %v1258 = vlaneseq
    %v1259 = vshrl.u32 %v1258, 7
    %v1260 = vsub.s32 %v995, %v1259
    %v1261 = vrot.slane %v898, %v1260
    %v1262 = vsel %vm1000, %v1261, %v1257
    %v1263 = vlaneseq
    %v1264 = vshrl.u32 %v1263, 7
    %v1265 = vsub.s32 %v1002, %v1264
    %v1266 = vrot.slane %v899, %v1265
    %v1267 = vsel %vm1007, %v1266, %v1262
    %v1268 = vlaneseq
    %v1269 = vshrl.u32 %v1268, 7
    %v1270 = vsub.s32 %v1009, %v1269
    %v1271 = vrot.slane %v900, %v1270
    %v1272 = vsel %vm1014, %v1271, %v1267
    %v1273 = vlaneseq
    %v1274 = vshrl.u32 %v1273, 7
    %v1275 = vsub.s32 %v1016, %v1274
    %v1276 = vrot.slane %v901, %v1275
    %v1277 = vsel %vm1021, %v1276, %v1272
    %v1278 = vlaneseq
    %v1279 = vshrl.u32 %v1278, 7
    %v1280 = vsub.s32 %v1023, %v1279
    %v1281 = vrot.slane %v902, %v1280
    %v1282 = vsel %vm1028, %v1281, %v1277
    %v1283 = vlaneseq
    %v1284 = vshrl.u32 %v1283, 7
    %v1285 = vsub.s32 %v1030, %v1284
    %v1286 = vrot.slane %v903, %v1285
    %v1287 = vsel %vm1035, %v1286, %v1282
    %v1288 = vlaneseq
    %v1289 = vshrl.u32 %v1288, 7
    %v1290 = vsub.s32 %v1037, %v1289
    %v1291 = vrot.slane %v904, %v1290
    %v1292 = vsel %vm1042, %v1291, %v1287
    %v1293 = vlaneseq
    %v1294 = vshrl.u32 %v1293, 7
    %v1295 = vsub.s32 %v1044, %v1294
    %v1296 = vrot.slane %v905, %v1295
    %v1297 = vsel %vm1049, %v1296, %v1292
    %v1298 = vlaneseq
    %v1299 = vshrl.u32 %v1298, 7
    %v1300 = vsub.s32 %v1051, %v1299
    %v1301 = vrot.slane %v906, %v1300
    %v1302 = vsel %vm1056, %v1301, %v1297
    %v1303 = vlaneseq
    %v1304 = vshrl.u32 %v1303, 7
    %v1305 = vsub.s32 %v1058, %v1304
    %v1306 = vrot.slane %v907, %v1305
    %v1307 = vsel %vm1063, %v1306, %v1302
    %v1308 = vlaneseq
    %v1309 = vshrl.u32 %v1308, 7
    %v1310 = vsub.s32 %v1065, %v1309
    %v1311 = vrot.slane %v908, %v1310
    %v1312 = vsel %vm1070, %v1311, %v1307
    %v1313 = vlaneseq
    %v1314 = vshrl.u32 %v1313, 7
    %v1315 = vsub.s32 %v1072, %v1314
    %v1316 = vrot.slane %v909, %v1315
    %v1317 = vsel %vm1077, %v1316, %v1312
    %v1318 = vlaneseq
    %v1319 = vshrl.u32 %v1318, 7
    %v1320 = vsub.s32 %v1079, %v1319
    %v1321 = vrot.slane %v910, %v1320
    %v1322 = vsel %vm1084, %v1321, %v1317
    %vm1323 = vcmask 1041409
    %v1324 = vsel %vm1323, %v1243, %v1085
    %v1325 = vsel %vm1323, %v1322, %v1164
    %vm1328 = vcmask 1041408
    %v1329 = vsel %vm1328, %v1324, 0.0
    %v1330 = vsel %vm1328, %v1325, 0.0
    %v1331 = vadd.f32 %v1329, %v1330
    %1332 = vadd.xlane.f32.xlu0 %v1331
    %v1333 = vpop.xlane.xlu0 %1332
    %v1334 = vmax.f32 %v1333, 1e-24
    %v1335 = vrsqrt.pop %v1334
    %v1337 = vlaneseq
    %v1338 = vshrl.u32 %v1337, 7
    %v1339 = vsub.s32 0, %v1338
    %v1340 = vrot.slane %v1335, %v1339
    %v1341 = vlaneseq
    %v1342 = vshrl.u32 %v1341, 7
    %v1343 = vsub.s32 1, %v1342
    %v1344 = vrot.slane %v1335, %v1343
    %v1347 = vmul.f32 %v720, %v1340
    %v1348 = vmul.f32 %v722, %v1340
    %v1349 = vmul.f32 %v724, %v1340
    %v1350 = vmul.f32 %v726, %v1340
    %v1351 = vmul.f32 %v728, %v1340
    %v1352 = vmul.f32 %v730, %v1340
    %v1353 = vmul.f32 %v732, %v1340
    %v1354 = vmul.f32 %v734, %v1340
    %v1355 = vmul.f32 %v736, %v1340
    %v1356 = vmul.f32 %v738, %v1340
    %v1357 = vmul.f32 %v740, %v1340
    %v1358 = vmul.f32 %v742, %v1340
    %v1359 = vmul.f32 %v744, %v1340
    %v1360 = vmul.f32 %v746, %v1340
    %v1361 = vmul.f32 %v748, %v1340
    %v1362 = vmul.f32 %v750, %v1340
    %v1363 = vmul.f32 %v752, %v1340
    %v1364 = vmul.f32 %v754, %v1340
    %v1365 = vmul.f32 %v756, %v1340
    %v1366 = vmul.f32 %v758, %v1340
    %v1367 = vmul.f32 %v760, %v1340
    %v1368 = vmul.f32 %v762, %v1340
    %v1369 = vmul.f32 %v764, %v1340
    %v1370 = vmul.f32 %v766, %v1340
    %v1371 = vmul.f32 %v768, %v1340
    %v1372 = vmul.f32 %v770, %v1340
    %v1373 = vmul.f32 %v772, %v1340
    %v1374 = vmul.f32 %v774, %v1340
    %v1375 = vmul.f32 %v776, %v1340
    %v1376 = vmul.f32 %v778, %v1340
    %v1377 = vmul.f32 %v780, %v1340
    %v1378 = vmul.f32 %v782, %v1340
    %v1379 = vmul.f32 %v784, %v1344
    %v1380 = vmul.f32 %v786, %v1344
    %v1381 = vmul.f32 %v788, %v1344
    %v1382 = vmul.f32 %v790, %v1344
    %v1383 = vmul.f32 %v792, %v1344
    %v1384 = vmul.f32 %v794, %v1344
    %v1385 = vmul.f32 %v796, %v1344
    %v1386 = vmul.f32 %v798, %v1344
    %v1387 = vmul.f32 %v800, %v1344
    %v1388 = vmul.f32 %v802, %v1344
    %v1389 = vmul.f32 %v804, %v1344
    %v1390 = vmul.f32 %v806, %v1344
    %v1391 = vmul.f32 %v808, %v1344
    %v1392 = vmul.f32 %v810, %v1344
    %v1393 = vmul.f32 %v812, %v1344
    %v1394 = vmul.f32 %v814, %v1344
    %v1395 = vmul.f32 %v816, %v1344
    %v1396 = vmul.f32 %v818, %v1344
    %v1397 = vmul.f32 %v820, %v1344
    %v1398 = vmul.f32 %v822, %v1344
    %v1399 = vmul.f32 %v824, %v1344
    %v1400 = vmul.f32 %v826, %v1344
    %v1401 = vmul.f32 %v828, %v1344
    %v1402 = vmul.f32 %v830, %v1344
    %v1403 = vmul.f32 %v832, %v1344
    %v1404 = vmul.f32 %v834, %v1344
    %v1405 = vmul.f32 %v836, %v1344
    %v1406 = vmul.f32 %v838, %v1344
    %v1407 = vmul.f32 %v840, %v1344
    %v1408 = vmul.f32 %v842, %v1344
    %v1409 = vmul.f32 %v844, %v1344
    %v1410 = vmul.f32 %v846, %v1344
    %v1475 = vcombine.high %v1347, %v1347
    %v1477 = vunpack.c.l.s4 1983009808
    %v1478 = vunpack.c.0.s8 %v1477
    %v1479 = vlaneseq
    %v1480 = vshrl.u32 %v1479, 7
    %v1481 = vsub.s32 %v1478, %v1480
    %v1482 = vrot.slane %v1347, %v1481
    %v1484 = vunpack.c.l.s4 1983009808
    %v1485 = vunpack.c.0.s8 %v1484
    %v1486 = vlaneseq
    %v1487 = vshrl.u32 %v1486, 7
    %v1488 = vsub.s32 %v1485, %v1487
    %v1489 = vrot.slane %v1475, %v1488
    %v1490 = vcombine.high %v1482, %v1482
    %v1491 = vcombine.high %v1489, %v1489
    %v1492 = vcombine.high %v1348, %v1348
    %v1494 = vunpack.c.l.s4 1983009808
    %v1495 = vunpack.c.0.s8 %v1494
    %v1496 = vlaneseq
    %v1497 = vshrl.u32 %v1496, 7
    %v1498 = vsub.s32 %v1495, %v1497
    %v1499 = vrot.slane %v1348, %v1498
    %v1501 = vunpack.c.l.s4 1983009808
    %v1502 = vunpack.c.0.s8 %v1501
    %v1503 = vlaneseq
    %v1504 = vshrl.u32 %v1503, 7
    %v1505 = vsub.s32 %v1502, %v1504
    %v1506 = vrot.slane %v1492, %v1505
    %v1507 = vcombine.high %v1499, %v1499
    %v1508 = vcombine.high %v1506, %v1506
    %v1509 = vcombine.high %v1349, %v1349
    %v1511 = vunpack.c.l.s4 1983009808
    %v1512 = vunpack.c.0.s8 %v1511
    %v1513 = vlaneseq
    %v1514 = vshrl.u32 %v1513, 7
    %v1515 = vsub.s32 %v1512, %v1514
    %v1516 = vrot.slane %v1349, %v1515
    %v1518 = vunpack.c.l.s4 1983009808
    %v1519 = vunpack.c.0.s8 %v1518
    %v1520 = vlaneseq
    %v1521 = vshrl.u32 %v1520, 7
    %v1522 = vsub.s32 %v1519, %v1521
    %v1523 = vrot.slane %v1509, %v1522
    %v1524 = vcombine.high %v1516, %v1516
    %v1525 = vcombine.high %v1523, %v1523
    %v1526 = vcombine.high %v1350, %v1350
    %v1528 = vunpack.c.l.s4 1983009808
    %v1529 = vunpack.c.0.s8 %v1528
    %v1530 = vlaneseq
    %v1531 = vshrl.u32 %v1530, 7
    %v1532 = vsub.s32 %v1529, %v1531
    %v1533 = vrot.slane %v1350, %v1532
    %v1535 = vunpack.c.l.s4 1983009808
    %v1536 = vunpack.c.0.s8 %v1535
    %v1537 = vlaneseq
    %v1538 = vshrl.u32 %v1537, 7
    %v1539 = vsub.s32 %v1536, %v1538
    %v1540 = vrot.slane %v1526, %v1539
    %v1541 = vcombine.high %v1533, %v1533
    %v1542 = vcombine.high %v1540, %v1540
    %v1543 = vcombine.high %v1351, %v1351
    %v1545 = vunpack.c.l.s4 1983009808
    %v1546 = vunpack.c.0.s8 %v1545
    %v1547 = vlaneseq
    %v1548 = vshrl.u32 %v1547, 7
    %v1549 = vsub.s32 %v1546, %v1548
    %v1550 = vrot.slane %v1351, %v1549
    %v1552 = vunpack.c.l.s4 1983009808
    %v1553 = vunpack.c.0.s8 %v1552
    %v1554 = vlaneseq
    %v1555 = vshrl.u32 %v1554, 7
    %v1556 = vsub.s32 %v1553, %v1555
    %v1557 = vrot.slane %v1543, %v1556
    %v1558 = vcombine.high %v1550, %v1550
    %v1559 = vcombine.high %v1557, %v1557
    %v1560 = vcombine.high %v1352, %v1352
    %v1562 = vunpack.c.l.s4 1983009808
    %v1563 = vunpack.c.0.s8 %v1562
    %v1564 = vlaneseq
    %v1565 = vshrl.u32 %v1564, 7
    %v1566 = vsub.s32 %v1563, %v1565
    %v1567 = vrot.slane %v1352, %v1566
    %v1569 = vunpack.c.l.s4 1983009808
    %v1570 = vunpack.c.0.s8 %v1569
    %v1571 = vlaneseq
    %v1572 = vshrl.u32 %v1571, 7
    %v1573 = vsub.s32 %v1570, %v1572
    %v1574 = vrot.slane %v1560, %v1573
    %v1575 = vcombine.high %v1567, %v1567
    %v1576 = vcombine.high %v1574, %v1574
    %v1577 = vcombine.high %v1353, %v1353
    %v1579 = vunpack.c.l.s4 1983009808
    %v1580 = vunpack.c.0.s8 %v1579
    %v1581 = vlaneseq
    %v1582 = vshrl.u32 %v1581, 7
    %v1583 = vsub.s32 %v1580, %v1582
    %v1584 = vrot.slane %v1353, %v1583
    %v1586 = vunpack.c.l.s4 1983009808
    %v1587 = vunpack.c.0.s8 %v1586
    %v1588 = vlaneseq
    %v1589 = vshrl.u32 %v1588, 7
    %v1590 = vsub.s32 %v1587, %v1589
    %v1591 = vrot.slane %v1577, %v1590
    %v1592 = vcombine.high %v1584, %v1584
    %v1593 = vcombine.high %v1591, %v1591
    %v1594 = vcombine.high %v1354, %v1354
    %v1596 = vunpack.c.l.s4 1983009808
    %v1597 = vunpack.c.0.s8 %v1596
    %v1598 = vlaneseq
    %v1599 = vshrl.u32 %v1598, 7
    %v1600 = vsub.s32 %v1597, %v1599
    %v1601 = vrot.slane %v1354, %v1600
    %v1603 = vunpack.c.l.s4 1983009808
    %v1604 = vunpack.c.0.s8 %v1603
    %v1605 = vlaneseq
    %v1606 = vshrl.u32 %v1605, 7
    %v1607 = vsub.s32 %v1604, %v1606
    %v1608 = vrot.slane %v1594, %v1607
    %v1609 = vcombine.high %v1601, %v1601
    %v1610 = vcombine.high %v1608, %v1608
    %v1611 = vcombine.high %v1355, %v1355
    %v1613 = vunpack.c.l.s4 1983009808
    %v1614 = vunpack.c.0.s8 %v1613
    %v1615 = vlaneseq
    %v1616 = vshrl.u32 %v1615, 7
    %v1617 = vsub.s32 %v1614, %v1616
    %v1618 = vrot.slane %v1355, %v1617
    %v1620 = vunpack.c.l.s4 1983009808
    %v1621 = vunpack.c.0.s8 %v1620
    %v1622 = vlaneseq
    %v1623 = vshrl.u32 %v1622, 7
    %v1624 = vsub.s32 %v1621, %v1623
    %v1625 = vrot.slane %v1611, %v1624
    %v1626 = vcombine.high %v1618, %v1618
    %v1627 = vcombine.high %v1625, %v1625
    %v1628 = vcombine.high %v1356, %v1356
    %v1630 = vunpack.c.l.s4 1983009808
    %v1631 = vunpack.c.0.s8 %v1630
    %v1632 = vlaneseq
    %v1633 = vshrl.u32 %v1632, 7
    %v1634 = vsub.s32 %v1631, %v1633
    %v1635 = vrot.slane %v1356, %v1634
    %v1637 = vunpack.c.l.s4 1983009808
    %v1638 = vunpack.c.0.s8 %v1637
    %v1639 = vlaneseq
    %v1640 = vshrl.u32 %v1639, 7
    %v1641 = vsub.s32 %v1638, %v1640
    %v1642 = vrot.slane %v1628, %v1641
    %v1643 = vcombine.high %v1635, %v1635
    %v1644 = vcombine.high %v1642, %v1642
    %v1645 = vcombine.high %v1357, %v1357
    %v1647 = vunpack.c.l.s4 1983009808
    %v1648 = vunpack.c.0.s8 %v1647
    %v1649 = vlaneseq
    %v1650 = vshrl.u32 %v1649, 7
    %v1651 = vsub.s32 %v1648, %v1650
    %v1652 = vrot.slane %v1357, %v1651
    %v1654 = vunpack.c.l.s4 1983009808
    %v1655 = vunpack.c.0.s8 %v1654
    %v1656 = vlaneseq
    %v1657 = vshrl.u32 %v1656, 7
    %v1658 = vsub.s32 %v1655, %v1657
    %v1659 = vrot.slane %v1645, %v1658
    %v1660 = vcombine.high %v1652, %v1652
    %v1661 = vcombine.high %v1659, %v1659
    %v1662 = vcombine.high %v1358, %v1358
    %v1664 = vunpack.c.l.s4 1983009808
    %v1665 = vunpack.c.0.s8 %v1664
    %v1666 = vlaneseq
    %v1667 = vshrl.u32 %v1666, 7
    %v1668 = vsub.s32 %v1665, %v1667
    %v1669 = vrot.slane %v1358, %v1668
    %v1671 = vunpack.c.l.s4 1983009808
    %v1672 = vunpack.c.0.s8 %v1671
    %v1673 = vlaneseq
    %v1674 = vshrl.u32 %v1673, 7
    %v1675 = vsub.s32 %v1672, %v1674
    %v1676 = vrot.slane %v1662, %v1675
    %v1677 = vcombine.high %v1669, %v1669
    %v1678 = vcombine.high %v1676, %v1676
    %v1679 = vcombine.high %v1359, %v1359
    %v1681 = vunpack.c.l.s4 1983009808
    %v1682 = vunpack.c.0.s8 %v1681
    %v1683 = vlaneseq
    %v1684 = vshrl.u32 %v1683, 7
    %v1685 = vsub.s32 %v1682, %v1684
    %v1686 = vrot.slane %v1359, %v1685
    %v1688 = vunpack.c.l.s4 1983009808
    %v1689 = vunpack.c.0.s8 %v1688
    %v1690 = vlaneseq
    %v1691 = vshrl.u32 %v1690, 7
    %v1692 = vsub.s32 %v1689, %v1691
    %v1693 = vrot.slane %v1679, %v1692
    %v1694 = vcombine.high %v1686, %v1686
    %v1695 = vcombine.high %v1693, %v1693
    %v1696 = vcombine.high %v1360, %v1360
    %v1698 = vunpack.c.l.s4 1983009808
    %v1699 = vunpack.c.0.s8 %v1698
    %v1700 = vlaneseq
    %v1701 = vshrl.u32 %v1700, 7
    %v1702 = vsub.s32 %v1699, %v1701
    %v1703 = vrot.slane %v1360, %v1702
    %v1705 = vunpack.c.l.s4 1983009808
    %v1706 = vunpack.c.0.s8 %v1705
    %v1707 = vlaneseq
    %v1708 = vshrl.u32 %v1707, 7
    %v1709 = vsub.s32 %v1706, %v1708
    %v1710 = vrot.slane %v1696, %v1709
    %v1711 = vcombine.high %v1703, %v1703
    %v1712 = vcombine.high %v1710, %v1710
    %v1713 = vcombine.high %v1361, %v1361
    %v1715 = vunpack.c.l.s4 1983009808
    %v1716 = vunpack.c.0.s8 %v1715
    %v1717 = vlaneseq
    %v1718 = vshrl.u32 %v1717, 7
    %v1719 = vsub.s32 %v1716, %v1718
    %v1720 = vrot.slane %v1361, %v1719
    %v1722 = vunpack.c.l.s4 1983009808
    %v1723 = vunpack.c.0.s8 %v1722
    %v1724 = vlaneseq
    %v1725 = vshrl.u32 %v1724, 7
    %v1726 = vsub.s32 %v1723, %v1725
    %v1727 = vrot.slane %v1713, %v1726
    %v1728 = vcombine.high %v1720, %v1720
    %v1729 = vcombine.high %v1727, %v1727
    %v1730 = vcombine.high %v1362, %v1362
    %v1732 = vunpack.c.l.s4 1983009808
    %v1733 = vunpack.c.0.s8 %v1732
    %v1734 = vlaneseq
    %v1735 = vshrl.u32 %v1734, 7
    %v1736 = vsub.s32 %v1733, %v1735
    %v1737 = vrot.slane %v1362, %v1736
    %v1739 = vunpack.c.l.s4 1983009808
    %v1740 = vunpack.c.0.s8 %v1739
    %v1741 = vlaneseq
    %v1742 = vshrl.u32 %v1741, 7
    %v1743 = vsub.s32 %v1740, %v1742
    %v1744 = vrot.slane %v1730, %v1743
    %v1745 = vcombine.high %v1737, %v1737
    %v1746 = vcombine.high %v1744, %v1744
    %v1747 = vcombine.high %v1363, %v1363
    %v1749 = vunpack.c.l.s4 1983009808
    %v1750 = vunpack.c.0.s8 %v1749
    %v1751 = vlaneseq
    %v1752 = vshrl.u32 %v1751, 7
    %v1753 = vsub.s32 %v1750, %v1752
    %v1754 = vrot.slane %v1363, %v1753
    %v1756 = vunpack.c.l.s4 1983009808
    %v1757 = vunpack.c.0.s8 %v1756
    %v1758 = vlaneseq
    %v1759 = vshrl.u32 %v1758, 7
    %v1760 = vsub.s32 %v1757, %v1759
    %v1761 = vrot.slane %v1747, %v1760
    %v1762 = vcombine.high %v1754, %v1754
    %v1763 = vcombine.high %v1761, %v1761
    %v1764 = vcombine.high %v1364, %v1364
    %v1766 = vunpack.c.l.s4 1983009808
    %v1767 = vunpack.c.0.s8 %v1766
    %v1768 = vlaneseq
    %v1769 = vshrl.u32 %v1768, 7
    %v1770 = vsub.s32 %v1767, %v1769
    %v1771 = vrot.slane %v1364, %v1770
    %v1773 = vunpack.c.l.s4 1983009808
    %v1774 = vunpack.c.0.s8 %v1773
    %v1775 = vlaneseq
    %v1776 = vshrl.u32 %v1775, 7
    %v1777 = vsub.s32 %v1774, %v1776
    %v1778 = vrot.slane %v1764, %v1777
    %v1779 = vcombine.high %v1771, %v1771
    %v1780 = vcombine.high %v1778, %v1778
    %v1781 = vcombine.high %v1365, %v1365
    %v1783 = vunpack.c.l.s4 1983009808
    %v1784 = vunpack.c.0.s8 %v1783
    %v1785 = vlaneseq
    %v1786 = vshrl.u32 %v1785, 7
    %v1787 = vsub.s32 %v1784, %v1786
    %v1788 = vrot.slane %v1365, %v1787
    %v1790 = vunpack.c.l.s4 1983009808
    %v1791 = vunpack.c.0.s8 %v1790
    %v1792 = vlaneseq
    %v1793 = vshrl.u32 %v1792, 7
    %v1794 = vsub.s32 %v1791, %v1793
    %v1795 = vrot.slane %v1781, %v1794
    %v1796 = vcombine.high %v1788, %v1788
    %v1797 = vcombine.high %v1795, %v1795
    %v1798 = vcombine.high %v1366, %v1366
    %v1800 = vunpack.c.l.s4 1983009808
    %v1801 = vunpack.c.0.s8 %v1800
    %v1802 = vlaneseq
    %v1803 = vshrl.u32 %v1802, 7
    %v1804 = vsub.s32 %v1801, %v1803
    %v1805 = vrot.slane %v1366, %v1804
    %v1807 = vunpack.c.l.s4 1983009808
    %v1808 = vunpack.c.0.s8 %v1807
    %v1809 = vlaneseq
    %v1810 = vshrl.u32 %v1809, 7
    %v1811 = vsub.s32 %v1808, %v1810
    %v1812 = vrot.slane %v1798, %v1811
    %v1813 = vcombine.high %v1805, %v1805
    %v1814 = vcombine.high %v1812, %v1812
    %v1815 = vcombine.high %v1367, %v1367
    %v1817 = vunpack.c.l.s4 1983009808
    %v1818 = vunpack.c.0.s8 %v1817
    %v1819 = vlaneseq
    %v1820 = vshrl.u32 %v1819, 7
    %v1821 = vsub.s32 %v1818, %v1820
    %v1822 = vrot.slane %v1367, %v1821
    %v1824 = vunpack.c.l.s4 1983009808
    %v1825 = vunpack.c.0.s8 %v1824
    %v1826 = vlaneseq
    %v1827 = vshrl.u32 %v1826, 7
    %v1828 = vsub.s32 %v1825, %v1827
    %v1829 = vrot.slane %v1815, %v1828
    %v1830 = vcombine.high %v1822, %v1822
    %v1831 = vcombine.high %v1829, %v1829
    %v1832 = vcombine.high %v1368, %v1368
    %v1834 = vunpack.c.l.s4 1983009808
    %v1835 = vunpack.c.0.s8 %v1834
    %v1836 = vlaneseq
    %v1837 = vshrl.u32 %v1836, 7
    %v1838 = vsub.s32 %v1835, %v1837
    %v1839 = vrot.slane %v1368, %v1838
    %v1841 = vunpack.c.l.s4 1983009808
    %v1842 = vunpack.c.0.s8 %v1841
    %v1843 = vlaneseq
    %v1844 = vshrl.u32 %v1843, 7
    %v1845 = vsub.s32 %v1842, %v1844
    %v1846 = vrot.slane %v1832, %v1845
    %v1847 = vcombine.high %v1839, %v1839
    %v1848 = vcombine.high %v1846, %v1846
    %v1849 = vcombine.high %v1369, %v1369
    %v1851 = vunpack.c.l.s4 1983009808
    %v1852 = vunpack.c.0.s8 %v1851
    %v1853 = vlaneseq
    %v1854 = vshrl.u32 %v1853, 7
    %v1855 = vsub.s32 %v1852, %v1854
    %v1856 = vrot.slane %v1369, %v1855
    %v1858 = vunpack.c.l.s4 1983009808
    %v1859 = vunpack.c.0.s8 %v1858
    %v1860 = vlaneseq
    %v1861 = vshrl.u32 %v1860, 7
    %v1862 = vsub.s32 %v1859, %v1861
    %v1863 = vrot.slane %v1849, %v1862
    %v1864 = vcombine.high %v1856, %v1856
    %v1865 = vcombine.high %v1863, %v1863
    %v1866 = vcombine.high %v1370, %v1370
    %v1868 = vunpack.c.l.s4 1983009808
    %v1869 = vunpack.c.0.s8 %v1868
    %v1870 = vlaneseq
    %v1871 = vshrl.u32 %v1870, 7
    %v1872 = vsub.s32 %v1869, %v1871
    %v1873 = vrot.slane %v1370, %v1872
    %v1875 = vunpack.c.l.s4 1983009808
    %v1876 = vunpack.c.0.s8 %v1875
    %v1877 = vlaneseq
    %v1878 = vshrl.u32 %v1877, 7
    %v1879 = vsub.s32 %v1876, %v1878
    %v1880 = vrot.slane %v1866, %v1879
    %v1881 = vcombine.high %v1873, %v1873
    %v1882 = vcombine.high %v1880, %v1880
    %v1883 = vcombine.high %v1371, %v1371
    %v1885 = vunpack.c.l.s4 1983009808
    %v1886 = vunpack.c.0.s8 %v1885
    %v1887 = vlaneseq
    %v1888 = vshrl.u32 %v1887, 7
    %v1889 = vsub.s32 %v1886, %v1888
    %v1890 = vrot.slane %v1371, %v1889
    %v1892 = vunpack.c.l.s4 1983009808
    %v1893 = vunpack.c.0.s8 %v1892
    %v1894 = vlaneseq
    %v1895 = vshrl.u32 %v1894, 7
    %v1896 = vsub.s32 %v1893, %v1895
    %v1897 = vrot.slane %v1883, %v1896
    %v1898 = vcombine.high %v1890, %v1890
    %v1899 = vcombine.high %v1897, %v1897
    %v1900 = vcombine.high %v1372, %v1372
    %v1902 = vunpack.c.l.s4 1983009808
    %v1903 = vunpack.c.0.s8 %v1902
    %v1904 = vlaneseq
    %v1905 = vshrl.u32 %v1904, 7
    %v1906 = vsub.s32 %v1903, %v1905
    %v1907 = vrot.slane %v1372, %v1906
    %v1909 = vunpack.c.l.s4 1983009808
    %v1910 = vunpack.c.0.s8 %v1909
    %v1911 = vlaneseq
    %v1912 = vshrl.u32 %v1911, 7
    %v1913 = vsub.s32 %v1910, %v1912
    %v1914 = vrot.slane %v1900, %v1913
    %v1915 = vcombine.high %v1907, %v1907
    %v1916 = vcombine.high %v1914, %v1914
    %v1917 = vcombine.high %v1373, %v1373
    %v1919 = vunpack.c.l.s4 1983009808
    %v1920 = vunpack.c.0.s8 %v1919
    %v1921 = vlaneseq
    %v1922 = vshrl.u32 %v1921, 7
    %v1923 = vsub.s32 %v1920, %v1922
    %v1924 = vrot.slane %v1373, %v1923
    %v1926 = vunpack.c.l.s4 1983009808
    %v1927 = vunpack.c.0.s8 %v1926
    %v1928 = vlaneseq
    %v1929 = vshrl.u32 %v1928, 7
    %v1930 = vsub.s32 %v1927, %v1929
    %v1931 = vrot.slane %v1917, %v1930
    %v1932 = vcombine.high %v1924, %v1924
    %v1933 = vcombine.high %v1931, %v1931
    %v1934 = vcombine.high %v1374, %v1374
    %v1936 = vunpack.c.l.s4 1983009808
    %v1937 = vunpack.c.0.s8 %v1936
    %v1938 = vlaneseq
    %v1939 = vshrl.u32 %v1938, 7
    %v1940 = vsub.s32 %v1937, %v1939
    %v1941 = vrot.slane %v1374, %v1940
    %v1943 = vunpack.c.l.s4 1983009808
    %v1944 = vunpack.c.0.s8 %v1943
    %v1945 = vlaneseq
    %v1946 = vshrl.u32 %v1945, 7
    %v1947 = vsub.s32 %v1944, %v1946
    %v1948 = vrot.slane %v1934, %v1947
    %v1949 = vcombine.high %v1941, %v1941
    %v1950 = vcombine.high %v1948, %v1948
    %v1951 = vcombine.high %v1375, %v1375
    %v1953 = vunpack.c.l.s4 1983009808
    %v1954 = vunpack.c.0.s8 %v1953
    %v1955 = vlaneseq
    %v1956 = vshrl.u32 %v1955, 7
    %v1957 = vsub.s32 %v1954, %v1956
    %v1958 = vrot.slane %v1375, %v1957
    %v1960 = vunpack.c.l.s4 1983009808
    %v1961 = vunpack.c.0.s8 %v1960
    %v1962 = vlaneseq
    %v1963 = vshrl.u32 %v1962, 7
    %v1964 = vsub.s32 %v1961, %v1963
    %v1965 = vrot.slane %v1951, %v1964
    %v1966 = vcombine.high %v1958, %v1958
    %v1967 = vcombine.high %v1965, %v1965
    %v1968 = vcombine.high %v1376, %v1376
    %v1970 = vunpack.c.l.s4 1983009808
    %v1971 = vunpack.c.0.s8 %v1970
    %v1972 = vlaneseq
    %v1973 = vshrl.u32 %v1972, 7
    %v1974 = vsub.s32 %v1971, %v1973
    %v1975 = vrot.slane %v1376, %v1974
    %v1977 = vunpack.c.l.s4 1983009808
    %v1978 = vunpack.c.0.s8 %v1977
    %v1979 = vlaneseq
    %v1980 = vshrl.u32 %v1979, 7
    %v1981 = vsub.s32 %v1978, %v1980
    %v1982 = vrot.slane %v1968, %v1981
    %v1983 = vcombine.high %v1975, %v1975
    %v1984 = vcombine.high %v1982, %v1982
    %v1985 = vcombine.high %v1377, %v1377
    %v1987 = vunpack.c.l.s4 1983009808
    %v1988 = vunpack.c.0.s8 %v1987
    %v1989 = vlaneseq
    %v1990 = vshrl.u32 %v1989, 7
    %v1991 = vsub.s32 %v1988, %v1990
    %v1992 = vrot.slane %v1377, %v1991
    %v1994 = vunpack.c.l.s4 1983009808
    %v1995 = vunpack.c.0.s8 %v1994
    %v1996 = vlaneseq
    %v1997 = vshrl.u32 %v1996, 7
    %v1998 = vsub.s32 %v1995, %v1997
    %v1999 = vrot.slane %v1985, %v1998
    %v2000 = vcombine.high %v1992, %v1992
    %v2001 = vcombine.high %v1999, %v1999
    %v2002 = vcombine.high %v1378, %v1378
    %v2004 = vunpack.c.l.s4 1983009808
    %v2005 = vunpack.c.0.s8 %v2004
    %v2006 = vlaneseq
    %v2007 = vshrl.u32 %v2006, 7
    %v2008 = vsub.s32 %v2005, %v2007
    %v2009 = vrot.slane %v1378, %v2008
    %v2011 = vunpack.c.l.s4 1983009808
    %v2012 = vunpack.c.0.s8 %v2011
    %v2013 = vlaneseq
    %v2014 = vshrl.u32 %v2013, 7
    %v2015 = vsub.s32 %v2012, %v2014
    %v2016 = vrot.slane %v2002, %v2015
    %v2017 = vcombine.high %v2009, %v2009
    %v2018 = vcombine.high %v2016, %v2016
    %v2019 = vcombine.high %v1379, %v1379
    %v2021 = vunpack.c.l.s4 1983009808
    %v2022 = vunpack.c.0.s8 %v2021
    %v2023 = vlaneseq
    %v2024 = vshrl.u32 %v2023, 7
    %v2025 = vsub.s32 %v2022, %v2024
    %v2026 = vrot.slane %v1379, %v2025
    %v2028 = vunpack.c.l.s4 1983009808
    %v2029 = vunpack.c.0.s8 %v2028
    %v2030 = vlaneseq
    %v2031 = vshrl.u32 %v2030, 7
    %v2032 = vsub.s32 %v2029, %v2031
    %v2033 = vrot.slane %v2019, %v2032
    %v2034 = vcombine.high %v2026, %v2026
    %v2035 = vcombine.high %v2033, %v2033
    %v2036 = vcombine.high %v1380, %v1380
    %v2038 = vunpack.c.l.s4 1983009808
    %v2039 = vunpack.c.0.s8 %v2038
    %v2040 = vlaneseq
    %v2041 = vshrl.u32 %v2040, 7
    %v2042 = vsub.s32 %v2039, %v2041
    %v2043 = vrot.slane %v1380, %v2042
    %v2045 = vunpack.c.l.s4 1983009808
    %v2046 = vunpack.c.0.s8 %v2045
    %v2047 = vlaneseq
    %v2048 = vshrl.u32 %v2047, 7
    %v2049 = vsub.s32 %v2046, %v2048
    %v2050 = vrot.slane %v2036, %v2049
    %v2051 = vcombine.high %v2043, %v2043
    %v2052 = vcombine.high %v2050, %v2050
    %v2053 = vcombine.high %v1381, %v1381
    %v2055 = vunpack.c.l.s4 1983009808
    %v2056 = vunpack.c.0.s8 %v2055
    %v2057 = vlaneseq
    %v2058 = vshrl.u32 %v2057, 7
    %v2059 = vsub.s32 %v2056, %v2058
    %v2060 = vrot.slane %v1381, %v2059
    %v2062 = vunpack.c.l.s4 1983009808
    %v2063 = vunpack.c.0.s8 %v2062
    %v2064 = vlaneseq
    %v2065 = vshrl.u32 %v2064, 7
    %v2066 = vsub.s32 %v2063, %v2065
    %v2067 = vrot.slane %v2053, %v2066
    %v2068 = vcombine.high %v2060, %v2060
    %v2069 = vcombine.high %v2067, %v2067
    %v2070 = vcombine.high %v1382, %v1382
    %v2072 = vunpack.c.l.s4 1983009808
    %v2073 = vunpack.c.0.s8 %v2072
    %v2074 = vlaneseq
    %v2075 = vshrl.u32 %v2074, 7
    %v2076 = vsub.s32 %v2073, %v2075
    %v2077 = vrot.slane %v1382, %v2076
    %v2079 = vunpack.c.l.s4 1983009808
    %v2080 = vunpack.c.0.s8 %v2079
    %v2081 = vlaneseq
    %v2082 = vshrl.u32 %v2081, 7
    %v2083 = vsub.s32 %v2080, %v2082
    %v2084 = vrot.slane %v2070, %v2083
    %v2085 = vcombine.high %v2077, %v2077
    %v2086 = vcombine.high %v2084, %v2084
    %v2087 = vcombine.high %v1383, %v1383
    %v2089 = vunpack.c.l.s4 1983009808
    %v2090 = vunpack.c.0.s8 %v2089
    %v2091 = vlaneseq
    %v2092 = vshrl.u32 %v2091, 7
    %v2093 = vsub.s32 %v2090, %v2092
    %v2094 = vrot.slane %v1383, %v2093
    %v2096 = vunpack.c.l.s4 1983009808
    %v2097 = vunpack.c.0.s8 %v2096
    %v2098 = vlaneseq
    %v2099 = vshrl.u32 %v2098, 7
    %v2100 = vsub.s32 %v2097, %v2099
    %v2101 = vrot.slane %v2087, %v2100
    %v2102 = vcombine.high %v2094, %v2094
    %v2103 = vcombine.high %v2101, %v2101
    %v2104 = vcombine.high %v1384, %v1384
    %v2106 = vunpack.c.l.s4 1983009808
    %v2107 = vunpack.c.0.s8 %v2106
    %v2108 = vlaneseq
    %v2109 = vshrl.u32 %v2108, 7
    %v2110 = vsub.s32 %v2107, %v2109
    %v2111 = vrot.slane %v1384, %v2110
    %v2113 = vunpack.c.l.s4 1983009808
    %v2114 = vunpack.c.0.s8 %v2113
    %v2115 = vlaneseq
    %v2116 = vshrl.u32 %v2115, 7
    %v2117 = vsub.s32 %v2114, %v2116
    %v2118 = vrot.slane %v2104, %v2117
    %v2119 = vcombine.high %v2111, %v2111
    %v2120 = vcombine.high %v2118, %v2118
    %v2121 = vcombine.high %v1385, %v1385
    %v2123 = vunpack.c.l.s4 1983009808
    %v2124 = vunpack.c.0.s8 %v2123
    %v2125 = vlaneseq
    %v2126 = vshrl.u32 %v2125, 7
    %v2127 = vsub.s32 %v2124, %v2126
    %v2128 = vrot.slane %v1385, %v2127
    %v2130 = vunpack.c.l.s4 1983009808
    %v2131 = vunpack.c.0.s8 %v2130
    %v2132 = vlaneseq
    %v2133 = vshrl.u32 %v2132, 7
    %v2134 = vsub.s32 %v2131, %v2133
    %v2135 = vrot.slane %v2121, %v2134
    %v2136 = vcombine.high %v2128, %v2128
    %v2137 = vcombine.high %v2135, %v2135
    %v2138 = vcombine.high %v1386, %v1386
    %v2140 = vunpack.c.l.s4 1983009808
    %v2141 = vunpack.c.0.s8 %v2140
    %v2142 = vlaneseq
    %v2143 = vshrl.u32 %v2142, 7
    %v2144 = vsub.s32 %v2141, %v2143
    %v2145 = vrot.slane %v1386, %v2144
    %v2147 = vunpack.c.l.s4 1983009808
    %v2148 = vunpack.c.0.s8 %v2147
    %v2149 = vlaneseq
    %v2150 = vshrl.u32 %v2149, 7
    %v2151 = vsub.s32 %v2148, %v2150
    %v2152 = vrot.slane %v2138, %v2151
    %v2153 = vcombine.high %v2145, %v2145
    %v2154 = vcombine.high %v2152, %v2152
    %v2155 = vcombine.high %v1387, %v1387
    %v2157 = vunpack.c.l.s4 1983009808
    %v2158 = vunpack.c.0.s8 %v2157
    %v2159 = vlaneseq
    %v2160 = vshrl.u32 %v2159, 7
    %v2161 = vsub.s32 %v2158, %v2160
    %v2162 = vrot.slane %v1387, %v2161
    %v2164 = vunpack.c.l.s4 1983009808
    %v2165 = vunpack.c.0.s8 %v2164
    %v2166 = vlaneseq
    %v2167 = vshrl.u32 %v2166, 7
    %v2168 = vsub.s32 %v2165, %v2167
    %v2169 = vrot.slane %v2155, %v2168
    %v2170 = vcombine.high %v2162, %v2162
    %v2171 = vcombine.high %v2169, %v2169
    %v2172 = vcombine.high %v1388, %v1388
    %v2174 = vunpack.c.l.s4 1983009808
    %v2175 = vunpack.c.0.s8 %v2174
    %v2176 = vlaneseq
    %v2177 = vshrl.u32 %v2176, 7
    %v2178 = vsub.s32 %v2175, %v2177
    %v2179 = vrot.slane %v1388, %v2178
    %v2181 = vunpack.c.l.s4 1983009808
    %v2182 = vunpack.c.0.s8 %v2181
    %v2183 = vlaneseq
    %v2184 = vshrl.u32 %v2183, 7
    %v2185 = vsub.s32 %v2182, %v2184
    %v2186 = vrot.slane %v2172, %v2185
    %v2187 = vcombine.high %v2179, %v2179
    %v2188 = vcombine.high %v2186, %v2186
    %v2189 = vcombine.high %v1389, %v1389
    %v2191 = vunpack.c.l.s4 1983009808
    %v2192 = vunpack.c.0.s8 %v2191
    %v2193 = vlaneseq
    %v2194 = vshrl.u32 %v2193, 7
    %v2195 = vsub.s32 %v2192, %v2194
    %v2196 = vrot.slane %v1389, %v2195
    %v2198 = vunpack.c.l.s4 1983009808
    %v2199 = vunpack.c.0.s8 %v2198
    %v2200 = vlaneseq
    %v2201 = vshrl.u32 %v2200, 7
    %v2202 = vsub.s32 %v2199, %v2201
    %v2203 = vrot.slane %v2189, %v2202
    %v2204 = vcombine.high %v2196, %v2196
    %v2205 = vcombine.high %v2203, %v2203
    %v2206 = vcombine.high %v1390, %v1390
    %v2208 = vunpack.c.l.s4 1983009808
    %v2209 = vunpack.c.0.s8 %v2208
    %v2210 = vlaneseq
    %v2211 = vshrl.u32 %v2210, 7
    %v2212 = vsub.s32 %v2209, %v2211
    %v2213 = vrot.slane %v1390, %v2212
    %v2215 = vunpack.c.l.s4 1983009808
    %v2216 = vunpack.c.0.s8 %v2215
    %v2217 = vlaneseq
    %v2218 = vshrl.u32 %v2217, 7
    %v2219 = vsub.s32 %v2216, %v2218
    %v2220 = vrot.slane %v2206, %v2219
    %v2221 = vcombine.high %v2213, %v2213
    %v2222 = vcombine.high %v2220, %v2220
    %v2223 = vcombine.high %v1391, %v1391
    %v2225 = vunpack.c.l.s4 1983009808
    %v2226 = vunpack.c.0.s8 %v2225
    %v2227 = vlaneseq
    %v2228 = vshrl.u32 %v2227, 7
    %v2229 = vsub.s32 %v2226, %v2228
    %v2230 = vrot.slane %v1391, %v2229
    %v2232 = vunpack.c.l.s4 1983009808
    %v2233 = vunpack.c.0.s8 %v2232
    %v2234 = vlaneseq
    %v2235 = vshrl.u32 %v2234, 7
    %v2236 = vsub.s32 %v2233, %v2235
    %v2237 = vrot.slane %v2223, %v2236
    %v2238 = vcombine.high %v2230, %v2230
    %v2239 = vcombine.high %v2237, %v2237
    %v2240 = vcombine.high %v1392, %v1392
    %v2242 = vunpack.c.l.s4 1983009808
    %v2243 = vunpack.c.0.s8 %v2242
    %v2244 = vlaneseq
    %v2245 = vshrl.u32 %v2244, 7
    %v2246 = vsub.s32 %v2243, %v2245
    %v2247 = vrot.slane %v1392, %v2246
    %v2249 = vunpack.c.l.s4 1983009808
    %v2250 = vunpack.c.0.s8 %v2249
    %v2251 = vlaneseq
    %v2252 = vshrl.u32 %v2251, 7
    %v2253 = vsub.s32 %v2250, %v2252
    %v2254 = vrot.slane %v2240, %v2253
    %v2255 = vcombine.high %v2247, %v2247
    %v2256 = vcombine.high %v2254, %v2254
    %v2257 = vcombine.high %v1393, %v1393
    %v2259 = vunpack.c.l.s4 1983009808
    %v2260 = vunpack.c.0.s8 %v2259
    %v2261 = vlaneseq
    %v2262 = vshrl.u32 %v2261, 7
    %v2263 = vsub.s32 %v2260, %v2262
    %v2264 = vrot.slane %v1393, %v2263
    %v2266 = vunpack.c.l.s4 1983009808
    %v2267 = vunpack.c.0.s8 %v2266
    %v2268 = vlaneseq
    %v2269 = vshrl.u32 %v2268, 7
    %v2270 = vsub.s32 %v2267, %v2269
    %v2271 = vrot.slane %v2257, %v2270
    %v2272 = vcombine.high %v2264, %v2264
    %v2273 = vcombine.high %v2271, %v2271
    %v2274 = vcombine.high %v1394, %v1394
    %v2276 = vunpack.c.l.s4 1983009808
    %v2277 = vunpack.c.0.s8 %v2276
    %v2278 = vlaneseq
    %v2279 = vshrl.u32 %v2278, 7
    %v2280 = vsub.s32 %v2277, %v2279
    %v2281 = vrot.slane %v1394, %v2280
    %v2283 = vunpack.c.l.s4 1983009808
    %v2284 = vunpack.c.0.s8 %v2283
    %v2285 = vlaneseq
    %v2286 = vshrl.u32 %v2285, 7
    %v2287 = vsub.s32 %v2284, %v2286
    %v2288 = vrot.slane %v2274, %v2287
    %v2289 = vcombine.high %v2281, %v2281
    %v2290 = vcombine.high %v2288, %v2288
    %v2291 = vcombine.high %v1395, %v1395
    %v2293 = vunpack.c.l.s4 1983009808
    %v2294 = vunpack.c.0.s8 %v2293
    %v2295 = vlaneseq
    %v2296 = vshrl.u32 %v2295, 7
    %v2297 = vsub.s32 %v2294, %v2296
    %v2298 = vrot.slane %v1395, %v2297
    %v2300 = vunpack.c.l.s4 1983009808
    %v2301 = vunpack.c.0.s8 %v2300
    %v2302 = vlaneseq
    %v2303 = vshrl.u32 %v2302, 7
    %v2304 = vsub.s32 %v2301, %v2303
    %v2305 = vrot.slane %v2291, %v2304
    %v2306 = vcombine.high %v2298, %v2298
    %v2307 = vcombine.high %v2305, %v2305
    %v2308 = vcombine.high %v1396, %v1396
    %v2310 = vunpack.c.l.s4 1983009808
    %v2311 = vunpack.c.0.s8 %v2310
    %v2312 = vlaneseq
    %v2313 = vshrl.u32 %v2312, 7
    %v2314 = vsub.s32 %v2311, %v2313
    %v2315 = vrot.slane %v1396, %v2314
    %v2317 = vunpack.c.l.s4 1983009808
    %v2318 = vunpack.c.0.s8 %v2317
    %v2319 = vlaneseq
    %v2320 = vshrl.u32 %v2319, 7
    %v2321 = vsub.s32 %v2318, %v2320
    %v2322 = vrot.slane %v2308, %v2321
    %v2323 = vcombine.high %v2315, %v2315
    %v2324 = vcombine.high %v2322, %v2322
    %v2325 = vcombine.high %v1397, %v1397
    %v2327 = vunpack.c.l.s4 1983009808
    %v2328 = vunpack.c.0.s8 %v2327
    %v2329 = vlaneseq
    %v2330 = vshrl.u32 %v2329, 7
    %v2331 = vsub.s32 %v2328, %v2330
    %v2332 = vrot.slane %v1397, %v2331
    %v2334 = vunpack.c.l.s4 1983009808
    %v2335 = vunpack.c.0.s8 %v2334
    %v2336 = vlaneseq
    %v2337 = vshrl.u32 %v2336, 7
    %v2338 = vsub.s32 %v2335, %v2337
    %v2339 = vrot.slane %v2325, %v2338
    %v2340 = vcombine.high %v2332, %v2332
    %v2341 = vcombine.high %v2339, %v2339
    %v2342 = vcombine.high %v1398, %v1398
    %v2344 = vunpack.c.l.s4 1983009808
    %v2345 = vunpack.c.0.s8 %v2344
    %v2346 = vlaneseq
    %v2347 = vshrl.u32 %v2346, 7
    %v2348 = vsub.s32 %v2345, %v2347
    %v2349 = vrot.slane %v1398, %v2348
    %v2351 = vunpack.c.l.s4 1983009808
    %v2352 = vunpack.c.0.s8 %v2351
    %v2353 = vlaneseq
    %v2354 = vshrl.u32 %v2353, 7
    %v2355 = vsub.s32 %v2352, %v2354
    %v2356 = vrot.slane %v2342, %v2355
    %v2357 = vcombine.high %v2349, %v2349
    %v2358 = vcombine.high %v2356, %v2356
    %v2359 = vcombine.high %v1399, %v1399
    %v2361 = vunpack.c.l.s4 1983009808
    %v2362 = vunpack.c.0.s8 %v2361
    %v2363 = vlaneseq
    %v2364 = vshrl.u32 %v2363, 7
    %v2365 = vsub.s32 %v2362, %v2364
    %v2366 = vrot.slane %v1399, %v2365
    %v2368 = vunpack.c.l.s4 1983009808
    %v2369 = vunpack.c.0.s8 %v2368
    %v2370 = vlaneseq
    %v2371 = vshrl.u32 %v2370, 7
    %v2372 = vsub.s32 %v2369, %v2371
    %v2373 = vrot.slane %v2359, %v2372
    %v2374 = vcombine.high %v2366, %v2366
    %v2375 = vcombine.high %v2373, %v2373
    %v2376 = vcombine.high %v1400, %v1400
    %v2378 = vunpack.c.l.s4 1983009808
    %v2379 = vunpack.c.0.s8 %v2378
    %v2380 = vlaneseq
    %v2381 = vshrl.u32 %v2380, 7
    %v2382 = vsub.s32 %v2379, %v2381
    %v2383 = vrot.slane %v1400, %v2382
    %v2385 = vunpack.c.l.s4 1983009808
    %v2386 = vunpack.c.0.s8 %v2385
    %v2387 = vlaneseq
    %v2388 = vshrl.u32 %v2387, 7
    %v2389 = vsub.s32 %v2386, %v2388
    %v2390 = vrot.slane %v2376, %v2389
    %v2391 = vcombine.high %v2383, %v2383
    %v2392 = vcombine.high %v2390, %v2390
    %v2393 = vcombine.high %v1401, %v1401
    %v2395 = vunpack.c.l.s4 1983009808
    %v2396 = vunpack.c.0.s8 %v2395
    %v2397 = vlaneseq
    %v2398 = vshrl.u32 %v2397, 7
    %v2399 = vsub.s32 %v2396, %v2398
    %v2400 = vrot.slane %v1401, %v2399
    %v2402 = vunpack.c.l.s4 1983009808
    %v2403 = vunpack.c.0.s8 %v2402
    %v2404 = vlaneseq
    %v2405 = vshrl.u32 %v2404, 7
    %v2406 = vsub.s32 %v2403, %v2405
    %v2407 = vrot.slane %v2393, %v2406
    %v2408 = vcombine.high %v2400, %v2400
    %v2409 = vcombine.high %v2407, %v2407
    %v2410 = vcombine.high %v1402, %v1402
    %v2412 = vunpack.c.l.s4 1983009808
    %v2413 = vunpack.c.0.s8 %v2412
    %v2414 = vlaneseq
    %v2415 = vshrl.u32 %v2414, 7
    %v2416 = vsub.s32 %v2413, %v2415
    %v2417 = vrot.slane %v1402, %v2416
    %v2419 = vunpack.c.l.s4 1983009808
    %v2420 = vunpack.c.0.s8 %v2419
    %v2421 = vlaneseq
    %v2422 = vshrl.u32 %v2421, 7
    %v2423 = vsub.s32 %v2420, %v2422
    %v2424 = vrot.slane %v2410, %v2423
    %v2425 = vcombine.high %v2417, %v2417
    %v2426 = vcombine.high %v2424, %v2424
    %v2427 = vcombine.high %v1403, %v1403
    %v2429 = vunpack.c.l.s4 1983009808
    %v2430 = vunpack.c.0.s8 %v2429
    %v2431 = vlaneseq
    %v2432 = vshrl.u32 %v2431, 7
    %v2433 = vsub.s32 %v2430, %v2432
    %v2434 = vrot.slane %v1403, %v2433
    %v2436 = vunpack.c.l.s4 1983009808
    %v2437 = vunpack.c.0.s8 %v2436
    %v2438 = vlaneseq
    %v2439 = vshrl.u32 %v2438, 7
    %v2440 = vsub.s32 %v2437, %v2439
    %v2441 = vrot.slane %v2427, %v2440
    %v2442 = vcombine.high %v2434, %v2434
    %v2443 = vcombine.high %v2441, %v2441
    %v2444 = vcombine.high %v1404, %v1404
    %v2446 = vunpack.c.l.s4 1983009808
    %v2447 = vunpack.c.0.s8 %v2446
    %v2448 = vlaneseq
    %v2449 = vshrl.u32 %v2448, 7
    %v2450 = vsub.s32 %v2447, %v2449
    %v2451 = vrot.slane %v1404, %v2450
    %v2453 = vunpack.c.l.s4 1983009808
    %v2454 = vunpack.c.0.s8 %v2453
    %v2455 = vlaneseq
    %v2456 = vshrl.u32 %v2455, 7
    %v2457 = vsub.s32 %v2454, %v2456
    %v2458 = vrot.slane %v2444, %v2457
    %v2459 = vcombine.high %v2451, %v2451
    %v2460 = vcombine.high %v2458, %v2458
    %v2461 = vcombine.high %v1405, %v1405
    %v2463 = vunpack.c.l.s4 1983009808
    %v2464 = vunpack.c.0.s8 %v2463
    %v2465 = vlaneseq
    %v2466 = vshrl.u32 %v2465, 7
    %v2467 = vsub.s32 %v2464, %v2466
    %v2468 = vrot.slane %v1405, %v2467
    %v2470 = vunpack.c.l.s4 1983009808
    %v2471 = vunpack.c.0.s8 %v2470
    %v2472 = vlaneseq
    %v2473 = vshrl.u32 %v2472, 7
    %v2474 = vsub.s32 %v2471, %v2473
    %v2475 = vrot.slane %v2461, %v2474
    %v2476 = vcombine.high %v2468, %v2468
    %v2477 = vcombine.high %v2475, %v2475
    %v2478 = vcombine.high %v1406, %v1406
    %v2480 = vunpack.c.l.s4 1983009808
    %v2481 = vunpack.c.0.s8 %v2480
    %v2482 = vlaneseq
    %v2483 = vshrl.u32 %v2482, 7
    %v2484 = vsub.s32 %v2481, %v2483
    %v2485 = vrot.slane %v1406, %v2484
    %v2487 = vunpack.c.l.s4 1983009808
    %v2488 = vunpack.c.0.s8 %v2487
    %v2489 = vlaneseq
    %v2490 = vshrl.u32 %v2489, 7
    %v2491 = vsub.s32 %v2488, %v2490
    %v2492 = vrot.slane %v2478, %v2491
    %v2493 = vcombine.high %v2485, %v2485
    %v2494 = vcombine.high %v2492, %v2492
    %v2495 = vcombine.high %v1407, %v1407
    %v2497 = vunpack.c.l.s4 1983009808
    %v2498 = vunpack.c.0.s8 %v2497
    %v2499 = vlaneseq
    %v2500 = vshrl.u32 %v2499, 7
    %v2501 = vsub.s32 %v2498, %v2500
    %v2502 = vrot.slane %v1407, %v2501
    %v2504 = vunpack.c.l.s4 1983009808
    %v2505 = vunpack.c.0.s8 %v2504
    %v2506 = vlaneseq
    %v2507 = vshrl.u32 %v2506, 7
    %v2508 = vsub.s32 %v2505, %v2507
    %v2509 = vrot.slane %v2495, %v2508
    %v2510 = vcombine.high %v2502, %v2502
    %v2511 = vcombine.high %v2509, %v2509
    %v2512 = vcombine.high %v1408, %v1408
    %v2514 = vunpack.c.l.s4 1983009808
    %v2515 = vunpack.c.0.s8 %v2514
    %v2516 = vlaneseq
    %v2517 = vshrl.u32 %v2516, 7
    %v2518 = vsub.s32 %v2515, %v2517
    %v2519 = vrot.slane %v1408, %v2518
    %v2521 = vunpack.c.l.s4 1983009808
    %v2522 = vunpack.c.0.s8 %v2521
    %v2523 = vlaneseq
    %v2524 = vshrl.u32 %v2523, 7
    %v2525 = vsub.s32 %v2522, %v2524
    %v2526 = vrot.slane %v2512, %v2525
    %v2527 = vcombine.high %v2519, %v2519
    %v2528 = vcombine.high %v2526, %v2526
    %v2529 = vcombine.high %v1409, %v1409
    %v2531 = vunpack.c.l.s4 1983009808
    %v2532 = vunpack.c.0.s8 %v2531
    %v2533 = vlaneseq
    %v2534 = vshrl.u32 %v2533, 7
    %v2535 = vsub.s32 %v2532, %v2534
    %v2536 = vrot.slane %v1409, %v2535
    %v2538 = vunpack.c.l.s4 1983009808
    %v2539 = vunpack.c.0.s8 %v2538
    %v2540 = vlaneseq
    %v2541 = vshrl.u32 %v2540, 7
    %v2542 = vsub.s32 %v2539, %v2541
    %v2543 = vrot.slane %v2529, %v2542
    %v2544 = vcombine.high %v2536, %v2536
    %v2545 = vcombine.high %v2543, %v2543
    %v2546 = vcombine.high %v1410, %v1410
    %v2548 = vunpack.c.l.s4 1983009808
    %v2549 = vunpack.c.0.s8 %v2548
    %v2550 = vlaneseq
    %v2551 = vshrl.u32 %v2550, 7
    %v2552 = vsub.s32 %v2549, %v2551
    %v2553 = vrot.slane %v1410, %v2552
    %v2555 = vunpack.c.l.s4 1983009808
    %v2556 = vunpack.c.0.s8 %v2555
    %v2557 = vlaneseq
    %v2558 = vshrl.u32 %v2557, 7
    %v2559 = vsub.s32 %v2556, %v2558
    %v2560 = vrot.slane %v2546, %v2559
    %v2561 = vcombine.high %v2553, %v2553
    %v2562 = vcombine.high %v2560, %v2560
    %v2563 = vcombine.low %v1482, %v1490
    %v2564 = vcombine.low %v1489, %v1491
    %v2566 = vunpack.c.l.s4 1983009808
    %v2567 = vunpack.c.0.s8 %v2566
    %v2568 = vlaneseq
    %v2569 = vshrl.u32 %v2568, 7
    %v2570 = vsub.s32 %v2567, %v2569
    %v2571 = vrot.slane %v2563, %v2570
    %v2573 = vunpack.c.l.s4 1983009808
    %v2574 = vunpack.c.0.s8 %v2573
    %v2575 = vlaneseq
    %v2576 = vshrl.u32 %v2575, 7
    %v2577 = vsub.s32 %v2574, %v2576
    %v2578 = vrot.slane %v2564, %v2577
    %v2579 = vcombine.low %v2571, %v2578
    %v2580 = vcombine.low %v1499, %v1507
    %v2581 = vcombine.low %v1506, %v1508
    %v2583 = vunpack.c.l.s4 1983009808
    %v2584 = vunpack.c.0.s8 %v2583
    %v2585 = vlaneseq
    %v2586 = vshrl.u32 %v2585, 7
    %v2587 = vsub.s32 %v2584, %v2586
    %v2588 = vrot.slane %v2580, %v2587
    %v2590 = vunpack.c.l.s4 1983009808
    %v2591 = vunpack.c.0.s8 %v2590
    %v2592 = vlaneseq
    %v2593 = vshrl.u32 %v2592, 7
    %v2594 = vsub.s32 %v2591, %v2593
    %v2595 = vrot.slane %v2581, %v2594
    %v2596 = vcombine.low %v2588, %v2595
    %v2597 = vcombine.low %v1516, %v1524
    %v2598 = vcombine.low %v1523, %v1525
    %v2600 = vunpack.c.l.s4 1983009808
    %v2601 = vunpack.c.0.s8 %v2600
    %v2602 = vlaneseq
    %v2603 = vshrl.u32 %v2602, 7
    %v2604 = vsub.s32 %v2601, %v2603
    %v2605 = vrot.slane %v2597, %v2604
    %v2607 = vunpack.c.l.s4 1983009808
    %v2608 = vunpack.c.0.s8 %v2607
    %v2609 = vlaneseq
    %v2610 = vshrl.u32 %v2609, 7
    %v2611 = vsub.s32 %v2608, %v2610
    %v2612 = vrot.slane %v2598, %v2611
    %v2613 = vcombine.low %v2605, %v2612
    %v2614 = vcombine.low %v1533, %v1541
    %v2615 = vcombine.low %v1540, %v1542
    %v2617 = vunpack.c.l.s4 1983009808
    %v2618 = vunpack.c.0.s8 %v2617
    %v2619 = vlaneseq
    %v2620 = vshrl.u32 %v2619, 7
    %v2621 = vsub.s32 %v2618, %v2620
    %v2622 = vrot.slane %v2614, %v2621
    %v2624 = vunpack.c.l.s4 1983009808
    %v2625 = vunpack.c.0.s8 %v2624
    %v2626 = vlaneseq
    %v2627 = vshrl.u32 %v2626, 7
    %v2628 = vsub.s32 %v2625, %v2627
    %v2629 = vrot.slane %v2615, %v2628
    %v2630 = vcombine.low %v2622, %v2629
    %v2631 = vcombine.low %v1550, %v1558
    %v2632 = vcombine.low %v1557, %v1559
    %v2634 = vunpack.c.l.s4 1983009808
    %v2635 = vunpack.c.0.s8 %v2634
    %v2636 = vlaneseq
    %v2637 = vshrl.u32 %v2636, 7
    %v2638 = vsub.s32 %v2635, %v2637
    %v2639 = vrot.slane %v2631, %v2638
    %v2641 = vunpack.c.l.s4 1983009808
    %v2642 = vunpack.c.0.s8 %v2641
    %v2643 = vlaneseq
    %v2644 = vshrl.u32 %v2643, 7
    %v2645 = vsub.s32 %v2642, %v2644
    %v2646 = vrot.slane %v2632, %v2645
    %v2647 = vcombine.low %v2639, %v2646
    %v2648 = vcombine.low %v1567, %v1575
    %v2649 = vcombine.low %v1574, %v1576
    %v2651 = vunpack.c.l.s4 1983009808
    %v2652 = vunpack.c.0.s8 %v2651
    %v2653 = vlaneseq
    %v2654 = vshrl.u32 %v2653, 7
    %v2655 = vsub.s32 %v2652, %v2654
    %v2656 = vrot.slane %v2648, %v2655
    %v2658 = vunpack.c.l.s4 1983009808
    %v2659 = vunpack.c.0.s8 %v2658
    %v2660 = vlaneseq
    %v2661 = vshrl.u32 %v2660, 7
    %v2662 = vsub.s32 %v2659, %v2661
    %v2663 = vrot.slane %v2649, %v2662
    %v2664 = vcombine.low %v2656, %v2663
    %v2665 = vcombine.low %v1584, %v1592
    %v2666 = vcombine.low %v1591, %v1593
    %v2668 = vunpack.c.l.s4 1983009808
    %v2669 = vunpack.c.0.s8 %v2668
    %v2670 = vlaneseq
    %v2671 = vshrl.u32 %v2670, 7
    %v2672 = vsub.s32 %v2669, %v2671
    %v2673 = vrot.slane %v2665, %v2672
    %v2675 = vunpack.c.l.s4 1983009808
    %v2676 = vunpack.c.0.s8 %v2675
    %v2677 = vlaneseq
    %v2678 = vshrl.u32 %v2677, 7
    %v2679 = vsub.s32 %v2676, %v2678
    %v2680 = vrot.slane %v2666, %v2679
    %v2681 = vcombine.low %v2673, %v2680
    %v2682 = vcombine.low %v1601, %v1609
    %v2683 = vcombine.low %v1608, %v1610
    %v2685 = vunpack.c.l.s4 1983009808
    %v2686 = vunpack.c.0.s8 %v2685
    %v2687 = vlaneseq
    %v2688 = vshrl.u32 %v2687, 7
    %v2689 = vsub.s32 %v2686, %v2688
    %v2690 = vrot.slane %v2682, %v2689
    %v2692 = vunpack.c.l.s4 1983009808
    %v2693 = vunpack.c.0.s8 %v2692
    %v2694 = vlaneseq
    %v2695 = vshrl.u32 %v2694, 7
    %v2696 = vsub.s32 %v2693, %v2695
    %v2697 = vrot.slane %v2683, %v2696
    %v2698 = vcombine.low %v2690, %v2697
    %v2699 = vcombine.low %v1618, %v1626
    %v2700 = vcombine.low %v1625, %v1627
    %v2702 = vunpack.c.l.s4 1983009808
    %v2703 = vunpack.c.0.s8 %v2702
    %v2704 = vlaneseq
    %v2705 = vshrl.u32 %v2704, 7
    %v2706 = vsub.s32 %v2703, %v2705
    %v2707 = vrot.slane %v2699, %v2706
    %v2709 = vunpack.c.l.s4 1983009808
    %v2710 = vunpack.c.0.s8 %v2709
    %v2711 = vlaneseq
    %v2712 = vshrl.u32 %v2711, 7
    %v2713 = vsub.s32 %v2710, %v2712
    %v2714 = vrot.slane %v2700, %v2713
    %v2715 = vcombine.low %v2707, %v2714
    %v2716 = vcombine.low %v1635, %v1643
    %v2717 = vcombine.low %v1642, %v1644
    %v2719 = vunpack.c.l.s4 1983009808
    %v2720 = vunpack.c.0.s8 %v2719
    %v2721 = vlaneseq
    %v2722 = vshrl.u32 %v2721, 7
    %v2723 = vsub.s32 %v2720, %v2722
    %v2724 = vrot.slane %v2716, %v2723
    %v2726 = vunpack.c.l.s4 1983009808
    %v2727 = vunpack.c.0.s8 %v2726
    %v2728 = vlaneseq
    %v2729 = vshrl.u32 %v2728, 7
    %v2730 = vsub.s32 %v2727, %v2729
    %v2731 = vrot.slane %v2717, %v2730
    %v2732 = vcombine.low %v2724, %v2731
    %v2733 = vcombine.low %v1652, %v1660
    %v2734 = vcombine.low %v1659, %v1661
    %v2736 = vunpack.c.l.s4 1983009808
    %v2737 = vunpack.c.0.s8 %v2736
    %v2738 = vlaneseq
    %v2739 = vshrl.u32 %v2738, 7
    %v2740 = vsub.s32 %v2737, %v2739
    %v2741 = vrot.slane %v2733, %v2740
    %v2743 = vunpack.c.l.s4 1983009808
    %v2744 = vunpack.c.0.s8 %v2743
    %v2745 = vlaneseq
    %v2746 = vshrl.u32 %v2745, 7
    %v2747 = vsub.s32 %v2744, %v2746
    %v2748 = vrot.slane %v2734, %v2747
    %v2749 = vcombine.low %v2741, %v2748
    %v2750 = vcombine.low %v1669, %v1677
    %v2751 = vcombine.low %v1676, %v1678
    %v2753 = vunpack.c.l.s4 1983009808
    %v2754 = vunpack.c.0.s8 %v2753
    %v2755 = vlaneseq
    %v2756 = vshrl.u32 %v2755, 7
    %v2757 = vsub.s32 %v2754, %v2756
    %v2758 = vrot.slane %v2750, %v2757
    %v2760 = vunpack.c.l.s4 1983009808
    %v2761 = vunpack.c.0.s8 %v2760
    %v2762 = vlaneseq
    %v2763 = vshrl.u32 %v2762, 7
    %v2764 = vsub.s32 %v2761, %v2763
    %v2765 = vrot.slane %v2751, %v2764
    %v2766 = vcombine.low %v2758, %v2765
    %v2767 = vcombine.low %v1686, %v1694
    %v2768 = vcombine.low %v1693, %v1695
    %v2770 = vunpack.c.l.s4 1983009808
    %v2771 = vunpack.c.0.s8 %v2770
    %v2772 = vlaneseq
    %v2773 = vshrl.u32 %v2772, 7
    %v2774 = vsub.s32 %v2771, %v2773
    %v2775 = vrot.slane %v2767, %v2774
    %v2777 = vunpack.c.l.s4 1983009808
    %v2778 = vunpack.c.0.s8 %v2777
    %v2779 = vlaneseq
    %v2780 = vshrl.u32 %v2779, 7
    %v2781 = vsub.s32 %v2778, %v2780
    %v2782 = vrot.slane %v2768, %v2781
    %v2783 = vcombine.low %v2775, %v2782
    %v2784 = vcombine.low %v1703, %v1711
    %v2785 = vcombine.low %v1710, %v1712
    %v2787 = vunpack.c.l.s4 1983009808
    %v2788 = vunpack.c.0.s8 %v2787
    %v2789 = vlaneseq
    %v2790 = vshrl.u32 %v2789, 7
    %v2791 = vsub.s32 %v2788, %v2790
    %v2792 = vrot.slane %v2784, %v2791
    %v2794 = vunpack.c.l.s4 1983009808
    %v2795 = vunpack.c.0.s8 %v2794
    %v2796 = vlaneseq
    %v2797 = vshrl.u32 %v2796, 7
    %v2798 = vsub.s32 %v2795, %v2797
    %v2799 = vrot.slane %v2785, %v2798
    %v2800 = vcombine.low %v2792, %v2799
    %v2801 = vcombine.low %v1720, %v1728
    %v2802 = vcombine.low %v1727, %v1729
    %v2804 = vunpack.c.l.s4 1983009808
    %v2805 = vunpack.c.0.s8 %v2804
    %v2806 = vlaneseq
    %v2807 = vshrl.u32 %v2806, 7
    %v2808 = vsub.s32 %v2805, %v2807
    %v2809 = vrot.slane %v2801, %v2808
    %v2811 = vunpack.c.l.s4 1983009808
    %v2812 = vunpack.c.0.s8 %v2811
    %v2813 = vlaneseq
    %v2814 = vshrl.u32 %v2813, 7
    %v2815 = vsub.s32 %v2812, %v2814
    %v2816 = vrot.slane %v2802, %v2815
    %v2817 = vcombine.low %v2809, %v2816
    %v2818 = vcombine.low %v1737, %v1745
    %v2819 = vcombine.low %v1744, %v1746
    %v2821 = vunpack.c.l.s4 1983009808
    %v2822 = vunpack.c.0.s8 %v2821
    %v2823 = vlaneseq
    %v2824 = vshrl.u32 %v2823, 7
    %v2825 = vsub.s32 %v2822, %v2824
    %v2826 = vrot.slane %v2818, %v2825
    %v2828 = vunpack.c.l.s4 1983009808
    %v2829 = vunpack.c.0.s8 %v2828
    %v2830 = vlaneseq
    %v2831 = vshrl.u32 %v2830, 7
    %v2832 = vsub.s32 %v2829, %v2831
    %v2833 = vrot.slane %v2819, %v2832
    %v2834 = vcombine.low %v2826, %v2833
    %v2835 = vcombine.low %v1754, %v1762
    %v2836 = vcombine.low %v1761, %v1763
    %v2838 = vunpack.c.l.s4 1983009808
    %v2839 = vunpack.c.0.s8 %v2838
    %v2840 = vlaneseq
    %v2841 = vshrl.u32 %v2840, 7
    %v2842 = vsub.s32 %v2839, %v2841
    %v2843 = vrot.slane %v2835, %v2842
    %v2845 = vunpack.c.l.s4 1983009808
    %v2846 = vunpack.c.0.s8 %v2845
    %v2847 = vlaneseq
    %v2848 = vshrl.u32 %v2847, 7
    %v2849 = vsub.s32 %v2846, %v2848
    %v2850 = vrot.slane %v2836, %v2849
    %v2851 = vcombine.low %v2843, %v2850
    %v2852 = vcombine.low %v1771, %v1779
    %v2853 = vcombine.low %v1778, %v1780
    %v2855 = vunpack.c.l.s4 1983009808
    %v2856 = vunpack.c.0.s8 %v2855
    %v2857 = vlaneseq
    %v2858 = vshrl.u32 %v2857, 7
    %v2859 = vsub.s32 %v2856, %v2858
    %v2860 = vrot.slane %v2852, %v2859
    %v2862 = vunpack.c.l.s4 1983009808
    %v2863 = vunpack.c.0.s8 %v2862
    %v2864 = vlaneseq
    %v2865 = vshrl.u32 %v2864, 7
    %v2866 = vsub.s32 %v2863, %v2865
    %v2867 = vrot.slane %v2853, %v2866
    %v2868 = vcombine.low %v2860, %v2867
    %v2869 = vcombine.low %v1788, %v1796
    %v2870 = vcombine.low %v1795, %v1797
    %v2872 = vunpack.c.l.s4 1983009808
    %v2873 = vunpack.c.0.s8 %v2872
    %v2874 = vlaneseq
    %v2875 = vshrl.u32 %v2874, 7
    %v2876 = vsub.s32 %v2873, %v2875
    %v2877 = vrot.slane %v2869, %v2876
    %v2879 = vunpack.c.l.s4 1983009808
    %v2880 = vunpack.c.0.s8 %v2879
    %v2881 = vlaneseq
    %v2882 = vshrl.u32 %v2881, 7
    %v2883 = vsub.s32 %v2880, %v2882
    %v2884 = vrot.slane %v2870, %v2883
    %v2885 = vcombine.low %v2877, %v2884
    %v2886 = vcombine.low %v1805, %v1813
    %v2887 = vcombine.low %v1812, %v1814
    %v2889 = vunpack.c.l.s4 1983009808
    %v2890 = vunpack.c.0.s8 %v2889
    %v2891 = vlaneseq
    %v2892 = vshrl.u32 %v2891, 7
    %v2893 = vsub.s32 %v2890, %v2892
    %v2894 = vrot.slane %v2886, %v2893
    %v2896 = vunpack.c.l.s4 1983009808
    %v2897 = vunpack.c.0.s8 %v2896
    %v2898 = vlaneseq
    %v2899 = vshrl.u32 %v2898, 7
    %v2900 = vsub.s32 %v2897, %v2899
    %v2901 = vrot.slane %v2887, %v2900
    %v2902 = vcombine.low %v2894, %v2901
    %v2903 = vcombine.low %v1822, %v1830
    %v2904 = vcombine.low %v1829, %v1831
    %v2906 = vunpack.c.l.s4 1983009808
    %v2907 = vunpack.c.0.s8 %v2906
    %v2908 = vlaneseq
    %v2909 = vshrl.u32 %v2908, 7
    %v2910 = vsub.s32 %v2907, %v2909
    %v2911 = vrot.slane %v2903, %v2910
    %v2913 = vunpack.c.l.s4 1983009808
    %v2914 = vunpack.c.0.s8 %v2913
    %v2915 = vlaneseq
    %v2916 = vshrl.u32 %v2915, 7
    %v2917 = vsub.s32 %v2914, %v2916
    %v2918 = vrot.slane %v2904, %v2917
    %v2919 = vcombine.low %v2911, %v2918
    %v2920 = vcombine.low %v1839, %v1847
    %v2921 = vcombine.low %v1846, %v1848
    %v2923 = vunpack.c.l.s4 1983009808
    %v2924 = vunpack.c.0.s8 %v2923
    %v2925 = vlaneseq
    %v2926 = vshrl.u32 %v2925, 7
    %v2927 = vsub.s32 %v2924, %v2926
    %v2928 = vrot.slane %v2920, %v2927
    %v2930 = vunpack.c.l.s4 1983009808
    %v2931 = vunpack.c.0.s8 %v2930
    %v2932 = vlaneseq
    %v2933 = vshrl.u32 %v2932, 7
    %v2934 = vsub.s32 %v2931, %v2933
    %v2935 = vrot.slane %v2921, %v2934
    %v2936 = vcombine.low %v2928, %v2935
    %v2937 = vcombine.low %v1856, %v1864
    %v2938 = vcombine.low %v1863, %v1865
    %v2940 = vunpack.c.l.s4 1983009808
    %v2941 = vunpack.c.0.s8 %v2940
    %v2942 = vlaneseq
    %v2943 = vshrl.u32 %v2942, 7
    %v2944 = vsub.s32 %v2941, %v2943
    %v2945 = vrot.slane %v2937, %v2944
    %v2947 = vunpack.c.l.s4 1983009808
    %v2948 = vunpack.c.0.s8 %v2947
    %v2949 = vlaneseq
    %v2950 = vshrl.u32 %v2949, 7
    %v2951 = vsub.s32 %v2948, %v2950
    %v2952 = vrot.slane %v2938, %v2951
    %v2953 = vcombine.low %v2945, %v2952
    %v2954 = vcombine.low %v1873, %v1881
    %v2955 = vcombine.low %v1880, %v1882
    %v2957 = vunpack.c.l.s4 1983009808
    %v2958 = vunpack.c.0.s8 %v2957
    %v2959 = vlaneseq
    %v2960 = vshrl.u32 %v2959, 7
    %v2961 = vsub.s32 %v2958, %v2960
    %v2962 = vrot.slane %v2954, %v2961
    %v2964 = vunpack.c.l.s4 1983009808
    %v2965 = vunpack.c.0.s8 %v2964
    %v2966 = vlaneseq
    %v2967 = vshrl.u32 %v2966, 7
    %v2968 = vsub.s32 %v2965, %v2967
    %v2969 = vrot.slane %v2955, %v2968
    %v2970 = vcombine.low %v2962, %v2969
    %v2971 = vcombine.low %v1890, %v1898
    %v2972 = vcombine.low %v1897, %v1899
    %v2974 = vunpack.c.l.s4 1983009808
    %v2975 = vunpack.c.0.s8 %v2974
    %v2976 = vlaneseq
    %v2977 = vshrl.u32 %v2976, 7
    %v2978 = vsub.s32 %v2975, %v2977
    %v2979 = vrot.slane %v2971, %v2978
    %v2981 = vunpack.c.l.s4 1983009808
    %v2982 = vunpack.c.0.s8 %v2981
    %v2983 = vlaneseq
    %v2984 = vshrl.u32 %v2983, 7
    %v2985 = vsub.s32 %v2982, %v2984
    %v2986 = vrot.slane %v2972, %v2985
    %v2987 = vcombine.low %v2979, %v2986
    %v2988 = vcombine.low %v1907, %v1915
    %v2989 = vcombine.low %v1914, %v1916
    %v2991 = vunpack.c.l.s4 1983009808
    %v2992 = vunpack.c.0.s8 %v2991
    %v2993 = vlaneseq
    %v2994 = vshrl.u32 %v2993, 7
    %v2995 = vsub.s32 %v2992, %v2994
    %v2996 = vrot.slane %v2988, %v2995
    %v2998 = vunpack.c.l.s4 1983009808
    %v2999 = vunpack.c.0.s8 %v2998
    %v3000 = vlaneseq
    %v3001 = vshrl.u32 %v3000, 7
    %v3002 = vsub.s32 %v2999, %v3001
    %v3003 = vrot.slane %v2989, %v3002
    %v3004 = vcombine.low %v2996, %v3003
    %v3005 = vcombine.low %v1924, %v1932
    %v3006 = vcombine.low %v1931, %v1933
    %v3008 = vunpack.c.l.s4 1983009808
    %v3009 = vunpack.c.0.s8 %v3008
    %v3010 = vlaneseq
    %v3011 = vshrl.u32 %v3010, 7
    %v3012 = vsub.s32 %v3009, %v3011
    %v3013 = vrot.slane %v3005, %v3012
    %v3015 = vunpack.c.l.s4 1983009808
    %v3016 = vunpack.c.0.s8 %v3015
    %v3017 = vlaneseq
    %v3018 = vshrl.u32 %v3017, 7
    %v3019 = vsub.s32 %v3016, %v3018
    %v3020 = vrot.slane %v3006, %v3019
    %v3021 = vcombine.low %v3013, %v3020
    %v3022 = vcombine.low %v1941, %v1949
    %v3023 = vcombine.low %v1948, %v1950
    %v3025 = vunpack.c.l.s4 1983009808
    %v3026 = vunpack.c.0.s8 %v3025
    %v3027 = vlaneseq
    %v3028 = vshrl.u32 %v3027, 7
    %v3029 = vsub.s32 %v3026, %v3028
    %v3030 = vrot.slane %v3022, %v3029
    %v3032 = vunpack.c.l.s4 1983009808
    %v3033 = vunpack.c.0.s8 %v3032
    %v3034 = vlaneseq
    %v3035 = vshrl.u32 %v3034, 7
    %v3036 = vsub.s32 %v3033, %v3035
    %v3037 = vrot.slane %v3023, %v3036
    %v3038 = vcombine.low %v3030, %v3037
    %v3039 = vcombine.low %v1958, %v1966
    %v3040 = vcombine.low %v1965, %v1967
    %v3042 = vunpack.c.l.s4 1983009808
    %v3043 = vunpack.c.0.s8 %v3042
    %v3044 = vlaneseq
    %v3045 = vshrl.u32 %v3044, 7
    %v3046 = vsub.s32 %v3043, %v3045
    %v3047 = vrot.slane %v3039, %v3046
    %v3049 = vunpack.c.l.s4 1983009808
    %v3050 = vunpack.c.0.s8 %v3049
    %v3051 = vlaneseq
    %v3052 = vshrl.u32 %v3051, 7
    %v3053 = vsub.s32 %v3050, %v3052
    %v3054 = vrot.slane %v3040, %v3053
    %v3055 = vcombine.low %v3047, %v3054
    %v3056 = vcombine.low %v1975, %v1983
    %v3057 = vcombine.low %v1982, %v1984
    %v3059 = vunpack.c.l.s4 1983009808
    %v3060 = vunpack.c.0.s8 %v3059
    %v3061 = vlaneseq
    %v3062 = vshrl.u32 %v3061, 7
    %v3063 = vsub.s32 %v3060, %v3062
    %v3064 = vrot.slane %v3056, %v3063
    %v3066 = vunpack.c.l.s4 1983009808
    %v3067 = vunpack.c.0.s8 %v3066
    %v3068 = vlaneseq
    %v3069 = vshrl.u32 %v3068, 7
    %v3070 = vsub.s32 %v3067, %v3069
    %v3071 = vrot.slane %v3057, %v3070
    %v3072 = vcombine.low %v3064, %v3071
    %v3073 = vcombine.low %v1992, %v2000
    %v3074 = vcombine.low %v1999, %v2001
    %v3076 = vunpack.c.l.s4 1983009808
    %v3077 = vunpack.c.0.s8 %v3076
    %v3078 = vlaneseq
    %v3079 = vshrl.u32 %v3078, 7
    %v3080 = vsub.s32 %v3077, %v3079
    %v3081 = vrot.slane %v3073, %v3080
    %v3083 = vunpack.c.l.s4 1983009808
    %v3084 = vunpack.c.0.s8 %v3083
    %v3085 = vlaneseq
    %v3086 = vshrl.u32 %v3085, 7
    %v3087 = vsub.s32 %v3084, %v3086
    %v3088 = vrot.slane %v3074, %v3087
    %v3089 = vcombine.low %v3081, %v3088
    %v3090 = vcombine.low %v2009, %v2017
    %v3091 = vcombine.low %v2016, %v2018
    %v3093 = vunpack.c.l.s4 1983009808
    %v3094 = vunpack.c.0.s8 %v3093
    %v3095 = vlaneseq
    %v3096 = vshrl.u32 %v3095, 7
    %v3097 = vsub.s32 %v3094, %v3096
    %v3098 = vrot.slane %v3090, %v3097
    %v3100 = vunpack.c.l.s4 1983009808
    %v3101 = vunpack.c.0.s8 %v3100
    %v3102 = vlaneseq
    %v3103 = vshrl.u32 %v3102, 7
    %v3104 = vsub.s32 %v3101, %v3103
    %v3105 = vrot.slane %v3091, %v3104
    %v3106 = vcombine.low %v3098, %v3105
    %v3107 = vcombine.low %v2026, %v2034
    %v3108 = vcombine.low %v2033, %v2035
    %v3110 = vunpack.c.l.s4 1983009808
    %v3111 = vunpack.c.0.s8 %v3110
    %v3112 = vlaneseq
    %v3113 = vshrl.u32 %v3112, 7
    %v3114 = vsub.s32 %v3111, %v3113
    %v3115 = vrot.slane %v3107, %v3114
    %v3117 = vunpack.c.l.s4 1983009808
    %v3118 = vunpack.c.0.s8 %v3117
    %v3119 = vlaneseq
    %v3120 = vshrl.u32 %v3119, 7
    %v3121 = vsub.s32 %v3118, %v3120
    %v3122 = vrot.slane %v3108, %v3121
    %v3123 = vcombine.low %v3115, %v3122
    %v3124 = vcombine.low %v2043, %v2051
    %v3125 = vcombine.low %v2050, %v2052
    %v3127 = vunpack.c.l.s4 1983009808
    %v3128 = vunpack.c.0.s8 %v3127
    %v3129 = vlaneseq
    %v3130 = vshrl.u32 %v3129, 7
    %v3131 = vsub.s32 %v3128, %v3130
    %v3132 = vrot.slane %v3124, %v3131
    %v3134 = vunpack.c.l.s4 1983009808
    %v3135 = vunpack.c.0.s8 %v3134
    %v3136 = vlaneseq
    %v3137 = vshrl.u32 %v3136, 7
    %v3138 = vsub.s32 %v3135, %v3137
    %v3139 = vrot.slane %v3125, %v3138
    %v3140 = vcombine.low %v3132, %v3139
    %v3141 = vcombine.low %v2060, %v2068
    %v3142 = vcombine.low %v2067, %v2069
    %v3144 = vunpack.c.l.s4 1983009808
    %v3145 = vunpack.c.0.s8 %v3144
    %v3146 = vlaneseq
    %v3147 = vshrl.u32 %v3146, 7
    %v3148 = vsub.s32 %v3145, %v3147
    %v3149 = vrot.slane %v3141, %v3148
    %v3151 = vunpack.c.l.s4 1983009808
    %v3152 = vunpack.c.0.s8 %v3151
    %v3153 = vlaneseq
    %v3154 = vshrl.u32 %v3153, 7
    %v3155 = vsub.s32 %v3152, %v3154
    %v3156 = vrot.slane %v3142, %v3155
    %v3157 = vcombine.low %v3149, %v3156
    %v3158 = vcombine.low %v2077, %v2085
    %v3159 = vcombine.low %v2084, %v2086
    %v3161 = vunpack.c.l.s4 1983009808
    %v3162 = vunpack.c.0.s8 %v3161
    %v3163 = vlaneseq
    %v3164 = vshrl.u32 %v3163, 7
    %v3165 = vsub.s32 %v3162, %v3164
    %v3166 = vrot.slane %v3158, %v3165
    %v3168 = vunpack.c.l.s4 1983009808
    %v3169 = vunpack.c.0.s8 %v3168
    %v3170 = vlaneseq
    %v3171 = vshrl.u32 %v3170, 7
    %v3172 = vsub.s32 %v3169, %v3171
    %v3173 = vrot.slane %v3159, %v3172
    %v3174 = vcombine.low %v3166, %v3173
    %v3175 = vcombine.low %v2094, %v2102
    %v3176 = vcombine.low %v2101, %v2103
    %v3178 = vunpack.c.l.s4 1983009808
    %v3179 = vunpack.c.0.s8 %v3178
    %v3180 = vlaneseq
    %v3181 = vshrl.u32 %v3180, 7
    %v3182 = vsub.s32 %v3179, %v3181
    %v3183 = vrot.slane %v3175, %v3182
    %v3185 = vunpack.c.l.s4 1983009808
    %v3186 = vunpack.c.0.s8 %v3185
    %v3187 = vlaneseq
    %v3188 = vshrl.u32 %v3187, 7
    %v3189 = vsub.s32 %v3186, %v3188
    %v3190 = vrot.slane %v3176, %v3189
    %v3191 = vcombine.low %v3183, %v3190
    %v3192 = vcombine.low %v2111, %v2119
    %v3193 = vcombine.low %v2118, %v2120
    %v3195 = vunpack.c.l.s4 1983009808
    %v3196 = vunpack.c.0.s8 %v3195
    %v3197 = vlaneseq
    %v3198 = vshrl.u32 %v3197, 7
    %v3199 = vsub.s32 %v3196, %v3198
    %v3200 = vrot.slane %v3192, %v3199
    %v3202 = vunpack.c.l.s4 1983009808
    %v3203 = vunpack.c.0.s8 %v3202
    %v3204 = vlaneseq
    %v3205 = vshrl.u32 %v3204, 7
    %v3206 = vsub.s32 %v3203, %v3205
    %v3207 = vrot.slane %v3193, %v3206
    %v3208 = vcombine.low %v3200, %v3207
    %v3209 = vcombine.low %v2128, %v2136
    %v3210 = vcombine.low %v2135, %v2137
    %v3212 = vunpack.c.l.s4 1983009808
    %v3213 = vunpack.c.0.s8 %v3212
    %v3214 = vlaneseq
    %v3215 = vshrl.u32 %v3214, 7
    %v3216 = vsub.s32 %v3213, %v3215
    %v3217 = vrot.slane %v3209, %v3216
    %v3219 = vunpack.c.l.s4 1983009808
    %v3220 = vunpack.c.0.s8 %v3219
    %v3221 = vlaneseq
    %v3222 = vshrl.u32 %v3221, 7
    %v3223 = vsub.s32 %v3220, %v3222
    %v3224 = vrot.slane %v3210, %v3223
    %v3225 = vcombine.low %v3217, %v3224
    %v3226 = vcombine.low %v2145, %v2153
    %v3227 = vcombine.low %v2152, %v2154
    %v3229 = vunpack.c.l.s4 1983009808
    %v3230 = vunpack.c.0.s8 %v3229
    %v3231 = vlaneseq
    %v3232 = vshrl.u32 %v3231, 7
    %v3233 = vsub.s32 %v3230, %v3232
    %v3234 = vrot.slane %v3226, %v3233
    %v3236 = vunpack.c.l.s4 1983009808
    %v3237 = vunpack.c.0.s8 %v3236
    %v3238 = vlaneseq
    %v3239 = vshrl.u32 %v3238, 7
    %v3240 = vsub.s32 %v3237, %v3239
    %v3241 = vrot.slane %v3227, %v3240
    %v3242 = vcombine.low %v3234, %v3241
    %v3243 = vcombine.low %v2162, %v2170
    %v3244 = vcombine.low %v2169, %v2171
    %v3246 = vunpack.c.l.s4 1983009808
    %v3247 = vunpack.c.0.s8 %v3246
    %v3248 = vlaneseq
    %v3249 = vshrl.u32 %v3248, 7
    %v3250 = vsub.s32 %v3247, %v3249
    %v3251 = vrot.slane %v3243, %v3250
    %v3253 = vunpack.c.l.s4 1983009808
    %v3254 = vunpack.c.0.s8 %v3253
    %v3255 = vlaneseq
    %v3256 = vshrl.u32 %v3255, 7
    %v3257 = vsub.s32 %v3254, %v3256
    %v3258 = vrot.slane %v3244, %v3257
    %v3259 = vcombine.low %v3251, %v3258
    %v3260 = vcombine.low %v2179, %v2187
    %v3261 = vcombine.low %v2186, %v2188
    %v3263 = vunpack.c.l.s4 1983009808
    %v3264 = vunpack.c.0.s8 %v3263
    %v3265 = vlaneseq
    %v3266 = vshrl.u32 %v3265, 7
    %v3267 = vsub.s32 %v3264, %v3266
    %v3268 = vrot.slane %v3260, %v3267
    %v3270 = vunpack.c.l.s4 1983009808
    %v3271 = vunpack.c.0.s8 %v3270
    %v3272 = vlaneseq
    %v3273 = vshrl.u32 %v3272, 7
    %v3274 = vsub.s32 %v3271, %v3273
    %v3275 = vrot.slane %v3261, %v3274
    %v3276 = vcombine.low %v3268, %v3275
    %v3277 = vcombine.low %v2196, %v2204
    %v3278 = vcombine.low %v2203, %v2205
    %v3280 = vunpack.c.l.s4 1983009808
    %v3281 = vunpack.c.0.s8 %v3280
    %v3282 = vlaneseq
    %v3283 = vshrl.u32 %v3282, 7
    %v3284 = vsub.s32 %v3281, %v3283
    %v3285 = vrot.slane %v3277, %v3284
    %v3287 = vunpack.c.l.s4 1983009808
    %v3288 = vunpack.c.0.s8 %v3287
    %v3289 = vlaneseq
    %v3290 = vshrl.u32 %v3289, 7
    %v3291 = vsub.s32 %v3288, %v3290
    %v3292 = vrot.slane %v3278, %v3291
    %v3293 = vcombine.low %v3285, %v3292
    %v3294 = vcombine.low %v2213, %v2221
    %v3295 = vcombine.low %v2220, %v2222
    %v3297 = vunpack.c.l.s4 1983009808
    %v3298 = vunpack.c.0.s8 %v3297
    %v3299 = vlaneseq
    %v3300 = vshrl.u32 %v3299, 7
    %v3301 = vsub.s32 %v3298, %v3300
    %v3302 = vrot.slane %v3294, %v3301
    %v3304 = vunpack.c.l.s4 1983009808
    %v3305 = vunpack.c.0.s8 %v3304
    %v3306 = vlaneseq
    %v3307 = vshrl.u32 %v3306, 7
    %v3308 = vsub.s32 %v3305, %v3307
    %v3309 = vrot.slane %v3295, %v3308
    %v3310 = vcombine.low %v3302, %v3309
    %v3311 = vcombine.low %v2230, %v2238
    %v3312 = vcombine.low %v2237, %v2239
    %v3314 = vunpack.c.l.s4 1983009808
    %v3315 = vunpack.c.0.s8 %v3314
    %v3316 = vlaneseq
    %v3317 = vshrl.u32 %v3316, 7
    %v3318 = vsub.s32 %v3315, %v3317
    %v3319 = vrot.slane %v3311, %v3318
    %v3321 = vunpack.c.l.s4 1983009808
    %v3322 = vunpack.c.0.s8 %v3321
    %v3323 = vlaneseq
    %v3324 = vshrl.u32 %v3323, 7
    %v3325 = vsub.s32 %v3322, %v3324
    %v3326 = vrot.slane %v3312, %v3325
    %v3327 = vcombine.low %v3319, %v3326
    %v3328 = vcombine.low %v2247, %v2255
    %v3329 = vcombine.low %v2254, %v2256
    %v3331 = vunpack.c.l.s4 1983009808
    %v3332 = vunpack.c.0.s8 %v3331
    %v3333 = vlaneseq
    %v3334 = vshrl.u32 %v3333, 7
    %v3335 = vsub.s32 %v3332, %v3334
    %v3336 = vrot.slane %v3328, %v3335
    %v3338 = vunpack.c.l.s4 1983009808
    %v3339 = vunpack.c.0.s8 %v3338
    %v3340 = vlaneseq
    %v3341 = vshrl.u32 %v3340, 7
    %v3342 = vsub.s32 %v3339, %v3341
    %v3343 = vrot.slane %v3329, %v3342
    %v3344 = vcombine.low %v3336, %v3343
    %v3345 = vcombine.low %v2264, %v2272
    %v3346 = vcombine.low %v2271, %v2273
    %v3348 = vunpack.c.l.s4 1983009808
    %v3349 = vunpack.c.0.s8 %v3348
    %v3350 = vlaneseq
    %v3351 = vshrl.u32 %v3350, 7
    %v3352 = vsub.s32 %v3349, %v3351
    %v3353 = vrot.slane %v3345, %v3352
    %v3355 = vunpack.c.l.s4 1983009808
    %v3356 = vunpack.c.0.s8 %v3355
    %v3357 = vlaneseq
    %v3358 = vshrl.u32 %v3357, 7
    %v3359 = vsub.s32 %v3356, %v3358
    %v3360 = vrot.slane %v3346, %v3359
    %v3361 = vcombine.low %v3353, %v3360
    %v3362 = vcombine.low %v2281, %v2289
    %v3363 = vcombine.low %v2288, %v2290
    %v3365 = vunpack.c.l.s4 1983009808
    %v3366 = vunpack.c.0.s8 %v3365
    %v3367 = vlaneseq
    %v3368 = vshrl.u32 %v3367, 7
    %v3369 = vsub.s32 %v3366, %v3368
    %v3370 = vrot.slane %v3362, %v3369
    %v3372 = vunpack.c.l.s4 1983009808
    %v3373 = vunpack.c.0.s8 %v3372
    %v3374 = vlaneseq
    %v3375 = vshrl.u32 %v3374, 7
    %v3376 = vsub.s32 %v3373, %v3375
    %v3377 = vrot.slane %v3363, %v3376
    %v3378 = vcombine.low %v3370, %v3377
    %v3379 = vcombine.low %v2298, %v2306
    %v3380 = vcombine.low %v2305, %v2307
    %v3382 = vunpack.c.l.s4 1983009808
    %v3383 = vunpack.c.0.s8 %v3382
    %v3384 = vlaneseq
    %v3385 = vshrl.u32 %v3384, 7
    %v3386 = vsub.s32 %v3383, %v3385
    %v3387 = vrot.slane %v3379, %v3386
    %v3389 = vunpack.c.l.s4 1983009808
    %v3390 = vunpack.c.0.s8 %v3389
    %v3391 = vlaneseq
    %v3392 = vshrl.u32 %v3391, 7
    %v3393 = vsub.s32 %v3390, %v3392
    %v3394 = vrot.slane %v3380, %v3393
    %v3395 = vcombine.low %v3387, %v3394
    %v3396 = vcombine.low %v2315, %v2323
    %v3397 = vcombine.low %v2322, %v2324
    %v3399 = vunpack.c.l.s4 1983009808
    %v3400 = vunpack.c.0.s8 %v3399
    %v3401 = vlaneseq
    %v3402 = vshrl.u32 %v3401, 7
    %v3403 = vsub.s32 %v3400, %v3402
    %v3404 = vrot.slane %v3396, %v3403
    %v3406 = vunpack.c.l.s4 1983009808
    %v3407 = vunpack.c.0.s8 %v3406
    %v3408 = vlaneseq
    %v3409 = vshrl.u32 %v3408, 7
    %v3410 = vsub.s32 %v3407, %v3409
    %v3411 = vrot.slane %v3397, %v3410
    %v3412 = vcombine.low %v3404, %v3411
    %v3413 = vcombine.low %v2332, %v2340
    %v3414 = vcombine.low %v2339, %v2341
    %v3416 = vunpack.c.l.s4 1983009808
    %v3417 = vunpack.c.0.s8 %v3416
    %v3418 = vlaneseq
    %v3419 = vshrl.u32 %v3418, 7
    %v3420 = vsub.s32 %v3417, %v3419
    %v3421 = vrot.slane %v3413, %v3420
    %v3423 = vunpack.c.l.s4 1983009808
    %v3424 = vunpack.c.0.s8 %v3423
    %v3425 = vlaneseq
    %v3426 = vshrl.u32 %v3425, 7
    %v3427 = vsub.s32 %v3424, %v3426
    %v3428 = vrot.slane %v3414, %v3427
    %v3429 = vcombine.low %v3421, %v3428
    %v3430 = vcombine.low %v2349, %v2357
    %v3431 = vcombine.low %v2356, %v2358
    %v3433 = vunpack.c.l.s4 1983009808
    %v3434 = vunpack.c.0.s8 %v3433
    %v3435 = vlaneseq
    %v3436 = vshrl.u32 %v3435, 7
    %v3437 = vsub.s32 %v3434, %v3436
    %v3438 = vrot.slane %v3430, %v3437
    %v3440 = vunpack.c.l.s4 1983009808
    %v3441 = vunpack.c.0.s8 %v3440
    %v3442 = vlaneseq
    %v3443 = vshrl.u32 %v3442, 7
    %v3444 = vsub.s32 %v3441, %v3443
    %v3445 = vrot.slane %v3431, %v3444
    %v3446 = vcombine.low %v3438, %v3445
    %v3447 = vcombine.low %v2366, %v2374
    %v3448 = vcombine.low %v2373, %v2375
    %v3450 = vunpack.c.l.s4 1983009808
    %v3451 = vunpack.c.0.s8 %v3450
    %v3452 = vlaneseq
    %v3453 = vshrl.u32 %v3452, 7
    %v3454 = vsub.s32 %v3451, %v3453
    %v3455 = vrot.slane %v3447, %v3454
    %v3457 = vunpack.c.l.s4 1983009808
    %v3458 = vunpack.c.0.s8 %v3457
    %v3459 = vlaneseq
    %v3460 = vshrl.u32 %v3459, 7
    %v3461 = vsub.s32 %v3458, %v3460
    %v3462 = vrot.slane %v3448, %v3461
    %v3463 = vcombine.low %v3455, %v3462
    %v3464 = vcombine.low %v2383, %v2391
    %v3465 = vcombine.low %v2390, %v2392
    %v3467 = vunpack.c.l.s4 1983009808
    %v3468 = vunpack.c.0.s8 %v3467
    %v3469 = vlaneseq
    %v3470 = vshrl.u32 %v3469, 7
    %v3471 = vsub.s32 %v3468, %v3470
    %v3472 = vrot.slane %v3464, %v3471
    %v3474 = vunpack.c.l.s4 1983009808
    %v3475 = vunpack.c.0.s8 %v3474
    %v3476 = vlaneseq
    %v3477 = vshrl.u32 %v3476, 7
    %v3478 = vsub.s32 %v3475, %v3477
    %v3479 = vrot.slane %v3465, %v3478
    %v3480 = vcombine.low %v3472, %v3479
    %v3481 = vcombine.low %v2400, %v2408
    %v3482 = vcombine.low %v2407, %v2409
    %v3484 = vunpack.c.l.s4 1983009808
    %v3485 = vunpack.c.0.s8 %v3484
    %v3486 = vlaneseq
    %v3487 = vshrl.u32 %v3486, 7
    %v3488 = vsub.s32 %v3485, %v3487
    %v3489 = vrot.slane %v3481, %v3488
    %v3491 = vunpack.c.l.s4 1983009808
    %v3492 = vunpack.c.0.s8 %v3491
    %v3493 = vlaneseq
    %v3494 = vshrl.u32 %v3493, 7
    %v3495 = vsub.s32 %v3492, %v3494
    %v3496 = vrot.slane %v3482, %v3495
    %v3497 = vcombine.low %v3489, %v3496
    %v3498 = vcombine.low %v2417, %v2425
    %v3499 = vcombine.low %v2424, %v2426
    %v3501 = vunpack.c.l.s4 1983009808
    %v3502 = vunpack.c.0.s8 %v3501
    %v3503 = vlaneseq
    %v3504 = vshrl.u32 %v3503, 7
    %v3505 = vsub.s32 %v3502, %v3504
    %v3506 = vrot.slane %v3498, %v3505
    %v3508 = vunpack.c.l.s4 1983009808
    %v3509 = vunpack.c.0.s8 %v3508
    %v3510 = vlaneseq
    %v3511 = vshrl.u32 %v3510, 7
    %v3512 = vsub.s32 %v3509, %v3511
    %v3513 = vrot.slane %v3499, %v3512
    %v3514 = vcombine.low %v3506, %v3513
    %v3515 = vcombine.low %v2434, %v2442
    %v3516 = vcombine.low %v2441, %v2443
    %v3518 = vunpack.c.l.s4 1983009808
    %v3519 = vunpack.c.0.s8 %v3518
    %v3520 = vlaneseq
    %v3521 = vshrl.u32 %v3520, 7
    %v3522 = vsub.s32 %v3519, %v3521
    %v3523 = vrot.slane %v3515, %v3522
    %v3525 = vunpack.c.l.s4 1983009808
    %v3526 = vunpack.c.0.s8 %v3525
    %v3527 = vlaneseq
    %v3528 = vshrl.u32 %v3527, 7
    %v3529 = vsub.s32 %v3526, %v3528
    %v3530 = vrot.slane %v3516, %v3529
    %v3531 = vcombine.low %v3523, %v3530
    %v3532 = vcombine.low %v2451, %v2459
    %v3533 = vcombine.low %v2458, %v2460
    %v3535 = vunpack.c.l.s4 1983009808
    %v3536 = vunpack.c.0.s8 %v3535
    %v3537 = vlaneseq
    %v3538 = vshrl.u32 %v3537, 7
    %v3539 = vsub.s32 %v3536, %v3538
    %v3540 = vrot.slane %v3532, %v3539
    %v3542 = vunpack.c.l.s4 1983009808
    %v3543 = vunpack.c.0.s8 %v3542
    %v3544 = vlaneseq
    %v3545 = vshrl.u32 %v3544, 7
    %v3546 = vsub.s32 %v3543, %v3545
    %v3547 = vrot.slane %v3533, %v3546
    %v3548 = vcombine.low %v3540, %v3547
    %v3549 = vcombine.low %v2468, %v2476
    %v3550 = vcombine.low %v2475, %v2477
    %v3552 = vunpack.c.l.s4 1983009808
    %v3553 = vunpack.c.0.s8 %v3552
    %v3554 = vlaneseq
    %v3555 = vshrl.u32 %v3554, 7
    %v3556 = vsub.s32 %v3553, %v3555
    %v3557 = vrot.slane %v3549, %v3556
    %v3559 = vunpack.c.l.s4 1983009808
    %v3560 = vunpack.c.0.s8 %v3559
    %v3561 = vlaneseq
    %v3562 = vshrl.u32 %v3561, 7
    %v3563 = vsub.s32 %v3560, %v3562
    %v3564 = vrot.slane %v3550, %v3563
    %v3565 = vcombine.low %v3557, %v3564
    %v3566 = vcombine.low %v2485, %v2493
    %v3567 = vcombine.low %v2492, %v2494
    %v3569 = vunpack.c.l.s4 1983009808
    %v3570 = vunpack.c.0.s8 %v3569
    %v3571 = vlaneseq
    %v3572 = vshrl.u32 %v3571, 7
    %v3573 = vsub.s32 %v3570, %v3572
    %v3574 = vrot.slane %v3566, %v3573
    %v3576 = vunpack.c.l.s4 1983009808
    %v3577 = vunpack.c.0.s8 %v3576
    %v3578 = vlaneseq
    %v3579 = vshrl.u32 %v3578, 7
    %v3580 = vsub.s32 %v3577, %v3579
    %v3581 = vrot.slane %v3567, %v3580
    %v3582 = vcombine.low %v3574, %v3581
    %v3583 = vcombine.low %v2502, %v2510
    %v3584 = vcombine.low %v2509, %v2511
    %v3586 = vunpack.c.l.s4 1983009808
    %v3587 = vunpack.c.0.s8 %v3586
    %v3588 = vlaneseq
    %v3589 = vshrl.u32 %v3588, 7
    %v3590 = vsub.s32 %v3587, %v3589
    %v3591 = vrot.slane %v3583, %v3590
    %v3593 = vunpack.c.l.s4 1983009808
    %v3594 = vunpack.c.0.s8 %v3593
    %v3595 = vlaneseq
    %v3596 = vshrl.u32 %v3595, 7
    %v3597 = vsub.s32 %v3594, %v3596
    %v3598 = vrot.slane %v3584, %v3597
    %v3599 = vcombine.low %v3591, %v3598
    %v3600 = vcombine.low %v2519, %v2527
    %v3601 = vcombine.low %v2526, %v2528
    %v3603 = vunpack.c.l.s4 1983009808
    %v3604 = vunpack.c.0.s8 %v3603
    %v3605 = vlaneseq
    %v3606 = vshrl.u32 %v3605, 7
    %v3607 = vsub.s32 %v3604, %v3606
    %v3608 = vrot.slane %v3600, %v3607
    %v3610 = vunpack.c.l.s4 1983009808
    %v3611 = vunpack.c.0.s8 %v3610
    %v3612 = vlaneseq
    %v3613 = vshrl.u32 %v3612, 7
    %v3614 = vsub.s32 %v3611, %v3613
    %v3615 = vrot.slane %v3601, %v3614
    %v3616 = vcombine.low %v3608, %v3615
    %v3617 = vcombine.low %v2536, %v2544
    %v3618 = vcombine.low %v2543, %v2545
    %v3620 = vunpack.c.l.s4 1983009808
    %v3621 = vunpack.c.0.s8 %v3620
    %v3622 = vlaneseq
    %v3623 = vshrl.u32 %v3622, 7
    %v3624 = vsub.s32 %v3621, %v3623
    %v3625 = vrot.slane %v3617, %v3624
    %v3627 = vunpack.c.l.s4 1983009808
    %v3628 = vunpack.c.0.s8 %v3627
    %v3629 = vlaneseq
    %v3630 = vshrl.u32 %v3629, 7
    %v3631 = vsub.s32 %v3628, %v3630
    %v3632 = vrot.slane %v3618, %v3631
    %v3633 = vcombine.low %v3625, %v3632
    %v3634 = vcombine.low %v2553, %v2561
    %v3635 = vcombine.low %v2560, %v2562
    %v3637 = vunpack.c.l.s4 1983009808
    %v3638 = vunpack.c.0.s8 %v3637
    %v3639 = vlaneseq
    %v3640 = vshrl.u32 %v3639, 7
    %v3641 = vsub.s32 %v3638, %v3640
    %v3642 = vrot.slane %v3634, %v3641
    %v3644 = vunpack.c.l.s4 1983009808
    %v3645 = vunpack.c.0.s8 %v3644
    %v3646 = vlaneseq
    %v3647 = vshrl.u32 %v3646, 7
    %v3648 = vsub.s32 %v3645, %v3647
    %v3649 = vrot.slane %v3635, %v3648
    %v3650 = vcombine.low %v3642, %v3649
    %3651 = vset.pattern.permute.xlu0 0
    %3652 = vperm.xlu0 %3651, %v2579
    %v3653 = vpop.permute.xlu0 %3652
    %3654 = vset.pattern.permute.xlu0 0
    %3655 = vperm.xlu0 %3654, %v2596
    %v3656 = vpop.permute.xlu0 %3655
    %3657 = vset.pattern.permute.xlu0 0
    %3658 = vperm.xlu0 %3657, %v2613
    %v3659 = vpop.permute.xlu0 %3658
    %3660 = vset.pattern.permute.xlu0 0
    %3661 = vperm.xlu0 %3660, %v2630
    %v3662 = vpop.permute.xlu0 %3661
    %3663 = vset.pattern.permute.xlu0 0
    %3664 = vperm.xlu0 %3663, %v2647
    %v3665 = vpop.permute.xlu0 %3664
    %3666 = vset.pattern.permute.xlu0 0
    %3667 = vperm.xlu0 %3666, %v2664
    %v3668 = vpop.permute.xlu0 %3667
    %3669 = vset.pattern.permute.xlu0 0
    %3670 = vperm.xlu0 %3669, %v2681
    %v3671 = vpop.permute.xlu0 %3670
    %3672 = vset.pattern.permute.xlu0 0
    %3673 = vperm.xlu0 %3672, %v2698
    %v3674 = vpop.permute.xlu0 %3673
    %3675 = vset.pattern.permute.xlu0 0
    %3676 = vperm.xlu0 %3675, %v2715
    %v3677 = vpop.permute.xlu0 %3676
    %3678 = vset.pattern.permute.xlu0 0
    %3679 = vperm.xlu0 %3678, %v2732
    %v3680 = vpop.permute.xlu0 %3679
    %3681 = vset.pattern.permute.xlu0 0
    %3682 = vperm.xlu0 %3681, %v2749
    %v3683 = vpop.permute.xlu0 %3682
    %3684 = vset.pattern.permute.xlu0 0
    %3685 = vperm.xlu0 %3684, %v2766
    %v3686 = vpop.permute.xlu0 %3685
    %3687 = vset.pattern.permute.xlu0 0
    %3688 = vperm.xlu0 %3687, %v2783
    %v3689 = vpop.permute.xlu0 %3688
    %3690 = vset.pattern.permute.xlu0 0
    %3691 = vperm.xlu0 %3690, %v2800
    %v3692 = vpop.permute.xlu0 %3691
    %3693 = vset.pattern.permute.xlu0 0
    %3694 = vperm.xlu0 %3693, %v2817
    %v3695 = vpop.permute.xlu0 %3694
    %3696 = vset.pattern.permute.xlu0 0
    %3697 = vperm.xlu0 %3696, %v2834
    %v3698 = vpop.permute.xlu0 %3697
    %3699 = vset.pattern.permute.xlu0 0
    %3700 = vperm.xlu0 %3699, %v2851
    %v3701 = vpop.permute.xlu0 %3700
    %3702 = vset.pattern.permute.xlu0 0
    %3703 = vperm.xlu0 %3702, %v2868
    %v3704 = vpop.permute.xlu0 %3703
    %3705 = vset.pattern.permute.xlu0 0
    %3706 = vperm.xlu0 %3705, %v2885
    %v3707 = vpop.permute.xlu0 %3706
    %3708 = vset.pattern.permute.xlu0 0
    %3709 = vperm.xlu0 %3708, %v2902
    %v3710 = vpop.permute.xlu0 %3709
    %3711 = vset.pattern.permute.xlu0 0
    %3712 = vperm.xlu0 %3711, %v2919
    %v3713 = vpop.permute.xlu0 %3712
    %3714 = vset.pattern.permute.xlu0 0
    %3715 = vperm.xlu0 %3714, %v2936
    %v3716 = vpop.permute.xlu0 %3715
    %3717 = vset.pattern.permute.xlu0 0
    %3718 = vperm.xlu0 %3717, %v2953
    %v3719 = vpop.permute.xlu0 %3718
    %3720 = vset.pattern.permute.xlu0 0
    %3721 = vperm.xlu0 %3720, %v2970
    %v3722 = vpop.permute.xlu0 %3721
    %3723 = vset.pattern.permute.xlu0 0
    %3724 = vperm.xlu0 %3723, %v2987
    %v3725 = vpop.permute.xlu0 %3724
    %3726 = vset.pattern.permute.xlu0 0
    %3727 = vperm.xlu0 %3726, %v3004
    %v3728 = vpop.permute.xlu0 %3727
    %3729 = vset.pattern.permute.xlu0 0
    %3730 = vperm.xlu0 %3729, %v3021
    %v3731 = vpop.permute.xlu0 %3730
    %3732 = vset.pattern.permute.xlu0 0
    %3733 = vperm.xlu0 %3732, %v3038
    %v3734 = vpop.permute.xlu0 %3733
    %3735 = vset.pattern.permute.xlu0 0
    %3736 = vperm.xlu0 %3735, %v3055
    %v3737 = vpop.permute.xlu0 %3736
    %3738 = vset.pattern.permute.xlu0 0
    %3739 = vperm.xlu0 %3738, %v3072
    %v3740 = vpop.permute.xlu0 %3739
    %3741 = vset.pattern.permute.xlu0 0
    %3742 = vperm.xlu0 %3741, %v3089
    %v3743 = vpop.permute.xlu0 %3742
    %3744 = vset.pattern.permute.xlu0 0
    %3745 = vperm.xlu0 %3744, %v3106
    %v3746 = vpop.permute.xlu0 %3745
    %3747 = vset.pattern.permute.xlu0 0
    %3748 = vperm.xlu0 %3747, %v3123
    %v3749 = vpop.permute.xlu0 %3748
    %3750 = vset.pattern.permute.xlu0 0
    %3751 = vperm.xlu0 %3750, %v3140
    %v3752 = vpop.permute.xlu0 %3751
    %3753 = vset.pattern.permute.xlu0 0
    %3754 = vperm.xlu0 %3753, %v3157
    %v3755 = vpop.permute.xlu0 %3754
    %3756 = vset.pattern.permute.xlu0 0
    %3757 = vperm.xlu0 %3756, %v3174
    %v3758 = vpop.permute.xlu0 %3757
    %3759 = vset.pattern.permute.xlu0 0
    %3760 = vperm.xlu0 %3759, %v3191
    %v3761 = vpop.permute.xlu0 %3760
    %3762 = vset.pattern.permute.xlu0 0
    %3763 = vperm.xlu0 %3762, %v3208
    %v3764 = vpop.permute.xlu0 %3763
    %3765 = vset.pattern.permute.xlu0 0
    %3766 = vperm.xlu0 %3765, %v3225
    %v3767 = vpop.permute.xlu0 %3766
    %3768 = vset.pattern.permute.xlu0 0
    %3769 = vperm.xlu0 %3768, %v3242
    %v3770 = vpop.permute.xlu0 %3769
    %3771 = vset.pattern.permute.xlu0 0
    %3772 = vperm.xlu0 %3771, %v3259
    %v3773 = vpop.permute.xlu0 %3772
    %3774 = vset.pattern.permute.xlu0 0
    %3775 = vperm.xlu0 %3774, %v3276
    %v3776 = vpop.permute.xlu0 %3775
    %3777 = vset.pattern.permute.xlu0 0
    %3778 = vperm.xlu0 %3777, %v3293
    %v3779 = vpop.permute.xlu0 %3778
    %3780 = vset.pattern.permute.xlu0 0
    %3781 = vperm.xlu0 %3780, %v3310
    %v3782 = vpop.permute.xlu0 %3781
    %3783 = vset.pattern.permute.xlu0 0
    %3784 = vperm.xlu0 %3783, %v3327
    %v3785 = vpop.permute.xlu0 %3784
    %3786 = vset.pattern.permute.xlu0 0
    %3787 = vperm.xlu0 %3786, %v3344
    %v3788 = vpop.permute.xlu0 %3787
    %3789 = vset.pattern.permute.xlu0 0
    %3790 = vperm.xlu0 %3789, %v3361
    %v3791 = vpop.permute.xlu0 %3790
    %3792 = vset.pattern.permute.xlu0 0
    %3793 = vperm.xlu0 %3792, %v3378
    %v3794 = vpop.permute.xlu0 %3793
    %3795 = vset.pattern.permute.xlu0 0
    %3796 = vperm.xlu0 %3795, %v3395
    %v3797 = vpop.permute.xlu0 %3796
    %3798 = vset.pattern.permute.xlu0 0
    %3799 = vperm.xlu0 %3798, %v3412
    %v3800 = vpop.permute.xlu0 %3799
    %3801 = vset.pattern.permute.xlu0 0
    %3802 = vperm.xlu0 %3801, %v3429
    %v3803 = vpop.permute.xlu0 %3802
    %3804 = vset.pattern.permute.xlu0 0
    %3805 = vperm.xlu0 %3804, %v3446
    %v3806 = vpop.permute.xlu0 %3805
    %3807 = vset.pattern.permute.xlu0 0
    %3808 = vperm.xlu0 %3807, %v3463
    %v3809 = vpop.permute.xlu0 %3808
    %3810 = vset.pattern.permute.xlu0 0
    %3811 = vperm.xlu0 %3810, %v3480
    %v3812 = vpop.permute.xlu0 %3811
    %3813 = vset.pattern.permute.xlu0 0
    %3814 = vperm.xlu0 %3813, %v3497
    %v3815 = vpop.permute.xlu0 %3814
    %3816 = vset.pattern.permute.xlu0 0
    %3817 = vperm.xlu0 %3816, %v3514
    %v3818 = vpop.permute.xlu0 %3817
    %3819 = vset.pattern.permute.xlu0 0
    %3820 = vperm.xlu0 %3819, %v3531
    %v3821 = vpop.permute.xlu0 %3820
    %3822 = vset.pattern.permute.xlu0 0
    %3823 = vperm.xlu0 %3822, %v3548
    %v3824 = vpop.permute.xlu0 %3823
    %3825 = vset.pattern.permute.xlu0 0
    %3826 = vperm.xlu0 %3825, %v3565
    %v3827 = vpop.permute.xlu0 %3826
    %3828 = vset.pattern.permute.xlu0 0
    %3829 = vperm.xlu0 %3828, %v3582
    %v3830 = vpop.permute.xlu0 %3829
    %3831 = vset.pattern.permute.xlu0 0
    %3832 = vperm.xlu0 %3831, %v3599
    %v3833 = vpop.permute.xlu0 %3832
    %3834 = vset.pattern.permute.xlu0 0
    %3835 = vperm.xlu0 %3834, %v3616
    %v3836 = vpop.permute.xlu0 %3835
    %3837 = vset.pattern.permute.xlu0 0
    %3838 = vperm.xlu0 %3837, %v3633
    %v3839 = vpop.permute.xlu0 %3838
    %3840 = vset.pattern.permute.xlu0 0
    %3841 = vperm.xlu0 %3840, %v3650
    %v3842 = vpop.permute.xlu0 %3841
    %v3843 = vlaneseq
    %v3844 = vshrl.u32 %v3843, 7
    %v3845 = vsub.s32 %v976, %v3844
    %v3846 = vrot.slane %v3653, %v3845
    %v3847 = vlaneseq
    %v3848 = vshrl.u32 %v3847, 7
    %v3849 = vsub.s32 %v981, %v3848
    %v3850 = vrot.slane %v3656, %v3849
    %v3851 = vsel %vm986, %v3850, %v3846
    %v3852 = vlaneseq
    %v3853 = vshrl.u32 %v3852, 7
    %v3854 = vsub.s32 %v988, %v3853
    %v3855 = vrot.slane %v3659, %v3854
    %v3856 = vsel %vm993, %v3855, %v3851
    %v3857 = vlaneseq
    %v3858 = vshrl.u32 %v3857, 7
    %v3859 = vsub.s32 %v995, %v3858
    %v3860 = vrot.slane %v3662, %v3859
    %v3861 = vsel %vm1000, %v3860, %v3856
    %v3862 = vlaneseq
    %v3863 = vshrl.u32 %v3862, 7
    %v3864 = vsub.s32 %v1002, %v3863
    %v3865 = vrot.slane %v3665, %v3864
    %v3866 = vsel %vm1007, %v3865, %v3861
    %v3867 = vlaneseq
    %v3868 = vshrl.u32 %v3867, 7
    %v3869 = vsub.s32 %v1009, %v3868
    %v3870 = vrot.slane %v3668, %v3869
    %v3871 = vsel %vm1014, %v3870, %v3866
    %v3872 = vlaneseq
    %v3873 = vshrl.u32 %v3872, 7
    %v3874 = vsub.s32 %v1016, %v3873
    %v3875 = vrot.slane %v3671, %v3874
    %v3876 = vsel %vm1021, %v3875, %v3871
    %v3877 = vlaneseq
    %v3878 = vshrl.u32 %v3877, 7
    %v3879 = vsub.s32 %v1023, %v3878
    %v3880 = vrot.slane %v3674, %v3879
    %v3881 = vsel %vm1028, %v3880, %v3876
    %v3882 = vlaneseq
    %v3883 = vshrl.u32 %v3882, 7
    %v3884 = vsub.s32 %v1030, %v3883
    %v3885 = vrot.slane %v3677, %v3884
    %v3886 = vsel %vm1035, %v3885, %v3881
    %v3887 = vlaneseq
    %v3888 = vshrl.u32 %v3887, 7
    %v3889 = vsub.s32 %v1037, %v3888
    %v3890 = vrot.slane %v3680, %v3889
    %v3891 = vsel %vm1042, %v3890, %v3886
    %v3892 = vlaneseq
    %v3893 = vshrl.u32 %v3892, 7
    %v3894 = vsub.s32 %v1044, %v3893
    %v3895 = vrot.slane %v3683, %v3894
    %v3896 = vsel %vm1049, %v3895, %v3891
    %v3897 = vlaneseq
    %v3898 = vshrl.u32 %v3897, 7
    %v3899 = vsub.s32 %v1051, %v3898
    %v3900 = vrot.slane %v3686, %v3899
    %v3901 = vsel %vm1056, %v3900, %v3896
    %v3902 = vlaneseq
    %v3903 = vshrl.u32 %v3902, 7
    %v3904 = vsub.s32 %v1058, %v3903
    %v3905 = vrot.slane %v3689, %v3904
    %v3906 = vsel %vm1063, %v3905, %v3901
    %v3907 = vlaneseq
    %v3908 = vshrl.u32 %v3907, 7
    %v3909 = vsub.s32 %v1065, %v3908
    %v3910 = vrot.slane %v3692, %v3909
    %v3911 = vsel %vm1070, %v3910, %v3906
    %v3912 = vlaneseq
    %v3913 = vshrl.u32 %v3912, 7
    %v3914 = vsub.s32 %v1072, %v3913
    %v3915 = vrot.slane %v3695, %v3914
    %v3916 = vsel %vm1077, %v3915, %v3911
    %v3917 = vlaneseq
    %v3918 = vshrl.u32 %v3917, 7
    %v3919 = vsub.s32 %v1079, %v3918
    %v3920 = vrot.slane %v3698, %v3919
    %v3921 = vsel %vm1084, %v3920, %v3916
    %v3922 = vlaneseq
    %v3923 = vshrl.u32 %v3922, 7
    %v3924 = vsub.s32 %v976, %v3923
    %v3925 = vrot.slane %v3701, %v3924
    %v3926 = vlaneseq
    %v3927 = vshrl.u32 %v3926, 7
    %v3928 = vsub.s32 %v981, %v3927
    %v3929 = vrot.slane %v3704, %v3928
    %v3930 = vsel %vm986, %v3929, %v3925
    %v3931 = vlaneseq
    %v3932 = vshrl.u32 %v3931, 7
    %v3933 = vsub.s32 %v988, %v3932
    %v3934 = vrot.slane %v3707, %v3933
    %v3935 = vsel %vm993, %v3934, %v3930
    %v3936 = vlaneseq
    %v3937 = vshrl.u32 %v3936, 7
    %v3938 = vsub.s32 %v995, %v3937
    %v3939 = vrot.slane %v3710, %v3938
    %v3940 = vsel %vm1000, %v3939, %v3935
    %v3941 = vlaneseq
    %v3942 = vshrl.u32 %v3941, 7
    %v3943 = vsub.s32 %v1002, %v3942
    %v3944 = vrot.slane %v3713, %v3943
    %v3945 = vsel %vm1007, %v3944, %v3940
    %v3946 = vlaneseq
    %v3947 = vshrl.u32 %v3946, 7
    %v3948 = vsub.s32 %v1009, %v3947
    %v3949 = vrot.slane %v3716, %v3948
    %v3950 = vsel %vm1014, %v3949, %v3945
    %v3951 = vlaneseq
    %v3952 = vshrl.u32 %v3951, 7
    %v3953 = vsub.s32 %v1016, %v3952
    %v3954 = vrot.slane %v3719, %v3953
    %v3955 = vsel %vm1021, %v3954, %v3950
    %v3956 = vlaneseq
    %v3957 = vshrl.u32 %v3956, 7
    %v3958 = vsub.s32 %v1023, %v3957
    %v3959 = vrot.slane %v3722, %v3958
    %v3960 = vsel %vm1028, %v3959, %v3955
    %v3961 = vlaneseq
    %v3962 = vshrl.u32 %v3961, 7
    %v3963 = vsub.s32 %v1030, %v3962
    %v3964 = vrot.slane %v3725, %v3963
    %v3965 = vsel %vm1035, %v3964, %v3960
    %v3966 = vlaneseq
    %v3967 = vshrl.u32 %v3966, 7
    %v3968 = vsub.s32 %v1037, %v3967
    %v3969 = vrot.slane %v3728, %v3968
    %v3970 = vsel %vm1042, %v3969, %v3965
    %v3971 = vlaneseq
    %v3972 = vshrl.u32 %v3971, 7
    %v3973 = vsub.s32 %v1044, %v3972
    %v3974 = vrot.slane %v3731, %v3973
    %v3975 = vsel %vm1049, %v3974, %v3970
    %v3976 = vlaneseq
    %v3977 = vshrl.u32 %v3976, 7
    %v3978 = vsub.s32 %v1051, %v3977
    %v3979 = vrot.slane %v3734, %v3978
    %v3980 = vsel %vm1056, %v3979, %v3975
    %v3981 = vlaneseq
    %v3982 = vshrl.u32 %v3981, 7
    %v3983 = vsub.s32 %v1058, %v3982
    %v3984 = vrot.slane %v3737, %v3983
    %v3985 = vsel %vm1063, %v3984, %v3980
    %v3986 = vlaneseq
    %v3987 = vshrl.u32 %v3986, 7
    %v3988 = vsub.s32 %v1065, %v3987
    %v3989 = vrot.slane %v3740, %v3988
    %v3990 = vsel %vm1070, %v3989, %v3985
    %v3991 = vlaneseq
    %v3992 = vshrl.u32 %v3991, 7
    %v3993 = vsub.s32 %v1072, %v3992
    %v3994 = vrot.slane %v3743, %v3993
    %v3995 = vsel %vm1077, %v3994, %v3990
    %v3996 = vlaneseq
    %v3997 = vshrl.u32 %v3996, 7
    %v3998 = vsub.s32 %v1079, %v3997
    %v3999 = vrot.slane %v3746, %v3998
    %v4000 = vsel %vm1084, %v3999, %v3995
    %v4001 = vlaneseq
    %v4002 = vshrl.u32 %v4001, 7
    %v4003 = vsub.s32 %v976, %v4002
    %v4004 = vrot.slane %v3749, %v4003
    %v4005 = vlaneseq
    %v4006 = vshrl.u32 %v4005, 7
    %v4007 = vsub.s32 %v981, %v4006
    %v4008 = vrot.slane %v3752, %v4007
    %v4009 = vsel %vm986, %v4008, %v4004
    %v4010 = vlaneseq
    %v4011 = vshrl.u32 %v4010, 7
    %v4012 = vsub.s32 %v988, %v4011
    %v4013 = vrot.slane %v3755, %v4012
    %v4014 = vsel %vm993, %v4013, %v4009
    %v4015 = vlaneseq
    %v4016 = vshrl.u32 %v4015, 7
    %v4017 = vsub.s32 %v995, %v4016
    %v4018 = vrot.slane %v3758, %v4017
    %v4019 = vsel %vm1000, %v4018, %v4014
    %v4020 = vlaneseq
    %v4021 = vshrl.u32 %v4020, 7
    %v4022 = vsub.s32 %v1002, %v4021
    %v4023 = vrot.slane %v3761, %v4022
    %v4024 = vsel %vm1007, %v4023, %v4019
    %v4025 = vlaneseq
    %v4026 = vshrl.u32 %v4025, 7
    %v4027 = vsub.s32 %v1009, %v4026
    %v4028 = vrot.slane %v3764, %v4027
    %v4029 = vsel %vm1014, %v4028, %v4024
    %v4030 = vlaneseq
    %v4031 = vshrl.u32 %v4030, 7
    %v4032 = vsub.s32 %v1016, %v4031
    %v4033 = vrot.slane %v3767, %v4032
    %v4034 = vsel %vm1021, %v4033, %v4029
    %v4035 = vlaneseq
    %v4036 = vshrl.u32 %v4035, 7
    %v4037 = vsub.s32 %v1023, %v4036
    %v4038 = vrot.slane %v3770, %v4037
    %v4039 = vsel %vm1028, %v4038, %v4034
    %v4040 = vlaneseq
    %v4041 = vshrl.u32 %v4040, 7
    %v4042 = vsub.s32 %v1030, %v4041
    %v4043 = vrot.slane %v3773, %v4042
    %v4044 = vsel %vm1035, %v4043, %v4039
    %v4045 = vlaneseq
    %v4046 = vshrl.u32 %v4045, 7
    %v4047 = vsub.s32 %v1037, %v4046
    %v4048 = vrot.slane %v3776, %v4047
    %v4049 = vsel %vm1042, %v4048, %v4044
    %v4050 = vlaneseq
    %v4051 = vshrl.u32 %v4050, 7
    %v4052 = vsub.s32 %v1044, %v4051
    %v4053 = vrot.slane %v3779, %v4052
    %v4054 = vsel %vm1049, %v4053, %v4049
    %v4055 = vlaneseq
    %v4056 = vshrl.u32 %v4055, 7
    %v4057 = vsub.s32 %v1051, %v4056
    %v4058 = vrot.slane %v3782, %v4057
    %v4059 = vsel %vm1056, %v4058, %v4054
    %v4060 = vlaneseq
    %v4061 = vshrl.u32 %v4060, 7
    %v4062 = vsub.s32 %v1058, %v4061
    %v4063 = vrot.slane %v3785, %v4062
    %v4064 = vsel %vm1063, %v4063, %v4059
    %v4065 = vlaneseq
    %v4066 = vshrl.u32 %v4065, 7
    %v4067 = vsub.s32 %v1065, %v4066
    %v4068 = vrot.slane %v3788, %v4067
    %v4069 = vsel %vm1070, %v4068, %v4064
    %v4070 = vlaneseq
    %v4071 = vshrl.u32 %v4070, 7
    %v4072 = vsub.s32 %v1072, %v4071
    %v4073 = vrot.slane %v3791, %v4072
    %v4074 = vsel %vm1077, %v4073, %v4069
    %v4075 = vlaneseq
    %v4076 = vshrl.u32 %v4075, 7
    %v4077 = vsub.s32 %v1079, %v4076
    %v4078 = vrot.slane %v3794, %v4077
    %v4079 = vsel %vm1084, %v4078, %v4074
    %v4080 = vlaneseq
    %v4081 = vshrl.u32 %v4080, 7
    %v4082 = vsub.s32 %v976, %v4081
    %v4083 = vrot.slane %v3797, %v4082
    %v4084 = vlaneseq
    %v4085 = vshrl.u32 %v4084, 7
    %v4086 = vsub.s32 %v981, %v4085
    %v4087 = vrot.slane %v3800, %v4086
    %v4088 = vsel %vm986, %v4087, %v4083
    %v4089 = vlaneseq
    %v4090 = vshrl.u32 %v4089, 7
    %v4091 = vsub.s32 %v988, %v4090
    %v4092 = vrot.slane %v3803, %v4091
    %v4093 = vsel %vm993, %v4092, %v4088
    %v4094 = vlaneseq
    %v4095 = vshrl.u32 %v4094, 7
    %v4096 = vsub.s32 %v995, %v4095
    %v4097 = vrot.slane %v3806, %v4096
    %v4098 = vsel %vm1000, %v4097, %v4093
    %v4099 = vlaneseq
    %v4100 = vshrl.u32 %v4099, 7
    %v4101 = vsub.s32 %v1002, %v4100
    %v4102 = vrot.slane %v3809, %v4101
    %v4103 = vsel %vm1007, %v4102, %v4098
    %v4104 = vlaneseq
    %v4105 = vshrl.u32 %v4104, 7
    %v4106 = vsub.s32 %v1009, %v4105
    %v4107 = vrot.slane %v3812, %v4106
    %v4108 = vsel %vm1014, %v4107, %v4103
    %v4109 = vlaneseq
    %v4110 = vshrl.u32 %v4109, 7
    %v4111 = vsub.s32 %v1016, %v4110
    %v4112 = vrot.slane %v3815, %v4111
    %v4113 = vsel %vm1021, %v4112, %v4108
    %v4114 = vlaneseq
    %v4115 = vshrl.u32 %v4114, 7
    %v4116 = vsub.s32 %v1023, %v4115
    %v4117 = vrot.slane %v3818, %v4116
    %v4118 = vsel %vm1028, %v4117, %v4113
    %v4119 = vlaneseq
    %v4120 = vshrl.u32 %v4119, 7
    %v4121 = vsub.s32 %v1030, %v4120
    %v4122 = vrot.slane %v3821, %v4121
    %v4123 = vsel %vm1035, %v4122, %v4118
    %v4124 = vlaneseq
    %v4125 = vshrl.u32 %v4124, 7
    %v4126 = vsub.s32 %v1037, %v4125
    %v4127 = vrot.slane %v3824, %v4126
    %v4128 = vsel %vm1042, %v4127, %v4123
    %v4129 = vlaneseq
    %v4130 = vshrl.u32 %v4129, 7
    %v4131 = vsub.s32 %v1044, %v4130
    %v4132 = vrot.slane %v3827, %v4131
    %v4133 = vsel %vm1049, %v4132, %v4128
    %v4134 = vlaneseq
    %v4135 = vshrl.u32 %v4134, 7
    %v4136 = vsub.s32 %v1051, %v4135
    %v4137 = vrot.slane %v3830, %v4136
    %v4138 = vsel %vm1056, %v4137, %v4133
    %v4139 = vlaneseq
    %v4140 = vshrl.u32 %v4139, 7
    %v4141 = vsub.s32 %v1058, %v4140
    %v4142 = vrot.slane %v3833, %v4141
    %v4143 = vsel %vm1063, %v4142, %v4138
    %v4144 = vlaneseq
    %v4145 = vshrl.u32 %v4144, 7
    %v4146 = vsub.s32 %v1065, %v4145
    %v4147 = vrot.slane %v3836, %v4146
    %v4148 = vsel %vm1070, %v4147, %v4143
    %v4149 = vlaneseq
    %v4150 = vshrl.u32 %v4149, 7
    %v4151 = vsub.s32 %v1072, %v4150
    %v4152 = vrot.slane %v3839, %v4151
    %v4153 = vsel %vm1077, %v4152, %v4148
    %v4154 = vlaneseq
    %v4155 = vshrl.u32 %v4154, 7
    %v4156 = vsub.s32 %v1079, %v4155
    %v4157 = vrot.slane %v3842, %v4156
    %v4158 = vsel %vm1084, %v4157, %v4153
    %v4159 = vsel %vm1323, %v4079, %v3921
    %v4160 = vsel %vm1323, %v4158, %v4000
    %v4161 = vcombine.low %v4159, %v4160
    %v4163 = vunpack.c.l.s4 1983009808
    %v4164 = vunpack.c.0.s8 %v4163
    %v4165 = vlaneseq
    %v4166 = vshrl.u32 %v4165, 7
    %v4167 = vsub.s32 %v4164, %v4166
    %v4168 = vrot.slane %v4161, %v4167
    %4170 = vst [vmem:[#allocation3] sm:$0xf] %v4168
    // Predicated region
    $region10: #{tpu_custom_call.1} parent=1 // pred_check
      _
    $region11: #{tpu_custom_call.1} parent=1 // pred_check_branch
      %4172 = sbr.rel (0) target = $region13
    $region12: #{tpu_custom_call.1} parent=1 // pred_region
      %s4174 = ssub.s32 64, 64
      %4175 = vsyncadd [#allocation4], %s4174
      %s4177 = sshll.u32 [#allocation3], 4
      %s4178 = int_to_ptr.vmem [resolvable:$true] %s4177
      %4180 = dma.vmem_to_hbm [thread:$0]  %s4178, 64, %s2, [#allocation4]
    $region13: #{tpu_custom_call.1} parent=1 // pred_fallthru
      _
    // Predicated region
    $region14: #{tpu_custom_call.1} parent=1 // pred_check
      _
    $region15: #{tpu_custom_call.1} parent=1 // pred_check_branch
      %4182 = sbr.rel (0) target = $region17
    $region16: #{tpu_custom_call.1} parent=1 // pred_region
      %4183 = dma.done [#allocation4], 64
    $region17: #{tpu_custom_call.1} parent=1 // pred_fallthru
      _
    %4184 = vsyncpa [#allocation4], 1

</llo_original>
